<compile_context>
chip_gen: v7x
topology: tpu7x:2x2x1
jax: 0.10.0
libtpu: 0.0.40
codegen_flags: <defaults>
</compile_context>

<pallas_src>
import functools
import math

import numpy as np
import jax
import jax.numpy as jnp
from jax import lax
from jax.experimental import pallas as pl
from jax.experimental.pallas import tpu as pltpu


def _fused_cnn_kernel(p1_ref, w1_ref, b1_ref, w2_ref, b2_ref, w3_ref, b3_ref, pm_ref,
                      o_ref, pad2, pat2, pad3, pat3, *, B, H, W):
    """Whole network for a batch block of B images, fully resident in VMEM.

    p1_ref : (B, H, W//4, 54)   layer-1 im2col patches (3h x 6w x 3c per 4-pixel group)
    w1_ref : (54, 128)          layer-1 weights, 4 adjacent W pixels packed on N (4 x 32)
    w2_ref : (384, 128)         layer-2 weights, 12 taps x 32c on K, 2 W pixels x 64c on N
    w3_ref : (576, 128)         layer-3 weights, plain 9-tap im2col
    b*_ref : (1, 128)           biases (tiled to the packed N layout)
    pm_ref : (49, (H//4)*(W//4)) adaptive-avg-pool matrix (kron of per-axis matrices)
    o_ref  : (B, 49, 128)       pooled output block
    pad2/pad3 : zero-haloed pooled activations; pat2/pat3 : im2col patch scratch
    """
    f32 = jnp.float32
    H2, W2 = H // 2, W // 2
    H3, W3 = H2 // 2, W2 // 2
    G = W // 4          # layer-1 W groups (4 pixels / group)
    Q = W2 // 2          # layer-2 W-pair columns (== G)

    # ---- layer 1: single im2col matmul; output lanes = (w mod 4, 32 channels) ----
    p1 = p1_ref[...].reshape(B * H * G, 54)
    y1 = jnp.maximum(
        jnp.dot(p1, w1_ref[...], preferred_element_type=f32) + b1_ref[...], 0.0)
    y1 = y1.reshape(B, H2, 2, G, 128)
    t1 = jnp.max(y1, axis=2)                                   # H-direction of maxpool-1
    u_even = jnp.maximum(t1[..., 0:32], t1[..., 32:64])        # pooled col 2g   (lane max)
    u_odd = jnp.maximum(t1[..., 64:96], t1[..., 96:128])       # pooled col 2g+1 (lane max)

    # ---- zero only the halo border strips (stale VMEM is not zero-initialized) ----
    pad2[:, 0:1, :, :] = jnp.zeros((B, 1, Q + 2, 64), f32)
    pad2[:, H2 + 1:H2 + 2, :, :] = jnp.zeros((B, 1, Q + 2, 64), f32)
    pad2[:, :, 0:1, :] = jnp.zeros((B, H2 + 2, 1, 64), f32)
    pad2[:, :, Q + 1:Q + 2, :] = jnp.zeros((B, H2 + 2, 1, 64), f32)
    pad3[:, 0:1, :, :] = jnp.zeros((B, 1, W3 + 2, 64), f32)
    pad3[:, H3 + 1:H3 + 2, :, :] = jnp.zeros((B, 1, W3 + 2, 64), f32)
    pad3[:, :, 0:1, :] = jnp.zeros((B, H3 + 2, 1, 64), f32)
    pad3[:, :, W3 + 1:W3 + 2, :] = jnp.zeros((B, H3 + 2, 1, 64), f32)

    # pooled layer-1 activation with W-pairs packed on lanes: lanes = (w2 % 2, 32c)
    pad2[:, 1:H2 + 1, 1:Q + 1, 0:32] = u_even
    pad2[:, 1:H2 + 1, 1:Q + 1, 32:64] = u_odd

    # ---- layer 2: build (B*H2*Q, 12*32) patches (no strided loads), one matmul ----
    # tap dv covers pooled-1 column 2q-1+dv: (pair-col start, lane half) per dv
    tap_src = ((0, 32, 64), (1, 0, 32), (1, 32, 64), (2, 0, 32))
    for di in range(3):
        for dv in range(4):
            p0, c0, c1 = tap_src[dv]
            s = di * 4 + dv
            v = pad2[:, di:di + H2, p0:p0 + Q, c0:c1]          # (B, H2, Q, 32)
            pat2[:, s * 32:(s + 1) * 32] = v.reshape(B * H2 * Q, 32)
    y2 = jnp.maximum(
        jnp.dot(pat2[...], w2_ref[...], preferred_element_type=f32) + b2_ref[...], 0.0)
    y2 = y2.reshape(B, H3, 2, Q, 128)                          # lanes = (out parity, 64c)
    t2 = jnp.max(y2, axis=2)                                   # H-direction of maxpool-2
    pooled2 = jnp.maximum(t2[..., 0:64], t2[..., 64:128])      # W-direction (lane max)
    pad3[:, 1:H3 + 1, 1:W3 + 1, :] = pooled2                   # (B, H3, W3, 64)

    # ---- layer 3: plain 9-tap im2col, one matmul ----
    for di in range(3):
        for dj in range(3):
            t = di * 3 + dj
            v = pad3[:, di:di + H3, dj:dj + W3, :]             # (B, H3, W3, 64)
            pat3[:, t * 64:(t + 1) * 64] = v.reshape(B * H3 * W3, 64)
    y3 = jnp.maximum(
        jnp.dot(pat3[...], w3_ref[...], preferred_element_type=f32) + b3_ref[...], 0.0)
    y3 = y3.reshape(B, H3 * W3, 128)                           # lane-dense

    # ---- adaptive avg-pool 8x8 -> 7x7 as a matmul (pm loaded once, hoisted) ----
    pm = pm_ref[...]
    for b in range(B):                                         # tiny (49,64)x(64,128) dots
        o_ref[b] = jnp.dot(pm, y3[b], preferred_element_type=f32).astype(o_ref.dtype)


def _layer1_patches(x_nhwc):
    """(N,H,W,3) -> (N, H, W//4, 54) im2col patches, K order (di, dw in 0..5, cin).

    Each row holds the 3x6 input neighbourhood needed by 4 adjacent output pixels, so the
    layer-1 matmul can produce 4 W pixels per row (lane-dense 128-wide output).
    """
    N, H, W, C = x_nhwc.shape
    xp = jnp.pad(x_nhwc, ((0, 0), (1, 1), (1, 1), (0, 0)))
    G = W // 4
    taps = []
    for di in range(3):
        row = xp[:, di:di + H, :, :]                           # (N, H, W+2, 3)
        cols = [row[:, :, 4 * g:4 * g + 6, :] for g in range(G)]
        taps.append(jnp.stack(cols, axis=2))                   # (N, H, G, 6, 3)
    pat = jnp.stack(taps, axis=3)                              # (N, H, G, 3, 6, 3)
    return pat.reshape(N, H, G, 54)


def _prep_weights(params):
    """Reshape HWIO conv weights into the packed im2col matmul layouts (zero-padded)."""
    w1, b1 = params["w1"], params["b1"]                        # (3,3,3,32), (32,)
    w2, b2 = params["w2"], params["b2"]                        # (3,3,32,64), (64,)
    w3, b3 = params["w3"], params["b3"]                        # (3,3,64,128), (128,)

    # layer 1: K = (di, dw, ci) [54], N = (pixel p in 0..3, co) [128]
    w1p = jnp.zeros((3, 6, 3, 4, 32), jnp.float32)
    for p in range(4):
        w1p = w1p.at[:, p:p + 3, :, p, :].set(w1)              # dj = dw - p
    w1p = w1p.reshape(54, 128)
    b1p = jnp.tile(b1, 4).reshape(1, 128)

    # layer 2: K = (di, dv in 0..3, ci) [384], N = (parity, co) [128]
    w2p = jnp.zeros((3, 4, 32, 2, 64), jnp.float32)
    w2p = w2p.at[:, 0:3, :, 0, :].set(w2)                      # even output: dj = dv
    w2p = w2p.at[:, 1:4, :, 1, :].set(w2)                      # odd  output: dj = dv - 1
    w2p = w2p.reshape(384, 128)
    b2p = jnp.tile(b2, 2).reshape(1, 128)

    # layer 3: plain 9-tap im2col, K = (di, dj, ci) [576]
    w3m = w3.reshape(576, 128)
    b3m = b3.reshape(1, 128)
    return w1p, b1p, w2p, b2p, w3m, b3m


def custom_cnn_fused(x_nhwc, params, pool_mat, *, block_batch=None):
    """x_nhwc: (N, H, W, 3) -> (N, 49, 128); pool_mat: (49, (H//4)*(W//4))."""
    N, H, W, Cin = x_nhwc.shape
    assert Cin == 3 and H % 4 == 0 and W % 4 == 0
    H3, W3 = H // 4, W // 4
    P = pool_mat.shape[0]
    assert pool_mat.shape[1] == H3 * W3
    # NOTE: reshapes inside the kernel are zero-cost when W//4 is a multiple of 8
    # (true for the 32x32 case); other sizes are still correct, just slower.

    if block_batch is None:
        # Amortize per-step overhead but keep >= 2 grid steps so v7x's two TensorCores
        # both get work under dimension_semantics=("parallel",).
        block_batch = max(1, min(8, N // 2))
    B = int(block_batch)
    n_blocks = pl.cdiv(N, B)
    Npad = n_blocks * B

    p1 = _layer1_patches(x_nhwc)                               # (N, H, W//4, 54)
    if Npad != N:
        p1 = jnp.pad(p1, ((0, Npad - N), (0, 0), (0, 0), (0, 0)))

    w1p, b1p, w2p, b2p, w3m, b3m = _prep_weights(params)

    kern = functools.partial(_fused_cnn_kernel, B=B, H=H, W=W)
    G = W // 4
    out = pl.pallas_call(
        kern,
        out_shape=jax.ShapeDtypeStruct((Npad, P, 128), x_nhwc.dtype),
        grid=(n_blocks,),
        in_specs=[
            pl.BlockSpec((B, H, G, 54), lambda i: (i, 0, 0, 0)),
            pl.BlockSpec((54, 128), lambda i: (0, 0)),
            pl.BlockSpec((1, 128), lambda i: (0, 0)),
            pl.BlockSpec((384, 128), lambda i: (0, 0)),
            pl.BlockSpec((1, 128), lambda i: (0, 0)),
            pl.BlockSpec((576, 128), lambda i: (0, 0)),
            pl.BlockSpec((1, 128), lambda i: (0, 0)),
            pl.BlockSpec((P, H3 * W3), lambda i: (0, 0)),
        ],
        out_specs=pl.BlockSpec((B, P, 128), lambda i: (i, 0, 0)),
        scratch_shapes=[
            pltpu.VMEM((B, H // 2 + 2, G + 2, 64), jnp.float32),   # pad2 (pooled-1, haloed)
            pltpu.VMEM((B * (H // 2) * G, 384), jnp.float32),      # pat2 (layer-2 patches)
            pltpu.VMEM((B, H3 + 2, W3 + 2, 64), jnp.float32),      # pad3 (pooled-2, haloed)
            pltpu.VMEM((B * H3 * W3, 576), jnp.float32),           # pat3 (layer-3 patches)
        ],
        compiler_params=pltpu.CompilerParams(dimension_semantics=("parallel",)),
    )(p1, w1p, b1p, w2p, b2p, w3m, b3m, pool_mat)
    return out[:N]


def _adaptive_pool_matrix(in_size, out_size):
    """PyTorch AdaptiveAvgPool1d averaging matrix: (out_size, in_size)."""
    m = np.zeros((out_size, in_size), np.float32)
    for i in range(out_size):
        s = (i * in_size) // out_size
        e = math.ceil((i + 1) * in_size / out_size)
        m[i, s:e] = 1.0 / (e - s)
    return m


def init_params(key):
    """Deterministic init matching the module's parameter shapes (HWIO weights)."""
    ks = jax.random.split(key, 6)

    def conv_init(kw, kb, cin, cout):
        bound = 1.0 / math.sqrt(cin * 9)
        w = jax.random.uniform(kw, (3, 3, cin, cout), jnp.float32, -bound, bound)
        b = jax.random.uniform(kb, (cout,), jnp.float32, -bound, bound)
        return w, b

    w1, b1 = conv_init(ks[0], ks[1], 3, 32)
    w2, b2 = conv_init(ks[2], ks[3], 32, 64)
    w3, b3 = conv_init(ks[4], ks[5], 64, 128)
    return dict(w1=w1, b1=b1, w2=w2, b2=b2, w3=w3, b3=b3)


@jax.jit
def custom_cnn_forward(x_nchw, params, pool_mat):
    x = jnp.transpose(x_nchw, (0, 2, 3, 1))                    # NCHW -> NHWC
    y = custom_cnn_fused(x, params, pool_mat)                  # (N, 49, 128)
    n = y.shape[0]
    y = y.reshape(n, 7, 7, 128)
    return jnp.transpose(y, (0, 3, 1, 2))                      # -> NCHW (N, 128, 7, 7)


def ref_forward(x_nchw, params, ph, pw):
    """Pure-JAX reference used only for correctness checking."""
    x = jnp.transpose(x_nchw, (0, 2, 3, 1))

    def conv(x, w, b):
        y = lax.conv_general_dilated(
            x, w, window_strides=(1, 1), padding="SAME",
            dimension_numbers=("NHWC", "HWIO", "NHWC"),
            precision=lax.Precision.HIGHEST)
        return jnp.maximum(y + b, 0.0)

    def maxpool(x):
        return lax.reduce_window(x, -jnp.inf, lax.max,
                                 (1, 2, 2, 1), (1, 2, 2, 1), "VALID")

    x = maxpool(conv(x, params["w1"], params["b1"]))
    x = maxpool(conv(x, params["w2"], params["b2"]))
    x = conv(x, params["w3"], params["b3"])
    y = jnp.einsum("ih,nhwc,jw->nijc", ph, x, pw, precision=lax.Precision.HIGHEST)
    return jnp.transpose(y, (0, 3, 1, 2))


if __name__ == "__main__":
    key = jax.random.PRNGKey(0)
    kx, kp = jax.random.split(key)

    # Small input consistent with the module: NCHW, 3 channels, 32x32 spatial.
    x = jax.random.normal(kx, (2, 3, 32, 32), jnp.float32)
    params = init_params(kp)

    # Adaptive avg-pool 8x8 -> 7x7 as a single (49, 64) averaging matrix.
    ph = _adaptive_pool_matrix(8, 7)
    pw = _adaptive_pool_matrix(8, 7)
    pool_mat = jnp.asarray(np.kron(ph, pw))

    out = jax.block_until_ready(custom_cnn_forward(x, params, pool_mat))
    assert out.shape == (2, 128, 7, 7), out.shape

    ref = jax.block_until_ready(ref_forward(x, params, jnp.asarray(ph), jnp.asarray(pw)))
    if not np.allclose(np.asarray(out), np.asarray(ref), atol=2e-3, rtol=2e-3):
        err = float(jnp.max(jnp.abs(out - ref)))
        raise AssertionError(f"mismatch vs reference, max abs err {err}")

    print("KERNEL_OK")
</pallas_src>

<mosaic_0001>
module attributes {stable_mosaic.version = 11 : i64} {
  func.func @_fused_cnn_kernel(%arg0: i32, %arg1: memref<1x32x8x54xf32, #tpu.memory_space<vmem>>, %arg2: memref<54x128xf32, #tpu.memory_space<vmem>>, %arg3: memref<1x128xf32, #tpu.memory_space<vmem>>, %arg4: memref<384x128xf32, #tpu.memory_space<vmem>>, %arg5: memref<1x128xf32, #tpu.memory_space<vmem>>, %arg6: memref<576x128xf32, #tpu.memory_space<vmem>>, %arg7: memref<1x128xf32, #tpu.memory_space<vmem>>, %arg8: memref<49x64xf32, #tpu.memory_space<vmem>>, %arg9: memref<1x49x128xf32, #tpu.memory_space<vmem>>, %arg10: memref<1x18x10x64xf32, #tpu.memory_space<vmem>>, %arg11: memref<128x384xf32, #tpu.memory_space<vmem>>, %arg12: memref<1x10x10x64xf32, #tpu.memory_space<vmem>>, %arg13: memref<64x576xf32, #tpu.memory_space<vmem>>) attributes {dimension_semantics = [#tpu.dimension_semantics<parallel>], iteration_bounds = array<i64: 2>, scalar_prefetch = 0 : i64, scratch_operands = 4 : i64, tpu.core_type = #tpu.core_type<tc>, window_params = [{transform_indices = @transform_0, window_bounds = array<i64: 1, 32, 8, 54>}, {pipeline_mode = #tpu.pipeline_mode<synchronous>, transform_indices = @transform_1, window_bounds = array<i64: 54, 128>}, {pipeline_mode = #tpu.pipeline_mode<synchronous>, transform_indices = @transform_2, window_bounds = array<i64: 1, 128>}, {pipeline_mode = #tpu.pipeline_mode<synchronous>, transform_indices = @transform_3, window_bounds = array<i64: 384, 128>}, {pipeline_mode = #tpu.pipeline_mode<synchronous>, transform_indices = @transform_4, window_bounds = array<i64: 1, 128>}, {pipeline_mode = #tpu.pipeline_mode<synchronous>, transform_indices = @transform_5, window_bounds = array<i64: 576, 128>}, {pipeline_mode = #tpu.pipeline_mode<synchronous>, transform_indices = @transform_6, window_bounds = array<i64: 1, 128>}, {pipeline_mode = #tpu.pipeline_mode<synchronous>, transform_indices = @transform_7, window_bounds = array<i64: 49, 64>}, {transform_indices = @transform_8, window_bounds = array<i64: 1, 49, 128>}]} {
    %c0 = arith.constant 0 : index
    %c0_0 = arith.constant 0 : index
    %c0_1 = arith.constant 0 : index
    %c0_2 = arith.constant 0 : index
    %0 = vector.load %arg1[%c0, %c0_0, %c0_1, %c0_2] : memref<1x32x8x54xf32, #tpu.memory_space<vmem>>, vector<1x32x8x54xf32>
    %1 = vector.shape_cast %0 : vector<1x32x8x54xf32> to vector<256x54xf32>
    %c0_3 = arith.constant 0 : index
    %c0_4 = arith.constant 0 : index
    %2 = vector.load %arg2[%c0_3, %c0_4] : memref<54x128xf32, #tpu.memory_space<vmem>>, vector<54x128xf32>
    %cst = arith.constant dense<0.000000e+00> : vector<256x128xf32>
    %3 = tpu.matmul %1, %2, %cst {dimension_numbers = #tpu.dot_dimension_numbers<[1], [0], [0], [1], [0, 0, 1, 1], [], []>} : vector<256x54xf32>, vector<54x128xf32>, vector<256x128xf32> -> vector<256x128xf32>
    %c0_5 = arith.constant 0 : index
    %c0_6 = arith.constant 0 : index
    %4 = vector.load %arg3[%c0_5, %c0_6] : memref<1x128xf32, #tpu.memory_space<vmem>>, vector<1x128xf32>
    %5 = vector.broadcast %4 : vector<1x128xf32> to vector<256x128xf32>
    %6 = arith.addf %3, %5 : vector<256x128xf32>
    %cst_7 = arith.constant 0.000000e+00 : f32
    %7 = vector.broadcast %cst_7 : f32 to vector<256x128xf32>
    %8 = arith.maximumf %6, %7 : vector<256x128xf32>
    %9 = vector.shape_cast %8 : vector<256x128xf32> to vector<1x16x2x8x128xf32>
    %cst_8 = arith.constant dense<0xFF800000> : vector<1x16x8x128xf32>
    %10 = vector.multi_reduction <maximumf>, %9, %cst_8 [2] : vector<1x16x2x8x128xf32> to vector<1x16x8x128xf32>
    %11 = vector.extract_strided_slice %10 {offsets = [0, 0, 0, 0], sizes = [1, 16, 8, 32], strides = [1, 1, 1, 1]} : vector<1x16x8x128xf32> to vector<1x16x8x32xf32>
    %12 = vector.extract_strided_slice %10 {offsets = [0, 0, 0, 32], sizes = [1, 16, 8, 32], strides = [1, 1, 1, 1]} : vector<1x16x8x128xf32> to vector<1x16x8x32xf32>
    %13 = arith.maximumf %11, %12 : vector<1x16x8x32xf32>
    %14 = vector.extract_strided_slice %10 {offsets = [0, 0, 0, 64], sizes = [1, 16, 8, 32], strides = [1, 1, 1, 1]} : vector<1x16x8x128xf32> to vector<1x16x8x32xf32>
    %15 = vector.extract_strided_slice %10 {offsets = [0, 0, 0, 96], sizes = [1, 16, 8, 32], strides = [1, 1, 1, 1]} : vector<1x16x8x128xf32> to vector<1x16x8x32xf32>
    %16 = arith.maximumf %14, %15 : vector<1x16x8x32xf32>
    %cst_9 = arith.constant 0.000000e+00 : f32
    %17 = vector.broadcast %cst_9 : f32 to vector<1x1x10x64xf32>
    %c0_10 = arith.constant 0 : index
    %c0_11 = arith.constant 0 : index
    %c0_12 = arith.constant 0 : index
    %c0_13 = arith.constant 0 : index
    %18 = vector.load %arg10[%c0_10, %c0_11, %c0_12, %c0_13] : memref<1x18x10x64xf32, #tpu.memory_space<vmem>>, vector<1x1x10x64xf32>
    tpu.vector_store %arg10[%c0_10, %c0_11, %c0_12, %c0_13], %17 {strides = array<i32>} : memref<1x18x10x64xf32, #tpu.memory_space<vmem>>, vector<1x1x10x64xf32>,
    %cst_14 = arith.constant 0.000000e+00 : f32
    %19 = vector.broadcast %cst_14 : f32 to vector<1x1x10x64xf32>
    %c0_15 = arith.constant 0 : index
    %c17 = arith.constant 17 : index
    %c0_16 = arith.constant 0 : index
    %c0_17 = arith.constant 0 : index
    %20 = vector.load %arg10[%c0_15, %c17, %c0_16, %c0_17] : memref<1x18x10x64xf32, #tpu.memory_space<vmem>>, vector<1x1x10x64xf32>
    tpu.vector_store %arg10[%c0_15, %c17, %c0_16, %c0_17], %19 {strides = array<i32>} : memref<1x18x10x64xf32, #tpu.memory_space<vmem>>, vector<1x1x10x64xf32>,
    %cst_18 = arith.constant 0.000000e+00 : f32
    %21 = vector.broadcast %cst_18 : f32 to vector<1x18x1x64xf32>
    %c0_19 = arith.constant 0 : index
    %c0_20 = arith.constant 0 : index
    %c0_21 = arith.constant 0 : index
    %c0_22 = arith.constant 0 : index
    %22 = vector.load %arg10[%c0_19, %c0_20, %c0_21, %c0_22] : memref<1x18x10x64xf32, #tpu.memory_space<vmem>>, vector<1x18x1x64xf32>
    tpu.vector_store %arg10[%c0_19, %c0_20, %c0_21, %c0_22], %21 {strides = array<i32>} : memref<1x18x10x64xf32, #tpu.memory_space<vmem>>, vector<1x18x1x64xf32>,
    %cst_23 = arith.constant 0.000000e+00 : f32
    %23 = vector.broadcast %cst_23 : f32 to vector<1x18x1x64xf32>
    %c0_24 = arith.constant 0 : index
    %c0_25 = arith.constant 0 : index
    %c9 = arith.constant 9 : index
    %c0_26 = arith.constant 0 : index
    %24 = vector.load %arg10[%c0_24, %c0_25, %c9, %c0_26] : memref<1x18x10x64xf32, #tpu.memory_space<vmem>>, vector<1x18x1x64xf32>
    tpu.vector_store %arg10[%c0_24, %c0_25, %c9, %c0_26], %23 {strides = array<i32>} : memref<1x18x10x64xf32, #tpu.memory_space<vmem>>, vector<1x18x1x64xf32>,
    %cst_27 = arith.constant 0.000000e+00 : f32
    %25 = vector.broadcast %cst_27 : f32 to vector<1x1x10x64xf32>
    %c0_28 = arith.constant 0 : index
    %c0_29 = arith.constant 0 : index
    %c0_30 = arith.constant 0 : index
    %c0_31 = arith.constant 0 : index
    %26 = vector.load %arg12[%c0_28, %c0_29, %c0_30, %c0_31] : memref<1x10x10x64xf32, #tpu.memory_space<vmem>>, vector<1x1x10x64xf32>
    tpu.vector_store %arg12[%c0_28, %c0_29, %c0_30, %c0_31], %25 {strides = array<i32>} : memref<1x10x10x64xf32, #tpu.memory_space<vmem>>, vector<1x1x10x64xf32>,
    %cst_32 = arith.constant 0.000000e+00 : f32
    %27 = vector.broadcast %cst_32 : f32 to vector<1x1x10x64xf32>
    %c0_33 = arith.constant 0 : index
    %c9_34 = arith.constant 9 : index
    %c0_35 = arith.constant 0 : index
    %c0_36 = arith.constant 0 : index
    %28 = vector.load %arg12[%c0_33, %c9_34, %c0_35, %c0_36] : memref<1x10x10x64xf32, #tpu.memory_space<vmem>>, vector<1x1x10x64xf32>
    tpu.vector_store %arg12[%c0_33, %c9_34, %c0_35, %c0_36], %27 {strides = array<i32>} : memref<1x10x10x64xf32, #tpu.memory_space<vmem>>, vector<1x1x10x64xf32>,
    %cst_37 = arith.constant 0.000000e+00 : f32
    %29 = vector.broadcast %cst_37 : f32 to vector<1x10x1x64xf32>
    %c0_38 = arith.constant 0 : index
    %c0_39 = arith.constant 0 : index
    %c0_40 = arith.constant 0 : index
    %c0_41 = arith.constant 0 : index
    %30 = vector.load %arg12[%c0_38, %c0_39, %c0_40, %c0_41] : memref<1x10x10x64xf32, #tpu.memory_space<vmem>>, vector<1x10x1x64xf32>
    tpu.vector_store %arg12[%c0_38, %c0_39, %c0_40, %c0_41], %29 {strides = array<i32>} : memref<1x10x10x64xf32, #tpu.memory_space<vmem>>, vector<1x10x1x64xf32>,
    %cst_42 = arith.constant 0.000000e+00 : f32
    %31 = vector.broadcast %cst_42 : f32 to vector<1x10x1x64xf32>
    %c0_43 = arith.constant 0 : index
    %c0_44 = arith.constant 0 : index
    %c9_45 = arith.constant 9 : index
    %c0_46 = arith.constant 0 : index
    %32 = vector.load %arg12[%c0_43, %c0_44, %c9_45, %c0_46] : memref<1x10x10x64xf32, #tpu.memory_space<vmem>>, vector<1x10x1x64xf32>
    tpu.vector_store %arg12[%c0_43, %c0_44, %c9_45, %c0_46], %31 {strides = array<i32>} : memref<1x10x10x64xf32, #tpu.memory_space<vmem>>, vector<1x10x1x64xf32>,
    %c0_47 = arith.constant 0 : index
    %c1 = arith.constant 1 : index
    %c1_48 = arith.constant 1 : index
    %c0_49 = arith.constant 0 : index
    %33 = vector.load %arg10[%c0_47, %c1, %c1_48, %c0_49] : memref<1x18x10x64xf32, #tpu.memory_space<vmem>>, vector<1x16x8x32xf32>
    tpu.vector_store %arg10[%c0_47, %c1, %c1_48, %c0_49], %13 {strides = array<i32>} : memref<1x18x10x64xf32, #tpu.memory_space<vmem>>, vector<1x16x8x32xf32>,
    %c0_50 = arith.constant 0 : index
    %c1_51 = arith.constant 1 : index
    %c1_52 = arith.constant 1 : index
    %c32 = arith.constant 32 : index
    %34 = vector.load %arg10[%c0_50, %c1_51, %c1_52, %c32] : memref<1x18x10x64xf32, #tpu.memory_space<vmem>>, vector<1x16x8x32xf32>
    tpu.vector_store %arg10[%c0_50, %c1_51, %c1_52, %c32], %16 {strides = array<i32>} : memref<1x18x10x64xf32, #tpu.memory_space<vmem>>, vector<1x16x8x32xf32>,
    %c0_53 = arith.constant 0 : index
    %c0_54 = arith.constant 0 : index
    %c0_55 = arith.constant 0 : index
    %c32_56 = arith.constant 32 : index
    %35 = vector.load %arg10[%c0_53, %c0_54, %c0_55, %c32_56] : memref<1x18x10x64xf32, #tpu.memory_space<vmem>>, vector<1x16x8x32xf32>
    %36 = vector.shape_cast %35 : vector<1x16x8x32xf32> to vector<128x32xf32>
    %c0_57 = arith.constant 0 : index
    %c0_58 = arith.constant 0 : index
    %37 = vector.load %arg11[%c0_57, %c0_58] : memref<128x384xf32, #tpu.memory_space<vmem>>, vector<128x32xf32>
    tpu.vector_store %arg11[%c0_57, %c0_58], %36 {strides = array<i32>} : memref<128x384xf32, #tpu.memory_space<vmem>>, vector<128x32xf32>,
    %c0_59 = arith.constant 0 : index
    %c0_60 = arith.constant 0 : index
    %c1_61 = arith.constant 1 : index
    %c0_62 = arith.constant 0 : index
    %38 = vector.load %arg10[%c0_59, %c0_60, %c1_61, %c0_62] : memref<1x18x10x64xf32, #tpu.memory_space<vmem>>, vector<1x16x8x32xf32>
    %39 = vector.shape_cast %38 : vector<1x16x8x32xf32> to vector<128x32xf32>
    %c0_63 = arith.constant 0 : index
    %c32_64 = arith.constant 32 : index
    %40 = vector.load %arg11[%c0_63, %c32_64] : memref<128x384xf32, #tpu.memory_space<vmem>>, vector<128x32xf32>
    tpu.vector_store %arg11[%c0_63, %c32_64], %39 {strides = array<i32>} : memref<128x384xf32, #tpu.memory_space<vmem>>, vector<128x32xf32>,
    %c0_65 = arith.constant 0 : index
    %c0_66 = arith.constant 0 : index
    %c1_67 = arith.constant 1 : index
    %c32_68 = arith.constant 32 : index
    %41 = vector.load %arg10[%c0_65, %c0_66, %c1_67, %c32_68] : memref<1x18x10x64xf32, #tpu.memory_space<vmem>>, vector<1x16x8x32xf32>
    %42 = vector.shape_cast %41 : vector<1x16x8x32xf32> to vector<128x32xf32>
    %c0_69 = arith.constant 0 : index
    %c64 = arith.constant 64 : index
    %43 = vector.load %arg11[%c0_69, %c64] : memref<128x384xf32, #tpu.memory_space<vmem>>, vector<128x32xf32>
    tpu.vector_store %arg11[%c0_69, %c64], %42 {strides = array<i32>} : memref<128x384xf32, #tpu.memory_space<vmem>>, vector<128x32xf32>,
    %c0_70 = arith.constant 0 : index
    %c0_71 = arith.constant 0 : index
    %c2 = arith.constant 2 : index
    %c0_72 = arith.constant 0 : index
    %44 = vector.load %arg10[%c0_70, %c0_71, %c2, %c0_72] : memref<1x18x10x64xf32, #tpu.memory_space<vmem>>, vector<1x16x8x32xf32>
    %45 = vector.shape_cast %44 : vector<1x16x8x32xf32> to vector<128x32xf32>
    %c0_73 = arith.constant 0 : index
    %c96 = arith.constant 96 : index
    %46 = vector.load %arg11[%c0_73, %c96] : memref<128x384xf32, #tpu.memory_space<vmem>>, vector<128x32xf32>
    tpu.vector_store %arg11[%c0_73, %c96], %45 {strides = array<i32>} : memref<128x384xf32, #tpu.memory_space<vmem>>, vector<128x32xf32>,
    %c0_74 = arith.constant 0 : index
    %c1_75 = arith.constant 1 : index
    %c0_76 = arith.constant 0 : index
    %c32_77 = arith.constant 32 : index
    %47 = vector.load %arg10[%c0_74, %c1_75, %c0_76, %c32_77] : memref<1x18x10x64xf32, #tpu.memory_space<vmem>>, vector<1x16x8x32xf32>
    %48 = vector.shape_cast %47 : vector<1x16x8x32xf32> to vector<128x32xf32>
    %c0_78 = arith.constant 0 : index
    %c128 = arith.constant 128 : index
    %49 = vector.load %arg11[%c0_78, %c128] : memref<128x384xf32, #tpu.memory_space<vmem>>, vector<128x32xf32>
    tpu.vector_store %arg11[%c0_78, %c128], %48 {strides = array<i32>} : memref<128x384xf32, #tpu.memory_space<vmem>>, vector<128x32xf32>,
    %c0_79 = arith.constant 0 : index
    %c1_80 = arith.constant 1 : index
    %c1_81 = arith.constant 1 : index
    %c0_82 = arith.constant 0 : index
    %50 = vector.load %arg10[%c0_79, %c1_80, %c1_81, %c0_82] : memref<1x18x10x64xf32, #tpu.memory_space<vmem>>, vector<1x16x8x32xf32>
    %51 = vector.shape_cast %50 : vector<1x16x8x32xf32> to vector<128x32xf32>
    %c0_83 = arith.constant 0 : index
    %c160 = arith.constant 160 : index
    %52 = vector.load %arg11[%c0_83, %c160] : memref<128x384xf32, #tpu.memory_space<vmem>>, vector<128x32xf32>
    tpu.vector_store %arg11[%c0_83, %c160], %51 {strides = array<i32>} : memref<128x384xf32, #tpu.memory_space<vmem>>, vector<128x32xf32>,
    %c0_84 = arith.constant 0 : index
    %c1_85 = arith.constant 1 : index
    %c1_86 = arith.constant 1 : index
    %c32_87 = arith.constant 32 : index
    %53 = vector.load %arg10[%c0_84, %c1_85, %c1_86, %c32_87] : memref<1x18x10x64xf32, #tpu.memory_space<vmem>>, vector<1x16x8x32xf32>
    %54 = vector.shape_cast %53 : vector<1x16x8x32xf32> to vector<128x32xf32>
    %c0_88 = arith.constant 0 : index
    %c192 = arith.constant 192 : index
    %55 = vector.load %arg11[%c0_88, %c192] : memref<128x384xf32, #tpu.memory_space<vmem>>, vector<128x32xf32>
    tpu.vector_store %arg11[%c0_88, %c192], %54 {strides = array<i32>} : memref<128x384xf32, #tpu.memory_space<vmem>>, vector<128x32xf32>,
    %c0_89 = arith.constant 0 : index
    %c1_90 = arith.constant 1 : index
    %c2_91 = arith.constant 2 : index
    %c0_92 = arith.constant 0 : index
    %56 = vector.load %arg10[%c0_89, %c1_90, %c2_91, %c0_92] : memref<1x18x10x64xf32, #tpu.memory_space<vmem>>, vector<1x16x8x32xf32>
    %57 = vector.shape_cast %56 : vector<1x16x8x32xf32> to vector<128x32xf32>
    %c0_93 = arith.constant 0 : index
    %c224 = arith.constant 224 : index
    %58 = vector.load %arg11[%c0_93, %c224] : memref<128x384xf32, #tpu.memory_space<vmem>>, vector<128x32xf32>
    tpu.vector_store %arg11[%c0_93, %c224], %57 {strides = array<i32>} : memref<128x384xf32, #tpu.memory_space<vmem>>, vector<128x32xf32>,
    %c0_94 = arith.constant 0 : index
    %c2_95 = arith.constant 2 : index
    %c0_96 = arith.constant 0 : index
    %c32_97 = arith.constant 32 : index
    %59 = vector.load %arg10[%c0_94, %c2_95, %c0_96, %c32_97] : memref<1x18x10x64xf32, #tpu.memory_space<vmem>>, vector<1x16x8x32xf32>
    %60 = vector.shape_cast %59 : vector<1x16x8x32xf32> to vector<128x32xf32>
    %c0_98 = arith.constant 0 : index
    %c256 = arith.constant 256 : index
    %61 = vector.load %arg11[%c0_98, %c256] : memref<128x384xf32, #tpu.memory_space<vmem>>, vector<128x32xf32>
    tpu.vector_store %arg11[%c0_98, %c256], %60 {strides = array<i32>} : memref<128x384xf32, #tpu.memory_space<vmem>>, vector<128x32xf32>,
    %c0_99 = arith.constant 0 : index
    %c2_100 = arith.constant 2 : index
    %c1_101 = arith.constant 1 : index
    %c0_102 = arith.constant 0 : index
    %62 = vector.load %arg10[%c0_99, %c2_100, %c1_101, %c0_102] : memref<1x18x10x64xf32, #tpu.memory_space<vmem>>, vector<1x16x8x32xf32>
    %63 = vector.shape_cast %62 : vector<1x16x8x32xf32> to vector<128x32xf32>
    %c0_103 = arith.constant 0 : index
    %c288 = arith.constant 288 : index
    %64 = vector.load %arg11[%c0_103, %c288] : memref<128x384xf32, #tpu.memory_space<vmem>>, vector<128x32xf32>
    tpu.vector_store %arg11[%c0_103, %c288], %63 {strides = array<i32>} : memref<128x384xf32, #tpu.memory_space<vmem>>, vector<128x32xf32>,
    %c0_104 = arith.constant 0 : index
    %c2_105 = arith.constant 2 : index
    %c1_106 = arith.constant 1 : index
    %c32_107 = arith.constant 32 : index
    %65 = vector.load %arg10[%c0_104, %c2_105, %c1_106, %c32_107] : memref<1x18x10x64xf32, #tpu.memory_space<vmem>>, vector<1x16x8x32xf32>
    %66 = vector.shape_cast %65 : vector<1x16x8x32xf32> to vector<128x32xf32>
    %c0_108 = arith.constant 0 : index
    %c320 = arith.constant 320 : index
    %67 = vector.load %arg11[%c0_108, %c320] : memref<128x384xf32, #tpu.memory_space<vmem>>, vector<128x32xf32>
    tpu.vector_store %arg11[%c0_108, %c320], %66 {strides = array<i32>} : memref<128x384xf32, #tpu.memory_space<vmem>>, vector<128x32xf32>,
    %c0_109 = arith.constant 0 : index
    %c2_110 = arith.constant 2 : index
    %c2_111 = arith.constant 2 : index
    %c0_112 = arith.constant 0 : index
    %68 = vector.load %arg10[%c0_109, %c2_110, %c2_111, %c0_112] : memref<1x18x10x64xf32, #tpu.memory_space<vmem>>, vector<1x16x8x32xf32>
    %69 = vector.shape_cast %68 : vector<1x16x8x32xf32> to vector<128x32xf32>
    %c0_113 = arith.constant 0 : index
    %c352 = arith.constant 352 : index
    %70 = vector.load %arg11[%c0_113, %c352] : memref<128x384xf32, #tpu.memory_space<vmem>>, vector<128x32xf32>
    tpu.vector_store %arg11[%c0_113, %c352], %69 {strides = array<i32>} : memref<128x384xf32, #tpu.memory_space<vmem>>, vector<128x32xf32>,
    %c0_114 = arith.constant 0 : index
    %c0_115 = arith.constant 0 : index
    %71 = vector.load %arg11[%c0_114, %c0_115] : memref<128x384xf32, #tpu.memory_space<vmem>>, vector<128x384xf32>
    %c0_116 = arith.constant 0 : index
    %c0_117 = arith.constant 0 : index
    %72 = vector.load %arg4[%c0_116, %c0_117] : memref<384x128xf32, #tpu.memory_space<vmem>>, vector<384x128xf32>
    %cst_118 = arith.constant dense<0.000000e+00> : vector<128x128xf32>
    %73 = tpu.matmul %71, %72, %cst_118 {dimension_numbers = #tpu.dot_dimension_numbers<[1], [0], [0], [1], [0, 0, 1, 1], [], []>} : vector<128x384xf32>, vector<384x128xf32>, vector<128x128xf32> -> vector<128x128xf32>
    %c0_119 = arith.constant 0 : index
    %c0_120 = arith.constant 0 : index
    %74 = vector.load %arg5[%c0_119, %c0_120] : memref<1x128xf32, #tpu.memory_space<vmem>>, vector<1x128xf32>
    %75 = vector.broadcast %74 : vector<1x128xf32> to vector<128x128xf32>
    %76 = arith.addf %73, %75 : vector<128x128xf32>
    %cst_121 = arith.constant 0.000000e+00 : f32
    %77 = vector.broadcast %cst_121 : f32 to vector<128x128xf32>
    %78 = arith.maximumf %76, %77 : vector<128x128xf32>
    %79 = vector.shape_cast %78 : vector<128x128xf32> to vector<1x8x2x8x128xf32>
    %cst_122 = arith.constant dense<0xFF800000> : vector<1x8x8x128xf32>
    %80 = vector.multi_reduction <maximumf>, %79, %cst_122 [2] : vector<1x8x2x8x128xf32> to vector<1x8x8x128xf32>
    %81 = vector.extract_strided_slice %80 {offsets = [0, 0, 0, 0], sizes = [1, 8, 8, 64], strides = [1, 1, 1, 1]} : vector<1x8x8x128xf32> to vector<1x8x8x64xf32>
    %82 = vector.extract_strided_slice %80 {offsets = [0, 0, 0, 64], sizes = [1, 8, 8, 64], strides = [1, 1, 1, 1]} : vector<1x8x8x128xf32> to vector<1x8x8x64xf32>
    %83 = arith.maximumf %81, %82 : vector<1x8x8x64xf32>
    %c0_123 = arith.constant 0 : index
    %c1_124 = arith.constant 1 : index
    %c1_125 = arith.constant 1 : index
    %c0_126 = arith.constant 0 : index
    %84 = vector.load %arg12[%c0_123, %c1_124, %c1_125, %c0_126] : memref<1x10x10x64xf32, #tpu.memory_space<vmem>>, vector<1x8x8x64xf32>
    tpu.vector_store %arg12[%c0_123, %c1_124, %c1_125, %c0_126], %83 {strides = array<i32>} : memref<1x10x10x64xf32, #tpu.memory_space<vmem>>, vector<1x8x8x64xf32>,
    %c0_127 = arith.constant 0 : index
    %c0_128 = arith.constant 0 : index
    %c0_129 = arith.constant 0 : index
    %c0_130 = arith.constant 0 : index
    %85 = vector.load %arg12[%c0_127, %c0_128, %c0_129, %c0_130] : memref<1x10x10x64xf32, #tpu.memory_space<vmem>>, vector<1x8x8x64xf32>
    %86 = vector.shape_cast %85 : vector<1x8x8x64xf32> to vector<64x64xf32>
    %c0_131 = arith.constant 0 : index
    %c0_132 = arith.constant 0 : index
    %87 = vector.load %arg13[%c0_131, %c0_132] : memref<64x576xf32, #tpu.memory_space<vmem>>, vector<64x64xf32>
    tpu.vector_store %arg13[%c0_131, %c0_132], %86 {strides = array<i32>} : memref<64x576xf32, #tpu.memory_space<vmem>>, vector<64x64xf32>,
    %c0_133 = arith.constant 0 : index
    %c0_134 = arith.constant 0 : index
    %c1_135 = arith.constant 1 : index
    %c0_136 = arith.constant 0 : index
    %88 = vector.load %arg12[%c0_133, %c0_134, %c1_135, %c0_136] : memref<1x10x10x64xf32, #tpu.memory_space<vmem>>, vector<1x8x8x64xf32>
    %89 = vector.shape_cast %88 : vector<1x8x8x64xf32> to vector<64x64xf32>
    %c0_137 = arith.constant 0 : index
    %c64_138 = arith.constant 64 : index
    %90 = vector.load %arg13[%c0_137, %c64_138] : memref<64x576xf32, #tpu.memory_space<vmem>>, vector<64x64xf32>
    tpu.vector_store %arg13[%c0_137, %c64_138], %89 {strides = array<i32>} : memref<64x576xf32, #tpu.memory_space<vmem>>, vector<64x64xf32>,
    %c0_139 = arith.constant 0 : index
    %c0_140 = arith.constant 0 : index
    %c2_141 = arith.constant 2 : index
    %c0_142 = arith.constant 0 : index
    %91 = vector.load %arg12[%c0_139, %c0_140, %c2_141, %c0_142] : memref<1x10x10x64xf32, #tpu.memory_space<vmem>>, vector<1x8x8x64xf32>
    %92 = vector.shape_cast %91 : vector<1x8x8x64xf32> to vector<64x64xf32>
    %c0_143 = arith.constant 0 : index
    %c128_144 = arith.constant 128 : index
    %93 = vector.load %arg13[%c0_143, %c128_144] : memref<64x576xf32, #tpu.memory_space<vmem>>, vector<64x64xf32>
    tpu.vector_store %arg13[%c0_143, %c128_144], %92 {strides = array<i32>} : memref<64x576xf32, #tpu.memory_space<vmem>>, vector<64x64xf32>,
    %c0_145 = arith.constant 0 : index
    %c1_146 = arith.constant 1 : index
    %c0_147 = arith.constant 0 : index
    %c0_148 = arith.constant 0 : index
    %94 = vector.load %arg12[%c0_145, %c1_146, %c0_147, %c0_148] : memref<1x10x10x64xf32, #tpu.memory_space<vmem>>, vector<1x8x8x64xf32>
    %95 = vector.shape_cast %94 : vector<1x8x8x64xf32> to vector<64x64xf32>
    %c0_149 = arith.constant 0 : index
    %c192_150 = arith.constant 192 : index
    %96 = vector.load %arg13[%c0_149, %c192_150] : memref<64x576xf32, #tpu.memory_space<vmem>>, vector<64x64xf32>
    tpu.vector_store %arg13[%c0_149, %c192_150], %95 {strides = array<i32>} : memref<64x576xf32, #tpu.memory_space<vmem>>, vector<64x64xf32>,
    %c0_151 = arith.constant 0 : index
    %c1_152 = arith.constant 1 : index
    %c1_153 = arith.constant 1 : index
    %c0_154 = arith.constant 0 : index
    %97 = vector.load %arg12[%c0_151, %c1_152, %c1_153, %c0_154] : memref<1x10x10x64xf32, #tpu.memory_space<vmem>>, vector<1x8x8x64xf32>
    %98 = vector.shape_cast %97 : vector<1x8x8x64xf32> to vector<64x64xf32>
    %c0_155 = arith.constant 0 : index
    %c256_156 = arith.constant 256 : index
    %99 = vector.load %arg13[%c0_155, %c256_156] : memref<64x576xf32, #tpu.memory_space<vmem>>, vector<64x64xf32>
    tpu.vector_store %arg13[%c0_155, %c256_156], %98 {strides = array<i32>} : memref<64x576xf32, #tpu.memory_space<vmem>>, vector<64x64xf32>,
    %c0_157 = arith.constant 0 : index
    %c1_158 = arith.constant 1 : index
    %c2_159 = arith.constant 2 : index
    %c0_160 = arith.constant 0 : index
    %100 = vector.load %arg12[%c0_157, %c1_158, %c2_159, %c0_160] : memref<1x10x10x64xf32, #tpu.memory_space<vmem>>, vector<1x8x8x64xf32>
    %101 = vector.shape_cast %100 : vector<1x8x8x64xf32> to vector<64x64xf32>
    %c0_161 = arith.constant 0 : index
    %c320_162 = arith.constant 320 : index
    %102 = vector.load %arg13[%c0_161, %c320_162] : memref<64x576xf32, #tpu.memory_space<vmem>>, vector<64x64xf32>
    tpu.vector_store %arg13[%c0_161, %c320_162], %101 {strides = array<i32>} : memref<64x576xf32, #tpu.memory_space<vmem>>, vector<64x64xf32>,
    %c0_163 = arith.constant 0 : index
    %c2_164 = arith.constant 2 : index
    %c0_165 = arith.constant 0 : index
    %c0_166 = arith.constant 0 : index
    %103 = vector.load %arg12[%c0_163, %c2_164, %c0_165, %c0_166] : memref<1x10x10x64xf32, #tpu.memory_space<vmem>>, vector<1x8x8x64xf32>
    %104 = vector.shape_cast %103 : vector<1x8x8x64xf32> to vector<64x64xf32>
    %c0_167 = arith.constant 0 : index
    %c384 = arith.constant 384 : index
    %105 = vector.load %arg13[%c0_167, %c384] : memref<64x576xf32, #tpu.memory_space<vmem>>, vector<64x64xf32>
    tpu.vector_store %arg13[%c0_167, %c384], %104 {strides = array<i32>} : memref<64x576xf32, #tpu.memory_space<vmem>>, vector<64x64xf32>,
    %c0_168 = arith.constant 0 : index
    %c2_169 = arith.constant 2 : index
    %c1_170 = arith.constant 1 : index
    %c0_171 = arith.constant 0 : index
    %106 = vector.load %arg12[%c0_168, %c2_169, %c1_170, %c0_171] : memref<1x10x10x64xf32, #tpu.memory_space<vmem>>, vector<1x8x8x64xf32>
    %107 = vector.shape_cast %106 : vector<1x8x8x64xf32> to vector<64x64xf32>
    %c0_172 = arith.constant 0 : index
    %c448 = arith.constant 448 : index
    %108 = vector.load %arg13[%c0_172, %c448] : memref<64x576xf32, #tpu.memory_space<vmem>>, vector<64x64xf32>
    tpu.vector_store %arg13[%c0_172, %c448], %107 {strides = array<i32>} : memref<64x576xf32, #tpu.memory_space<vmem>>, vector<64x64xf32>,
    %c0_173 = arith.constant 0 : index
    %c2_174 = arith.constant 2 : index
    %c2_175 = arith.constant 2 : index
    %c0_176 = arith.constant 0 : index
    %109 = vector.load %arg12[%c0_173, %c2_174, %c2_175, %c0_176] : memref<1x10x10x64xf32, #tpu.memory_space<vmem>>, vector<1x8x8x64xf32>
    %110 = vector.shape_cast %109 : vector<1x8x8x64xf32> to vector<64x64xf32>
    %c0_177 = arith.constant 0 : index
    %c512 = arith.constant 512 : index
    %111 = vector.load %arg13[%c0_177, %c512] : memref<64x576xf32, #tpu.memory_space<vmem>>, vector<64x64xf32>
    tpu.vector_store %arg13[%c0_177, %c512], %110 {strides = array<i32>} : memref<64x576xf32, #tpu.memory_space<vmem>>, vector<64x64xf32>,
    %c0_178 = arith.constant 0 : index
    %c0_179 = arith.constant 0 : index
    %112 = vector.load %arg13[%c0_178, %c0_179] : memref<64x576xf32, #tpu.memory_space<vmem>>, vector<64x576xf32>
    %c0_180 = arith.constant 0 : index
    %c0_181 = arith.constant 0 : index
    %113 = vector.load %arg6[%c0_180, %c0_181] : memref<576x128xf32, #tpu.memory_space<vmem>>, vector<576x128xf32>
    %cst_182 = arith.constant dense<0.000000e+00> : vector<64x128xf32>
    %114 = tpu.matmul %112, %113, %cst_182 {dimension_numbers = #tpu.dot_dimension_numbers<[1], [0], [0], [1], [0, 0, 1, 1], [], []>} : vector<64x576xf32>, vector<576x128xf32>, vector<64x128xf32> -> vector<64x128xf32>
    %c0_183 = arith.constant 0 : index
    %c0_184 = arith.constant 0 : index
    %115 = vector.load %arg7[%c0_183, %c0_184] : memref<1x128xf32, #tpu.memory_space<vmem>>, vector<1x128xf32>
    %116 = vector.broadcast %115 : vector<1x128xf32> to vector<64x128xf32>
    %117 = arith.addf %114, %116 : vector<64x128xf32>
    %cst_185 = arith.constant 0.000000e+00 : f32
    %118 = vector.broadcast %cst_185 : f32 to vector<64x128xf32>
    %119 = arith.maximumf %117, %118 : vector<64x128xf32>
    %120 = vector.shape_cast %119 : vector<64x128xf32> to vector<1x64x128xf32>
    %c0_186 = arith.constant 0 : index
    %c0_187 = arith.constant 0 : index
    %121 = vector.load %arg8[%c0_186, %c0_187] : memref<49x64xf32, #tpu.memory_space<vmem>>, vector<49x64xf32>
    %122 = vector.shape_cast %120 : vector<1x64x128xf32> to vector<64x128xf32>
    %cst_188 = arith.constant dense<0.000000e+00> : vector<49x128xf32>
    %123 = tpu.matmul %121, %122, %cst_188 {dimension_numbers = #tpu.dot_dimension_numbers<[1], [0], [0], [1], [0, 0, 1, 1], [], []>} : vector<49x64xf32>, vector<64x128xf32>, vector<49x128xf32> -> vector<49x128xf32>
    %c0_189 = arith.constant 0 : index
    %c0_190 = arith.constant 0 : index
    %c0_191 = arith.constant 0 : index
    %124 = vector.load %arg9[%c0_189, %c0_190, %c0_191] : memref<1x49x128xf32, #tpu.memory_space<vmem>>, vector<1x49x128xf32>
    %125 = vector.shape_cast %124 : vector<1x49x128xf32> to vector<49x128xf32>
    %126 = vector.shape_cast %123 : vector<49x128xf32> to vector<1x49x128xf32>
    tpu.vector_store %arg9[%c0_189, %c0_190, %c0_191], %126 {strides = array<i32>} : memref<1x49x128xf32, #tpu.memory_space<vmem>>, vector<1x49x128xf32>,
    return
  }
  func.func @transform_0(%arg0: i32) -> (i32, i32, i32, i32) {
    %c0_i32 = arith.constant 0 : i32
    %c0_i32_0 = arith.constant 0 : i32
    %c0_i32_1 = arith.constant 0 : i32
    %c0_i32_2 = arith.constant 0 : i32
    return %arg0, %c0_i32, %c0_i32_0, %c0_i32_1 : i32, i32, i32, i32
  }
  func.func @transform_1(%arg0: i32) -> (i32, i32) {
    %c0_i32 = arith.constant 0 : i32
    %c0_i32_0 = arith.constant 0 : i32
    %c0_i32_1 = arith.constant 0 : i32
    return %c0_i32, %c0_i32_0 : i32, i32
  }
  func.func @transform_2(%arg0: i32) -> (i32, i32) {
    %c0_i32 = arith.constant 0 : i32
    %c0_i32_0 = arith.constant 0 : i32
    %c0_i32_1 = arith.constant 0 : i32
    return %c0_i32, %c0_i32_0 : i32, i32
  }
  func.func @transform_3(%arg0: i32) -> (i32, i32) {
    %c0_i32 = arith.constant 0 : i32
    %c0_i32_0 = arith.constant 0 : i32
    %c0_i32_1 = arith.constant 0 : i32
    return %c0_i32, %c0_i32_0 : i32, i32
  }
  func.func @transform_4(%arg0: i32) -> (i32, i32) {
    %c0_i32 = arith.constant 0 : i32
    %c0_i32_0 = arith.constant 0 : i32
    %c0_i32_1 = arith.constant 0 : i32
    return %c0_i32, %c0_i32_0 : i32, i32
  }
  func.func @transform_5(%arg0: i32) -> (i32, i32) {
    %c0_i32 = arith.constant 0 : i32
    %c0_i32_0 = arith.constant 0 : i32
    %c0_i32_1 = arith.constant 0 : i32
    return %c0_i32, %c0_i32_0 : i32, i32
  }
  func.func @transform_6(%arg0: i32) -> (i32, i32) {
    %c0_i32 = arith.constant 0 : i32
    %c0_i32_0 = arith.constant 0 : i32
    %c0_i32_1 = arith.constant 0 : i32
    return %c0_i32, %c0_i32_0 : i32, i32
  }
  func.func @transform_7(%arg0: i32) -> (i32, i32) {
    %c0_i32 = arith.constant 0 : i32
    %c0_i32_0 = arith.constant 0 : i32
    %c0_i32_1 = arith.constant 0 : i32
    return %c0_i32, %c0_i32_0 : i32, i32
  }
  func.func @transform_8(%arg0: i32) -> (i32, i32, i32) {
    %c0_i32 = arith.constant 0 : i32
    %c0_i32_0 = arith.constant 0 : i32
    %c0_i32_1 = arith.constant 0 : i32
    return %arg0, %c0_i32, %c0_i32_0 : i32, i32, i32
  }
}

</mosaic_0001>

<llo_original>
// kernel: tile.13
$region0: #{tile.13}
  #allocation0 [shape = 's32[1]{0}', space=sflag, size = 0x4, scoped, tag = 'scoped memory for tile.13']
  %s0 = inlined_call_operand.vmem [shape: f32[32], index: 0, kind: input, shape index: {}]
  %s1 = inlined_call_operand.vmem [shape: f32[4,32], index: 1, kind: output, shape index: {}]
  // Predicated region
  $region2: #{tile.13} parent=0 // pred_check
    _
  $region3: #{tile.13} parent=0 // pred_check_branch
    %3 = sbr.rel (0) target = $region5
  $region4: #{tile.13} parent=0 // pred_region
    _
  $region5: #{tile.13} parent=0 // pred_fallthru
    _
  %v4 = vld [vmem:[%s0] ss:$0 sm:$0xff]
  %5 = vst [vmem:[%s1] sm:$0xf] %v4

// kernel: tile.14
$region0: #{tile.14}
  %s0 = inlined_call_operand.vmem [shape: f32[4,32], index: 0, kind: input, shape index: {}]
  %s1 = inlined_call_operand.vmem [shape: f32[1,128], index: 1, kind: output, shape index: {}]
  $region1: #{tile.14} parent=0
    #allocation0 [shape = 'u8[4096]{0}', space=vmem, size = 0x1000, scoped, tag = 'scoped mem for output reshape']
    #allocation1 [shape = 'u8[4096]{0}', space=vmem, size = 0x1000, scoped, tag = 'scoped mem for input reshape']
    %s3 = sshllo.u32 0, 4
    %v4 = vld [vmem:[%s0] sm:%s3]
    %5 = vst [vmem:[#allocation1] sm:%s3] %v4
    %v6 = vld [vmem:[#allocation1] sm:$0x1]
    %vm7 = vcmask 261120
    %8 = vst.msk [vmem:[#allocation0] sm:$0x1] %vm7, %v6
    %s9 = scalar_lea.vmem [#allocation1], 3
    %v10 = vld [vmem:[%s9] sm:$0x1]
    %11 = vrot.lane.b32.xlu0 %v10, 96
    %v12 = vpop.permute.xlu0 %11
    %vm13 = vcmask 1048320
    %14 = vst.msk [vmem:[#allocation0] sm:$0x1] %vm13, %v12
    %s15 = scalar_lea.vmem [#allocation1], 2
    %v16 = vld [vmem:[%s15] sm:$0x1]
    %17 = vrot.lane.b32.xlu0 %v16, 64
    %v18 = vpop.permute.xlu0 %17
    %vm19 = vcmask 785920
    %20 = vst.msk [vmem:[#allocation0] sm:$0x1] %vm19, %v18
    %s21 = scalar_lea.vmem [#allocation1], 1
    %v22 = vld [vmem:[%s21] sm:$0x1]
    %23 = vrot.lane.b32.xlu0 %v22, 32
    %v24 = vpop.permute.xlu0 %23
    %vm25 = vcmask 523520
    %26 = vst.msk [vmem:[#allocation0] sm:$0x1] %vm25, %v24
    %s28 = sshllo.u32 0, 1
    %v30 = vld [vmem:[#allocation0] sm:%s28]
    %s31 = sshllo.u32 0, 1
    %32 = vst [vmem:[%s1] sm:%s31] %v30

// kernel: tile.18
$region0: #{tile.18}
  #allocation0 [shape = 's32[1]{0}', space=sflag, size = 0x4, scoped, tag = 'scoped memory for tile.18']
  %s0 = inlined_call_operand.vmem [shape: f32[64], index: 0, kind: input, shape index: {}]
  %s1 = inlined_call_operand.vmem [shape: f32[2,64], index: 1, kind: output, shape index: {}]
  // Predicated region
  $region2: #{tile.18} parent=0 // pred_check
    _
  $region3: #{tile.18} parent=0 // pred_check_branch
    %3 = sbr.rel (0) target = $region5
  $region4: #{tile.18} parent=0 // pred_region
    _
  $region5: #{tile.18} parent=0 // pred_fallthru
    _
  %v4 = vld [vmem:[%s0] ss:$0 sm:$0xff]
  %5 = vst [vmem:[%s1] sm:$0x3] %v4

// kernel: tile.19
$region0: #{tile.19}
  %s0 = inlined_call_operand.vmem [shape: f32[2,64], index: 0, kind: input, shape index: {}]
  %s1 = inlined_call_operand.vmem [shape: f32[1,128], index: 1, kind: output, shape index: {}]
  $region1: #{tile.19} parent=0
    #allocation0 [shape = 'u8[4096]{0}', space=vmem, size = 0x1000, scoped, tag = 'scoped mem for output reshape']
    #allocation1 [shape = 'u8[4096]{0}', space=vmem, size = 0x1000, scoped, tag = 'scoped mem for input reshape']
    %s3 = sshllo.u32 0, 2
    %v4 = vld [vmem:[%s0] sm:%s3]
    %5 = vst [vmem:[#allocation1] sm:%s3] %v4
    %v6 = vld [vmem:[#allocation1] sm:$0x1]
    %vm7 = vcmask 523264
    %8 = vst.msk [vmem:[#allocation0] sm:$0x1] %vm7, %v6
    %s9 = scalar_lea.vmem [#allocation1], 1
    %v10 = vld [vmem:[%s9] sm:$0x1]
    %11 = vrot.lane.b32.xlu0 %v10, 64
    %v12 = vpop.permute.xlu0 %11
    %vm13 = vcmask 1048064
    %14 = vst.msk [vmem:[#allocation0] sm:$0x1] %vm13, %v12
    %s16 = sshllo.u32 0, 1
    %v18 = vld [vmem:[#allocation0] sm:%s16]
    %s19 = sshllo.u32 0, 1
    %20 = vst [vmem:[%s1] sm:%s19] %v18

// kernel: custom_cnn_forward.1
$region0: #{custom_cnn_forward.1}
  #allocation0 [shape = 'u32[]', space=smem, size = 0x4, offset = 0x4, fixed_abs, tag = 'smem constant byte address 0x4 - core index']
  #allocation1 [shape = 'u32[144,128]{1,0:T(1,128)}', space=vmem, size = 0x12000, scoped, tag = 'internal scratch']
  #allocation2 [shape = 'f32[1,18,10,64]{3,2,1,0:T(8,128)}', space=vmem, size = 0x24000, scoped, tag = 'scratch operand']
  #allocation3 [shape = 'f32[128,384]{1,0:T(8,128)}', space=vmem, size = 0x30000, scoped, tag = 'scratch operand']
  #allocation4 [shape = 'f32[1,10,10,64]{3,2,1,0:T(8,128)}', space=vmem, size = 0x14000, scoped, tag = 'scratch operand']
  #allocation5 [shape = 'f32[64,576]{1,0:T(8,128)}', space=vmem, size = 0x28000, scoped, tag = 'scratch operand']
  %s0 = inlined_call_operand.vmem [shape: f32[2,32,8,54], index: 0, kind: input, shape index: {}]
  %s1 = inlined_call_operand.vmem [shape: f32[54,128], index: 1, kind: input, shape index: {}]
  %s2 = inlined_call_operand.vmem [shape: f32[1,128], index: 2, kind: input, shape index: {}]
  %s3 = inlined_call_operand.vmem [shape: f32[384,128], index: 3, kind: input, shape index: {}]
  %s4 = inlined_call_operand.vmem [shape: f32[1,128], index: 4, kind: input, shape index: {}]
  %s5 = inlined_call_operand.vmem [shape: f32[576,128], index: 5, kind: input, shape index: {}]
  %s6 = inlined_call_operand.vmem [shape: f32[1,128], index: 6, kind: input, shape index: {}]
  %s7 = inlined_call_operand.vmem [shape: f32[49,64], index: 7, kind: input, shape index: {}]
  %s8 = inlined_call_operand.vmem [shape: f32[2,49,128], index: 8, kind: output, shape index: {}]
  %s9 = sld [smem:[#allocation0]]
  $region65: #{custom_cnn_forward.1} parent=0
    _
  %s11 = ssub.s32 1, %s9
  %s12 = scalar_select 0, %s11, %s9
  loop: start=0, step=1, limit=4
  $region2: #{custom_cnn_forward.1} parent=0 // loop_pre_header
    _
  $region3: #{custom_cnn_forward.1} parent=0 // loop_header
    %s14 = sphi 0, %s18
    %p15 = scmp.ge.s32.totalorder %s14, 4
    %s24 = sphi 0, %s26
    %s27 = sphi 0, %s24
    %s28 = sphi 0, %s27
    %s44 = sphi 0, %s28
    %s48 = sphi 0, %s48
    %s50 = sphi 0, %s48
    %s51 = sphi 0, %s50
    %s65 = sphi 0, %s51
    %s69 = sphi 0, %s69
    %s71 = sphi 0, %s69
    %s72 = sphi 0, %s71
    %s86 = sphi 0, %s72
    %s90 = sphi 0, %s90
    %s92 = sphi 0, %s90
    %s93 = sphi 0, %s92
    %s107 = sphi 0, %s93
    %s111 = sphi 0, %s111
    %s113 = sphi 0, %s111
    %s114 = sphi 0, %s113
    %s128 = sphi 0, %s114
    %s132 = sphi 0, %s132
    %s134 = sphi 0, %s132
    %s135 = sphi 0, %s134
    %s149 = sphi 0, %s135
    %s153 = sphi 0, %s153
    %s155 = sphi 0, %s153
    %s156 = sphi 0, %s155
    %s170 = sphi 0, %s156
    %s174 = sphi 0, %s174
    %s176 = sphi 0, %s174
    %s177 = sphi 0, %s176
    %s191 = sphi 0, %s177
    %s197 = sphi 0, %s199
    %s200 = sphi 0, %s197
    %s201 = sphi 0, %s200
    %s217 = sphi 0, %s201
  $region4: #{custom_cnn_forward.1} parent=0 // loop_header_branch
    %17 = sbr.rel (%p15) target = $region8
  $region5: #{custom_cnn_forward.1} parent=0 // loop_body
    %s19 = ssub.s32 %s14, 1
    %s20 = ssub.s32 %s14, 2
    %s21 = sadd.s32 %s14, 1
    %s22 = ssub.s32 %s14, %s21
    %p23 = scmp.eq.s32.totalorder %s22, 0
    %s25 = sadd.s32 %s24, 1
    %s26 = scalar_select %p23, %s24, %s25
    %p29 = pneg %p23
    %p30 = scmp.eq.s32.totalorder %s14, 1
    %p31 = por %p29, %p30
    %p32 = scmp.ne.s32.totalorder %s24, %s27
    %p33 = scmp.eq.s32.totalorder %s14, 0
    %p34 = por %p32, %p33
    %p35 = scmp.ne.s32.totalorder %s24, %s27
    %p36 = scmp.eq.s32.totalorder %s19, 1
    %p37 = por %p35, %p36
    %p38 = scmp.ne.s32.totalorder %s27, %s28
    %p39 = scmp.eq.s32.totalorder %s19, 0
    %p40 = por %p38, %p39
    %p41 = scmp.ne.s32.totalorder %s27, %s28
    %p42 = scmp.eq.s32.totalorder %s20, 1
    %p43 = por %p41, %p42
    %p45 = scmp.ne.s32.totalorder %s28, %s44
    %p46 = scmp.eq.s32.totalorder %s20, 0
    %p47 = por %p45, %p46
    %s49 = sadd.s32 %s48, 1
    %p52 = scmp.eq.s32.totalorder %s14, 1
    %p53 = scmp.ne.s32.totalorder %s48, %s50
    %p54 = scmp.eq.s32.totalorder %s14, 0
    %p55 = por %p53, %p54
    %p56 = scmp.ne.s32.totalorder %s48, %s50
    %p57 = scmp.eq.s32.totalorder %s19, 1
    %p58 = por %p56, %p57
    %p59 = scmp.ne.s32.totalorder %s50, %s51
    %p60 = scmp.eq.s32.totalorder %s19, 0
    %p61 = por %p59, %p60
    %p62 = scmp.ne.s32.totalorder %s50, %s51
    %p63 = scmp.eq.s32.totalorder %s20, 1
    %p64 = por %p62, %p63
    %p66 = scmp.ne.s32.totalorder %s51, %s65
    %p67 = scmp.eq.s32.totalorder %s20, 0
    %p68 = por %p66, %p67
    %s70 = sadd.s32 %s69, 1
    %p73 = scmp.eq.s32.totalorder %s14, 1
    %p74 = scmp.ne.s32.totalorder %s69, %s71
    %p75 = scmp.eq.s32.totalorder %s14, 0
    %p76 = por %p74, %p75
    %p77 = scmp.ne.s32.totalorder %s69, %s71
    %p78 = scmp.eq.s32.totalorder %s19, 1
    %p79 = por %p77, %p78
    %p80 = scmp.ne.s32.totalorder %s71, %s72
    %p81 = scmp.eq.s32.totalorder %s19, 0
    %p82 = por %p80, %p81
    %p83 = scmp.ne.s32.totalorder %s71, %s72
    %p84 = scmp.eq.s32.totalorder %s20, 1
    %p85 = por %p83, %p84
    %p87 = scmp.ne.s32.totalorder %s72, %s86
    %p88 = scmp.eq.s32.totalorder %s20, 0
    %p89 = por %p87, %p88
    %s91 = sadd.s32 %s90, 1
    %p94 = scmp.eq.s32.totalorder %s14, 1
    %p95 = scmp.ne.s32.totalorder %s90, %s92
    %p96 = scmp.eq.s32.totalorder %s14, 0
    %p97 = por %p95, %p96
    %p98 = scmp.ne.s32.totalorder %s90, %s92
    %p99 = scmp.eq.s32.totalorder %s19, 1
    %p100 = por %p98, %p99
    %p101 = scmp.ne.s32.totalorder %s92, %s93
    %p102 = scmp.eq.s32.totalorder %s19, 0
    %p103 = por %p101, %p102
    %p104 = scmp.ne.s32.totalorder %s92, %s93
    %p105 = scmp.eq.s32.totalorder %s20, 1
    %p106 = por %p104, %p105
    %p108 = scmp.ne.s32.totalorder %s93, %s107
    %p109 = scmp.eq.s32.totalorder %s20, 0
    %p110 = por %p108, %p109
    %s112 = sadd.s32 %s111, 1
    %p115 = scmp.eq.s32.totalorder %s14, 1
    %p116 = scmp.ne.s32.totalorder %s111, %s113
    %p117 = scmp.eq.s32.totalorder %s14, 0
    %p118 = por %p116, %p117
    %p119 = scmp.ne.s32.totalorder %s111, %s113
    %p120 = scmp.eq.s32.totalorder %s19, 1
    %p121 = por %p119, %p120
    %p122 = scmp.ne.s32.totalorder %s113, %s114
    %p123 = scmp.eq.s32.totalorder %s19, 0
    %p124 = por %p122, %p123
    %p125 = scmp.ne.s32.totalorder %s113, %s114
    %p126 = scmp.eq.s32.totalorder %s20, 1
    %p127 = por %p125, %p126
    %p129 = scmp.ne.s32.totalorder %s114, %s128
    %p130 = scmp.eq.s32.totalorder %s20, 0
    %p131 = por %p129, %p130
    %s133 = sadd.s32 %s132, 1
    %p136 = scmp.eq.s32.totalorder %s14, 1
    %p137 = scmp.ne.s32.totalorder %s132, %s134
    %p138 = scmp.eq.s32.totalorder %s14, 0
    %p139 = por %p137, %p138
    %p140 = scmp.ne.s32.totalorder %s132, %s134
    %p141 = scmp.eq.s32.totalorder %s19, 1
    %p142 = por %p140, %p141
    %p143 = scmp.ne.s32.totalorder %s134, %s135
    %p144 = scmp.eq.s32.totalorder %s19, 0
    %p145 = por %p143, %p144
    %p146 = scmp.ne.s32.totalorder %s134, %s135
    %p147 = scmp.eq.s32.totalorder %s20, 1
    %p148 = por %p146, %p147
    %p150 = scmp.ne.s32.totalorder %s135, %s149
    %p151 = scmp.eq.s32.totalorder %s20, 0
    %p152 = por %p150, %p151
    %s154 = sadd.s32 %s153, 1
    %p157 = scmp.eq.s32.totalorder %s14, 1
    %p158 = scmp.ne.s32.totalorder %s153, %s155
    %p159 = scmp.eq.s32.totalorder %s14, 0
    %p160 = por %p158, %p159
    %p161 = scmp.ne.s32.totalorder %s153, %s155
    %p162 = scmp.eq.s32.totalorder %s19, 1
    %p163 = por %p161, %p162
    %p164 = scmp.ne.s32.totalorder %s155, %s156
    %p165 = scmp.eq.s32.totalorder %s19, 0
    %p166 = por %p164, %p165
    %p167 = scmp.ne.s32.totalorder %s155, %s156
    %p168 = scmp.eq.s32.totalorder %s20, 1
    %p169 = por %p167, %p168
    %p171 = scmp.ne.s32.totalorder %s156, %s170
    %p172 = scmp.eq.s32.totalorder %s20, 0
    %p173 = por %p171, %p172
    %s175 = sadd.s32 %s174, 1
    %p178 = scmp.eq.s32.totalorder %s14, 1
    %p179 = scmp.ne.s32.totalorder %s174, %s176
    %p180 = scmp.eq.s32.totalorder %s14, 0
    %p181 = por %p179, %p180
    %p182 = scmp.ne.s32.totalorder %s174, %s176
    %p183 = scmp.eq.s32.totalorder %s19, 1
    %p184 = por %p182, %p183
    %p185 = scmp.ne.s32.totalorder %s176, %s177
    %p186 = scmp.eq.s32.totalorder %s19, 0
    %p187 = por %p185, %p186
    %p188 = scmp.ne.s32.totalorder %s176, %s177
    %p189 = scmp.eq.s32.totalorder %s20, 1
    %p190 = por %p188, %p189
    %p192 = scmp.ne.s32.totalorder %s177, %s191
    %p193 = scmp.eq.s32.totalorder %s20, 0
    %p194 = por %p192, %p193
    %s195 = ssub.s32 %s14, %s21
    %p196 = scmp.eq.s32.totalorder %s195, 0
    %s198 = sadd.s32 %s197, 1
    %s199 = scalar_select %p196, %s197, %s198
    %p202 = pneg %p196
    %p203 = scmp.eq.s32.totalorder %s14, 1
    %p204 = por %p202, %p203
    %p205 = scmp.ne.s32.totalorder %s197, %s200
    %p206 = scmp.eq.s32.totalorder %s14, 0
    %p207 = por %p205, %p206
    %p208 = scmp.ne.s32.totalorder %s197, %s200
    %p209 = scmp.eq.s32.totalorder %s19, 1
    %p210 = por %p208, %p209
    %p211 = scmp.ne.s32.totalorder %s200, %s201
    %p212 = scmp.eq.s32.totalorder %s19, 0
    %p213 = por %p211, %p212
    %p214 = scmp.ne.s32.totalorder %s200, %s201
    %p215 = scmp.eq.s32.totalorder %s20, 1
    %p216 = por %p214, %p215
    %p218 = scmp.ne.s32.totalorder %s201, %s217
    %p219 = scmp.eq.s32.totalorder %s20, 0
    %p220 = por %p218, %p219
    %p221 = scmp.le.s32.totalorder 1, %s14
    %p222 = scmp.lt.s32.totalorder %s14, 3
    %p223 = pnand %p221, %p222
    %p224 = pneg %p223
    // Predicated region
    $region9: #{custom_cnn_forward.1} parent=5 // pred_check
      _
    $region10: #{custom_cnn_forward.1} parent=5 // pred_check_branch
      %226 = sbr.rel (%p223) target = $region12
    $region11: #{custom_cnn_forward.1} parent=5 // pred_region
      %s227 = ssub.s32 %s14, 1
      // Predicated region
      $region13: #{custom_cnn_forward.1} parent=11 // pred_check
        %p228 = pneg %p61
      $region14: #{custom_cnn_forward.1} parent=11 // pred_check_branch
        %230 = sbr.rel (%p228) target = $region16
      $region15: #{custom_cnn_forward.1} parent=11 // pred_region
        _
      $region16: #{custom_cnn_forward.1} parent=11 // pred_fallthru
        _
      // Predicated region
      $region17: #{custom_cnn_forward.1} parent=11 // pred_check
        %p231 = pneg %p82
      $region18: #{custom_cnn_forward.1} parent=11 // pred_check_branch
        %233 = sbr.rel (%p231) target = $region20
      $region19: #{custom_cnn_forward.1} parent=11 // pred_region
        _
      $region20: #{custom_cnn_forward.1} parent=11 // pred_fallthru
        _
      // Predicated region
      $region21: #{custom_cnn_forward.1} parent=11 // pred_check
        %p234 = pneg %p103
      $region22: #{custom_cnn_forward.1} parent=11 // pred_check_branch
        %236 = sbr.rel (%p234) target = $region24
      $region23: #{custom_cnn_forward.1} parent=11 // pred_region
        _
      $region24: #{custom_cnn_forward.1} parent=11 // pred_fallthru
        _
      // Predicated region
      $region25: #{custom_cnn_forward.1} parent=11 // pred_check
        %p237 = pneg %p124
      $region26: #{custom_cnn_forward.1} parent=11 // pred_check_branch
        %239 = sbr.rel (%p237) target = $region28
      $region27: #{custom_cnn_forward.1} parent=11 // pred_region
        _
      $region28: #{custom_cnn_forward.1} parent=11 // pred_fallthru
        _
      // Predicated region
      $region29: #{custom_cnn_forward.1} parent=11 // pred_check
        %p240 = pneg %p145
      $region30: #{custom_cnn_forward.1} parent=11 // pred_check_branch
        %242 = sbr.rel (%p240) target = $region32
      $region31: #{custom_cnn_forward.1} parent=11 // pred_region
        _
      $region32: #{custom_cnn_forward.1} parent=11 // pred_fallthru
        _
      // Predicated region
      $region33: #{custom_cnn_forward.1} parent=11 // pred_check
        %p243 = pneg %p166
      $region34: #{custom_cnn_forward.1} parent=11 // pred_check_branch
        %245 = sbr.rel (%p243) target = $region36
      $region35: #{custom_cnn_forward.1} parent=11 // pred_region
        _
      $region36: #{custom_cnn_forward.1} parent=11 // pred_fallthru
        _
      // Predicated region
      $region37: #{custom_cnn_forward.1} parent=11 // pred_check
        %p246 = pneg %p187
      $region38: #{custom_cnn_forward.1} parent=11 // pred_check_branch
        %248 = sbr.rel (%p246) target = $region40
      $region39: #{custom_cnn_forward.1} parent=11 // pred_region
        _
      $region40: #{custom_cnn_forward.1} parent=11 // pred_fallthru
        _
    $region12: #{custom_cnn_forward.1} parent=5 // pred_fallthru
      _
    %p249 = scmp.lt.s32.totalorder %s14, 2
    // Predicated region
    $region41: #{custom_cnn_forward.1} parent=5 // pred_check
      %p250 = pneg %p249
    $region42: #{custom_cnn_forward.1} parent=5 // pred_check_branch
      %252 = sbr.rel (%p250) target = $region44
    $region43: #{custom_cnn_forward.1} parent=5 // pred_region
      // Predicated region
      $region45: #{custom_cnn_forward.1} parent=43 // pred_check
        %p253 = pneg %p34
      $region46: #{custom_cnn_forward.1} parent=43 // pred_check_branch
        %255 = sbr.rel (%p253) target = $region48
      $region47: #{custom_cnn_forward.1} parent=43 // pred_region
        %p256 = scmp.lt.s32.totalorder %s14, 1
        %s257 = scalar_select %p256, %s14, 1
        %s258 = smul.addr %s257, 32
        %s259 = smul.addr %s258, 8
        %s260 = scalar_lea.vmem %s0, %s259
      $region48: #{custom_cnn_forward.1} parent=43 // pred_fallthru
        _
    $region44: #{custom_cnn_forward.1} parent=5 // pred_fallthru
      _
    %p261 = scmp.le.s32.totalorder 1, %s14
    %p262 = scmp.lt.s32.totalorder %s14, 3
    %p263 = pnand %p261, %p262
    %p264 = pneg %p263
    // Predicated region
    $region49: #{custom_cnn_forward.1} parent=5 // pred_check
      _
    $region50: #{custom_cnn_forward.1} parent=5 // pred_check_branch
      %266 = sbr.rel (%p263) target = $region52
    $region51: #{custom_cnn_forward.1} parent=5 // pred_region
      %s267 = ssub.s32 %s14, 1
      %p268 = scmp.lt.s32.totalorder %s19, 1
      %s269 = scalar_select %p268, %s19, 1
      %s270 = smul.addr %s269, 32
      %s271 = smul.addr %s270, 8
      %s272 = scalar_lea.vmem %s0, %s271
      %p273 = pneg %p40
      %p274 = pneg %p37
      %p275 = pneg %p61
      %p276 = pneg %p58
      %p277 = pneg %p82
      %p278 = pneg %p79
      %p279 = pneg %p103
      %p280 = pneg %p100
      %p281 = pneg %p124
      %p282 = pneg %p121
      %p283 = pneg %p145
      %p284 = pneg %p142
      %p285 = pneg %p166
      %p286 = pneg %p163
      %p287 = pneg %p187
      %p288 = pneg %p184
      %p289 = pneg %p213
      %p290 = pneg %p210
      %p291 = scmp.lt.s32.totalorder %s19, 1
      %s292 = scalar_select %p291, %s19, 1
      %s293 = smul.addr %s292, 7
      %s294 = smul.addr %s293, 8
      %s295 = scalar_lea.vmem %s8, %s294
      %p296 = scmp.lt.s32.totalorder %s19, 1
      %s297 = scalar_select %p296, %s19, 1
      %s298 = smul.addr %s297, 32
      %s299 = smul.addr %s298, 8
      %s300 = scalar_lea.vmem %s0, %s299
      %p301 = scmp.lt.s32.totalorder %s19, 1
      %s302 = scalar_select %p301, %s19, 1
      %s303 = smul.addr %s302, 7
      %s304 = smul.addr %s303, 8
      %s305 = scalar_lea.vmem %s8, %s304
      %v306 = vld [vmem:[%s300] sm:$0xff]
      %v307 = vld [vmem:[%s300 + $0x8] sm:$0xff]
      %v308 = vld [vmem:[%s300 + $0x10] sm:$0xff]
      %v309 = vld [vmem:[%s300 + $0x18] sm:$0xff]
      %v310 = vld [vmem:[%s300 + $0x20] sm:$0xff]
      %v311 = vld [vmem:[%s300 + $0x28] sm:$0xff]
      %v312 = vld [vmem:[%s300 + $0x30] sm:$0xff]
      %v313 = vld [vmem:[%s300 + $0x38] sm:$0xff]
      %v314 = vld [vmem:[%s300 + $0x40] sm:$0xff]
      %v315 = vld [vmem:[%s300 + $0x48] sm:$0xff]
      %v316 = vld [vmem:[%s300 + $0x50] sm:$0xff]
      %v317 = vld [vmem:[%s300 + $0x58] sm:$0xff]
      %v318 = vld [vmem:[%s300 + $0x60] sm:$0xff]
      %v319 = vld [vmem:[%s300 + $0x68] sm:$0xff]
      %v320 = vld [vmem:[%s300 + $0x70] sm:$0xff]
      %v321 = vld [vmem:[%s300 + $0x78] sm:$0xff]
      %v322 = vld [vmem:[%s300 + $0x80] sm:$0xff]
      %v323 = vld [vmem:[%s300 + $0x88] sm:$0xff]
      %v324 = vld [vmem:[%s300 + $0x90] sm:$0xff]
      %v325 = vld [vmem:[%s300 + $0x98] sm:$0xff]
      %v326 = vld [vmem:[%s300 + $0xa0] sm:$0xff]
      %v327 = vld [vmem:[%s300 + $0xa8] sm:$0xff]
      %v328 = vld [vmem:[%s300 + $0xb0] sm:$0xff]
      %v329 = vld [vmem:[%s300 + $0xb8] sm:$0xff]
      %v330 = vld [vmem:[%s300 + $0xc0] sm:$0xff]
      %v331 = vld [vmem:[%s300 + $0xc8] sm:$0xff]
      %v332 = vld [vmem:[%s300 + $0xd0] sm:$0xff]
      %v333 = vld [vmem:[%s300 + $0xd8] sm:$0xff]
      %v334 = vld [vmem:[%s300 + $0xe0] sm:$0xff]
      %v335 = vld [vmem:[%s300 + $0xe8] sm:$0xff]
      %v336 = vld [vmem:[%s300 + $0xf0] sm:$0xff]
      %v337 = vld [vmem:[%s300 + $0xf8] sm:$0xff]
      %v338 = vld [vmem:[%s1] sm:$0xff]
      %v339 = vld [vmem:[%s1 + $0x8] sm:$0xff]
      %v340 = vld [vmem:[%s1 + $0x10] sm:$0xff]
      %v341 = vld [vmem:[%s1 + $0x18] sm:$0xff]
      %v342 = vld [vmem:[%s1 + $0x20] sm:$0xff]
      %v343 = vld [vmem:[%s1 + $0x28] sm:$0xff]
      %v344 = vld [vmem:[%s1 + $0x30] sm:$0x3f]
      %v345 = vld [vmem:[%s2] sm:$0x1]
      %v347 = vlaneseq
      %v348 = vshrl.u32 %v347, 7
      %v349 = vsub.s32 0, %v348
      %v350 = vrot.slane %v345, %v349
      %vm352 = vcmask 441344
      %v354 = vsel %vm352, %v306, 0
      %v357 = vsel %vm352, %v307, 0
      %v360 = vsel %vm352, %v308, 0
      %v363 = vsel %vm352, %v309, 0
      %v366 = vsel %vm352, %v310, 0
      %v369 = vsel %vm352, %v311, 0
      %v372 = vsel %vm352, %v312, 0
      %v375 = vsel %vm352, %v313, 0
      %v378 = vsel %vm352, %v314, 0
      %v381 = vsel %vm352, %v315, 0
      %v384 = vsel %vm352, %v316, 0
      %v387 = vsel %vm352, %v317, 0
      %v390 = vsel %vm352, %v318, 0
      %v393 = vsel %vm352, %v319, 0
      %v396 = vsel %vm352, %v320, 0
      %v399 = vsel %vm352, %v321, 0
      %v402 = vsel %vm352, %v322, 0
      %v405 = vsel %vm352, %v323, 0
      %v408 = vsel %vm352, %v324, 0
      %v411 = vsel %vm352, %v325, 0
      %v414 = vsel %vm352, %v326, 0
      %v417 = vsel %vm352, %v327, 0
      %v420 = vsel %vm352, %v328, 0
      %v423 = vsel %vm352, %v329, 0
      %v426 = vsel %vm352, %v330, 0
      %v429 = vsel %vm352, %v331, 0
      %v432 = vsel %vm352, %v332, 0
      %v435 = vsel %vm352, %v333, 0
      %v438 = vsel %vm352, %v334, 0
      %v441 = vsel %vm352, %v335, 0
      %v444 = vsel %vm352, %v336, 0
      %v447 = vsel %vm352, %v337, 0
      %vm449 = vcmask 1045504
      %v451 = vsel %vm449, %v344, 0
      %453 = vmatprep.subr.mxu0 0.0
      %454 = vmatpush1.msra.mxu0 %v338
      %455 = vmatprep.subr.mxu0 0.0
      %456 = vmatpush1.msra.mxu0 %v339
      %457 = vmatprep.subr.mxu0 0.0
      %458 = vmatpush1.msra.mxu0 %v340
      %459 = vmatprep.subr.mxu0 0.0
      %460 = vmatpush1.msra.mxu0 %v341
      %461 = vmatprep.subr.mxu0 0.0
      %462 = vmatpush1.msra.mxu0 %v342
      %463 = vmatprep.subr.mxu0 0.0
      %464 = vmatpush1.msra.mxu0 %v343
      %465 = vmatprep.subr.mxu0 0.0
      %466 = vmatpush1.msra.mxu0 %v451
      %467 = vmatprep.subr.mxu0 0.0
      %468 = vmatpush1.msra.mxu0 0.0
      %469 = vmatprep.subr.mxu0 0.0
      %470 = vmatpush1.msra.mxu0 0.0
      %471 = vmatprep.subr.mxu0 0.0
      %472 = vmatpush1.msra.mxu0 0.0
      %473 = vmatprep.subr.mxu0 0.0
      %474 = vmatpush1.msra.mxu0 0.0
      %475 = vmatprep.subr.mxu0 0.0
      %476 = vmatpush1.msra.mxu0 0.0
      %477 = vmatprep.subr.mxu0 0.0
      %478 = vmatpush1.msra.mxu0 0.0
      %479 = vmatprep.subr.mxu0 0.0
      %480 = vmatpush1.msra.mxu0 0.0
      %481 = vmatprep.subr.mxu0 0.0
      %482 = vmatpush1.msra.mxu0 0.0
      %483 = vmatprep.subr.mxu0 0.0
      %484 = vmatpush1.msra.mxu0 0.0
      %485 = vmatprep.subr.mxu0 0.0
      %486 = vmatpush1.msra.mxu0 0.0
      %487 = vmatprep.subr.mxu0 0.0
      %488 = vmatpush1.msra.mxu0 0.0
      %489 = vmatprep.subr.mxu0 0.0
      %490 = vmatpush1.msra.mxu0 0.0
      %491 = vmatprep.subr.mxu0 0.0
      %492 = vmatpush1.msra.mxu0 0.0
      %493 = vmatprep.subr.mxu0 0.0
      %494 = vmatpush1.msra.mxu0 0.0
      %495 = vmatprep.subr.mxu0 0.0
      %496 = vmatpush1.msra.mxu0 0.0
      %497 = vmatprep.subr.mxu0 0.0
      %498 = vmatpush1.msra.mxu0 0.0
      %499 = vmatprep.subr.mxu0 0.0
      %500 = vmatpush1.msra.mxu0 0.0
      %501 = vmatprep.subr.mxu0 0.0
      %502 = vmatpush1.msra.mxu0 0.0
      %503 = vmatprep.subr.mxu0 0.0
      %504 = vmatpush1.msra.mxu0 0.0
      %505 = vmatprep.subr.mxu0 0.0
      %506 = vmatpush1.msra.mxu0 0.0
      %507 = vmatprep.subr.mxu0 0.0
      %508 = vmatpush1.msra.mxu0 0.0
      %509 = vmatprep.subr.mxu0 0.0
      %510 = vmatpush1.msra.mxu0 0.0
      %511 = vmatprep.subr.mxu0 0.0
      %512 = vmatpush1.msra.mxu0 0.0
      %513 = vmatprep.subr.mxu0 0.0
      %514 = vmatpush1.msra.mxu0 0.0
      %515 = vmatprep.subr.mxu0 0.0
      %516 = vmatpush1.msra.mxu0 0.0
      %517 = vmatprep.mubr.f32.mxu0 0.0
      %518 = vmatmul.mubr.f32.gmra.mrb[0].mxu0 %v354
      %v519 = vpop.f32.mrb[0].mxu0
      %v520 = vadd.f32 %v350, %v519
      %v521 = vpop.f32.mrb[0].mxu0
      %522 = vmatprep.mubr.f32.mxu0 0.0
      %523 = vmatmul.mubr.f32.gmra.mrb[0].mxu0 %v357
      %v524 = vpop.f32.mrb[0].mxu0
      %v525 = vadd.f32 %v350, %v524
      %v526 = vpop.f32.mrb[0].mxu0
      %527 = vmatprep.mubr.f32.mxu0 0.0
      %528 = vmatmul.mubr.f32.gmra.mrb[0].mxu0 %v360
      %v529 = vpop.f32.mrb[0].mxu0
      %v530 = vadd.f32 %v350, %v529
      %v531 = vpop.f32.mrb[0].mxu0
      %532 = vmatprep.mubr.f32.mxu0 0.0
      %533 = vmatmul.mubr.f32.gmra.mrb[0].mxu0 %v363
      %v534 = vpop.f32.mrb[0].mxu0
      %v535 = vadd.f32 %v350, %v534
      %v536 = vpop.f32.mrb[0].mxu0
      %537 = vmatprep.mubr.f32.mxu0 0.0
      %538 = vmatmul.mubr.f32.gmra.mrb[0].mxu0 %v366
      %v539 = vpop.f32.mrb[0].mxu0
      %v540 = vadd.f32 %v350, %v539
      %v541 = vpop.f32.mrb[0].mxu0
      %542 = vmatprep.mubr.f32.mxu0 0.0
      %543 = vmatmul.mubr.f32.gmra.mrb[0].mxu0 %v369
      %v544 = vpop.f32.mrb[0].mxu0
      %v545 = vadd.f32 %v350, %v544
      %v546 = vpop.f32.mrb[0].mxu0
      %547 = vmatprep.mubr.f32.mxu0 0.0
      %548 = vmatmul.mubr.f32.gmra.mrb[0].mxu0 %v372
      %v549 = vpop.f32.mrb[0].mxu0
      %v550 = vadd.f32 %v350, %v549
      %v551 = vpop.f32.mrb[0].mxu0
      %552 = vmatprep.mubr.f32.mxu0 0.0
      %553 = vmatmul.mubr.f32.gmra.mrb[0].mxu0 %v375
      %v554 = vpop.f32.mrb[0].mxu0
      %v555 = vadd.f32 %v350, %v554
      %v556 = vpop.f32.mrb[0].mxu0
      %557 = vmatprep.mubr.f32.mxu0 0.0
      %558 = vmatmul.mubr.f32.gmra.mrb[0].mxu0 %v378
      %v559 = vpop.f32.mrb[0].mxu0
      %v560 = vadd.f32 %v350, %v559
      %v561 = vpop.f32.mrb[0].mxu0
      %562 = vmatprep.mubr.f32.mxu0 0.0
      %563 = vmatmul.mubr.f32.gmra.mrb[0].mxu0 %v381
      %v564 = vpop.f32.mrb[0].mxu0
      %v565 = vadd.f32 %v350, %v564
      %v566 = vpop.f32.mrb[0].mxu0
      %567 = vmatprep.mubr.f32.mxu0 0.0
      %568 = vmatmul.mubr.f32.gmra.mrb[0].mxu0 %v384
      %v569 = vpop.f32.mrb[0].mxu0
      %v570 = vadd.f32 %v350, %v569
      %v571 = vpop.f32.mrb[0].mxu0
      %572 = vmatprep.mubr.f32.mxu0 0.0
      %573 = vmatmul.mubr.f32.gmra.mrb[0].mxu0 %v387
      %v574 = vpop.f32.mrb[0].mxu0
      %v575 = vadd.f32 %v350, %v574
      %v576 = vpop.f32.mrb[0].mxu0
      %577 = vmatprep.mubr.f32.mxu0 0.0
      %578 = vmatmul.mubr.f32.gmra.mrb[0].mxu0 %v390
      %v579 = vpop.f32.mrb[0].mxu0
      %v580 = vadd.f32 %v350, %v579
      %v581 = vpop.f32.mrb[0].mxu0
      %582 = vmatprep.mubr.f32.mxu0 0.0
      %583 = vmatmul.mubr.f32.gmra.mrb[0].mxu0 %v393
      %v584 = vpop.f32.mrb[0].mxu0
      %v585 = vadd.f32 %v350, %v584
      %v586 = vpop.f32.mrb[0].mxu0
      %587 = vmatprep.mubr.f32.mxu0 0.0
      %588 = vmatmul.mubr.f32.gmra.mrb[0].mxu0 %v396
      %v589 = vpop.f32.mrb[0].mxu0
      %v590 = vadd.f32 %v350, %v589
      %v591 = vpop.f32.mrb[0].mxu0
      %592 = vmatprep.mubr.f32.mxu0 0.0
      %593 = vmatmul.mubr.f32.gmra.mrb[0].mxu0 %v399
      %v594 = vpop.f32.mrb[0].mxu0
      %v595 = vadd.f32 %v350, %v594
      %v596 = vpop.f32.mrb[0].mxu0
      %597 = vmatprep.mubr.f32.mxu0 0.0
      %598 = vmatmul.mubr.f32.gmra.mrb[0].mxu0 %v402
      %v599 = vpop.f32.mrb[0].mxu0
      %v600 = vadd.f32 %v350, %v599
      %v601 = vpop.f32.mrb[0].mxu0
      %602 = vmatprep.mubr.f32.mxu0 0.0
      %603 = vmatmul.mubr.f32.gmra.mrb[0].mxu0 %v405
      %v604 = vpop.f32.mrb[0].mxu0
      %v605 = vadd.f32 %v350, %v604
      %v606 = vpop.f32.mrb[0].mxu0
      %607 = vmatprep.mubr.f32.mxu0 0.0
      %608 = vmatmul.mubr.f32.gmra.mrb[0].mxu0 %v408
      %v609 = vpop.f32.mrb[0].mxu0
      %v610 = vadd.f32 %v350, %v609
      %v611 = vpop.f32.mrb[0].mxu0
      %612 = vmatprep.mubr.f32.mxu0 0.0
      %613 = vmatmul.mubr.f32.gmra.mrb[0].mxu0 %v411
      %v614 = vpop.f32.mrb[0].mxu0
      %v615 = vadd.f32 %v350, %v614
      %v616 = vpop.f32.mrb[0].mxu0
      %617 = vmatprep.mubr.f32.mxu0 0.0
      %618 = vmatmul.mubr.f32.gmra.mrb[0].mxu0 %v414
      %v619 = vpop.f32.mrb[0].mxu0
      %v620 = vadd.f32 %v350, %v619
      %v621 = vpop.f32.mrb[0].mxu0
      %622 = vmatprep.mubr.f32.mxu0 0.0
      %623 = vmatmul.mubr.f32.gmra.mrb[0].mxu0 %v417
      %v624 = vpop.f32.mrb[0].mxu0
      %v625 = vadd.f32 %v350, %v624
      %v626 = vpop.f32.mrb[0].mxu0
      %627 = vmatprep.mubr.f32.mxu0 0.0
      %628 = vmatmul.mubr.f32.gmra.mrb[0].mxu0 %v420
      %v629 = vpop.f32.mrb[0].mxu0
      %v630 = vadd.f32 %v350, %v629
      %v631 = vpop.f32.mrb[0].mxu0
      %632 = vmatprep.mubr.f32.mxu0 0.0
      %633 = vmatmul.mubr.f32.gmra.mrb[0].mxu0 %v423
      %v634 = vpop.f32.mrb[0].mxu0
      %v635 = vadd.f32 %v350, %v634
      %v636 = vpop.f32.mrb[0].mxu0
      %637 = vmatprep.mubr.f32.mxu0 0.0
      %638 = vmatmul.mubr.f32.gmra.mrb[0].mxu0 %v426
      %v639 = vpop.f32.mrb[0].mxu0
      %v640 = vadd.f32 %v350, %v639
      %v641 = vpop.f32.mrb[0].mxu0
      %642 = vmatprep.mubr.f32.mxu0 0.0
      %643 = vmatmul.mubr.f32.gmra.mrb[0].mxu0 %v429
      %v644 = vpop.f32.mrb[0].mxu0
      %v645 = vadd.f32 %v350, %v644
      %v646 = vpop.f32.mrb[0].mxu0
      %647 = vmatprep.mubr.f32.mxu0 0.0
      %648 = vmatmul.mubr.f32.gmra.mrb[0].mxu0 %v432
      %v649 = vpop.f32.mrb[0].mxu0
      %v650 = vadd.f32 %v350, %v649
      %v651 = vpop.f32.mrb[0].mxu0
      %652 = vmatprep.mubr.f32.mxu0 0.0
      %653 = vmatmul.mubr.f32.gmra.mrb[0].mxu0 %v435
      %v654 = vpop.f32.mrb[0].mxu0
      %v655 = vadd.f32 %v350, %v654
      %v656 = vpop.f32.mrb[0].mxu0
      %657 = vmatprep.mubr.f32.mxu0 0.0
      %658 = vmatmul.mubr.f32.gmra.mrb[0].mxu0 %v438
      %v659 = vpop.f32.mrb[0].mxu0
      %v660 = vadd.f32 %v350, %v659
      %v661 = vpop.f32.mrb[0].mxu0
      %662 = vmatprep.mubr.f32.mxu0 0.0
      %663 = vmatmul.mubr.f32.gmra.mrb[0].mxu0 %v441
      %v664 = vpop.f32.mrb[0].mxu0
      %v665 = vadd.f32 %v350, %v664
      %v666 = vpop.f32.mrb[0].mxu0
      %667 = vmatprep.mubr.f32.mxu0 0.0
      %668 = vmatmul.mubr.f32.gmra.mrb[0].mxu0 %v444
      %v669 = vpop.f32.mrb[0].mxu0
      %v670 = vadd.f32 %v350, %v669
      %v671 = vpop.f32.mrb[0].mxu0
      %672 = vmatprep.mubr.f32.mxu0 0.0
      %673 = vmatmul.mubr.f32.gmra.mrb[0].mxu0 %v447
      %v674 = vpop.f32.mrb[0].mxu0
      %v675 = vadd.f32 %v350, %v674
      %v676 = vpop.f32.mrb[0].mxu0
      %677 = vdwg.mxu0
      %v678 = vmax.f32 %v520, 0.0
      %v679 = vmax.f32 %v525, 0.0
      %v680 = vmax.f32 %v530, 0.0
      %v681 = vmax.f32 %v535, 0.0
      %v682 = vmax.f32 %v540, 0.0
      %v683 = vmax.f32 %v545, 0.0
      %v684 = vmax.f32 %v550, 0.0
      %v685 = vmax.f32 %v555, 0.0
      %v686 = vmax.f32 %v560, 0.0
      %v687 = vmax.f32 %v565, 0.0
      %v688 = vmax.f32 %v570, 0.0
      %v689 = vmax.f32 %v575, 0.0
      %v690 = vmax.f32 %v580, 0.0
      %v691 = vmax.f32 %v585, 0.0
      %v692 = vmax.f32 %v590, 0.0
      %v693 = vmax.f32 %v595, 0.0
      %v694 = vmax.f32 %v600, 0.0
      %v695 = vmax.f32 %v605, 0.0
      %v696 = vmax.f32 %v610, 0.0
      %v697 = vmax.f32 %v615, 0.0
      %v698 = vmax.f32 %v620, 0.0
      %v699 = vmax.f32 %v625, 0.0
      %v700 = vmax.f32 %v630, 0.0
      %v701 = vmax.f32 %v635, 0.0
      %v702 = vmax.f32 %v640, 0.0
      %v703 = vmax.f32 %v645, 0.0
      %v704 = vmax.f32 %v650, 0.0
      %v705 = vmax.f32 %v655, 0.0
      %v706 = vmax.f32 %v660, 0.0
      %v707 = vmax.f32 %v665, 0.0
      %v708 = vmax.f32 %v670, 0.0
      %v709 = vmax.f32 %v675, 0.0
      %v710 = vmax.f32 %v678, %v679
      %v711 = vmax.f32 %v680, %v681
      %v712 = vmax.f32 %v682, %v683
      %v713 = vmax.f32 %v684, %v685
      %v714 = vmax.f32 %v686, %v687
      %v715 = vmax.f32 %v688, %v689
      %v716 = vmax.f32 %v690, %v691
      %v717 = vmax.f32 %v692, %v693
      %v718 = vmax.f32 %v694, %v695
      %v719 = vmax.f32 %v696, %v697
      %v720 = vmax.f32 %v698, %v699
      %v721 = vmax.f32 %v700, %v701
      %v722 = vmax.f32 %v702, %v703
      %v723 = vmax.f32 %v704, %v705
      %v724 = vmax.f32 %v706, %v707
      %v725 = vmax.f32 %v708, %v709
      %742 = vrot.lane.b32.xlu0 %v710, 96
      %v743 = vpop.permute.xlu0 %742
      %744 = vrot.lane.b32.xlu0 %v711, 96
      %v745 = vpop.permute.xlu0 %744
      %746 = vrot.lane.b32.xlu0 %v712, 96
      %v747 = vpop.permute.xlu0 %746
      %748 = vrot.lane.b32.xlu0 %v713, 96
      %v749 = vpop.permute.xlu0 %748
      %750 = vrot.lane.b32.xlu0 %v714, 96
      %v751 = vpop.permute.xlu0 %750
      %752 = vrot.lane.b32.xlu0 %v715, 96
      %v753 = vpop.permute.xlu0 %752
      %754 = vrot.lane.b32.xlu0 %v716, 96
      %v755 = vpop.permute.xlu0 %754
      %756 = vrot.lane.b32.xlu0 %v717, 96
      %v757 = vpop.permute.xlu0 %756
      %758 = vrot.lane.b32.xlu0 %v718, 96
      %v759 = vpop.permute.xlu0 %758
      %760 = vrot.lane.b32.xlu0 %v719, 96
      %v761 = vpop.permute.xlu0 %760
      %762 = vrot.lane.b32.xlu0 %v720, 96
      %v763 = vpop.permute.xlu0 %762
      %764 = vrot.lane.b32.xlu0 %v721, 96
      %v765 = vpop.permute.xlu0 %764
      %766 = vrot.lane.b32.xlu0 %v722, 96
      %v767 = vpop.permute.xlu0 %766
      %768 = vrot.lane.b32.xlu0 %v723, 96
      %v769 = vpop.permute.xlu0 %768
      %770 = vrot.lane.b32.xlu0 %v724, 96
      %v771 = vpop.permute.xlu0 %770
      %772 = vrot.lane.b32.xlu0 %v725, 96
      %v773 = vpop.permute.xlu0 %772
      %v790 = vmax.f32 %v710, %v743
      %v791 = vmax.f32 %v711, %v745
      %v792 = vmax.f32 %v712, %v747
      %v793 = vmax.f32 %v713, %v749
      %v794 = vmax.f32 %v714, %v751
      %v795 = vmax.f32 %v715, %v753
      %v796 = vmax.f32 %v716, %v755
      %v797 = vmax.f32 %v717, %v757
      %v798 = vmax.f32 %v718, %v759
      %v799 = vmax.f32 %v719, %v761
      %v800 = vmax.f32 %v720, %v763
      %v801 = vmax.f32 %v721, %v765
      %v802 = vmax.f32 %v722, %v767
      %v803 = vmax.f32 %v723, %v769
      %v804 = vmax.f32 %v724, %v771
      %v805 = vmax.f32 %v725, %v773
      %vm806 = vcmask 523264
      %807 = vst.msk [vmem:[#allocation2] sm:$0xff] %vm806, 0.0
      %vm808 = vcmask 517120
      %809 = vst.msk [vmem:[#allocation2 + $0x8] sm:$0x3] %vm808, 0.0
      %s810 = scalar_lea.vmem [#allocation2], 272
      %811 = vst.msk [vmem:[%s810] sm:$0xff] %vm806, 0.0
      %812 = vst.msk [vmem:[%s810 + $0x8] sm:$0x3] %vm808, 0.0
      %vm813 = vcmask 516096
      %814 = vst.msk [vmem:[#allocation2] sm:$0x1] %vm813, 0.0
      %815 = vst.msk [vmem:[#allocation2 + $0x10] sm:$0x1] %vm813, 0.0
      %816 = vst.msk [vmem:[#allocation2 + $0x20] sm:$0x1] %vm813, 0.0
      %817 = vst.msk [vmem:[#allocation2 + $0x30] sm:$0x1] %vm813, 0.0
      %818 = vst.msk [vmem:[#allocation2 + $0x40] sm:$0x1] %vm813, 0.0
      %819 = vst.msk [vmem:[#allocation2 + $0x50] sm:$0x1] %vm813, 0.0
      %820 = vst.msk [vmem:[#allocation2 + $0x60] sm:$0x1] %vm813, 0.0
      %821 = vst.msk [vmem:[#allocation2 + $0x70] sm:$0x1] %vm813, 0.0
      %822 = vst.msk [vmem:[#allocation2 + $0x80] sm:$0x1] %vm813, 0.0
      %823 = vst.msk [vmem:[#allocation2 + $0x90] sm:$0x1] %vm813, 0.0
      %824 = vst.msk [vmem:[#allocation2 + $0xa0] sm:$0x1] %vm813, 0.0
      %825 = vst.msk [vmem:[#allocation2 + $0xb0] sm:$0x1] %vm813, 0.0
      %826 = vst.msk [vmem:[#allocation2 + $0xc0] sm:$0x1] %vm813, 0.0
      %827 = vst.msk [vmem:[#allocation2 + $0xd0] sm:$0x1] %vm813, 0.0
      %828 = vst.msk [vmem:[#allocation2 + $0xe0] sm:$0x1] %vm813, 0.0
      %829 = vst.msk [vmem:[#allocation2 + $0xf0] sm:$0x1] %vm813, 0.0
      %830 = vst.msk [vmem:[#allocation2 + $0x100] sm:$0x1] %vm813, 0.0
      %831 = vst.msk [vmem:[#allocation2 + $0x110] sm:$0x1] %vm813, 0.0
      %832 = vst.msk [vmem:[#allocation2 + $0x9] sm:$0x1] %vm813, 0.0
      %833 = vst.msk [vmem:[#allocation2 + $0x19] sm:$0x1] %vm813, 0.0
      %834 = vst.msk [vmem:[#allocation2 + $0x29] sm:$0x1] %vm813, 0.0
      %835 = vst.msk [vmem:[#allocation2 + $0x39] sm:$0x1] %vm813, 0.0
      %836 = vst.msk [vmem:[#allocation2 + $0x49] sm:$0x1] %vm813, 0.0
      %837 = vst.msk [vmem:[#allocation2 + $0x59] sm:$0x1] %vm813, 0.0
      %838 = vst.msk [vmem:[#allocation2 + $0x69] sm:$0x1] %vm813, 0.0
      %839 = vst.msk [vmem:[#allocation2 + $0x79] sm:$0x1] %vm813, 0.0
      %840 = vst.msk [vmem:[#allocation2 + $0x89] sm:$0x1] %vm813, 0.0
      %841 = vst.msk [vmem:[#allocation2 + $0x99] sm:$0x1] %vm813, 0.0
      %842 = vst.msk [vmem:[#allocation2 + $0xa9] sm:$0x1] %vm813, 0.0
      %843 = vst.msk [vmem:[#allocation2 + $0xb9] sm:$0x1] %vm813, 0.0
      %844 = vst.msk [vmem:[#allocation2 + $0xc9] sm:$0x1] %vm813, 0.0
      %845 = vst.msk [vmem:[#allocation2 + $0xd9] sm:$0x1] %vm813, 0.0
      %846 = vst.msk [vmem:[#allocation2 + $0xe9] sm:$0x1] %vm813, 0.0
      %847 = vst.msk [vmem:[#allocation2 + $0xf9] sm:$0x1] %vm813, 0.0
      %848 = vst.msk [vmem:[#allocation2 + $0x109] sm:$0x1] %vm813, 0.0
      %849 = vst.msk [vmem:[#allocation2 + $0x119] sm:$0x1] %vm813, 0.0
      %850 = vst.msk [vmem:[#allocation4] sm:$0xff] %vm806, 0.0
      %851 = vst.msk [vmem:[#allocation4 + $0x8] sm:$0x3] %vm808, 0.0
      %s852 = scalar_lea.vmem [#allocation4], 144
      %853 = vst.msk [vmem:[%s852] sm:$0xff] %vm806, 0.0
      %854 = vst.msk [vmem:[%s852 + $0x8] sm:$0x3] %vm808, 0.0
      %855 = vst.msk [vmem:[#allocation4] sm:$0x1] %vm813, 0.0
      %856 = vst.msk [vmem:[#allocation4 + $0x10] sm:$0x1] %vm813, 0.0
      %857 = vst.msk [vmem:[#allocation4 + $0x20] sm:$0x1] %vm813, 0.0
      %858 = vst.msk [vmem:[#allocation4 + $0x30] sm:$0x1] %vm813, 0.0
      %859 = vst.msk [vmem:[#allocation4 + $0x40] sm:$0x1] %vm813, 0.0
      %860 = vst.msk [vmem:[#allocation4 + $0x50] sm:$0x1] %vm813, 0.0
      %861 = vst.msk [vmem:[#allocation4 + $0x60] sm:$0x1] %vm813, 0.0
      %862 = vst.msk [vmem:[#allocation4 + $0x70] sm:$0x1] %vm813, 0.0
      %863 = vst.msk [vmem:[#allocation4 + $0x80] sm:$0x1] %vm813, 0.0
      %864 = vst.msk [vmem:[#allocation4 + $0x90] sm:$0x1] %vm813, 0.0
      %865 = vst.msk [vmem:[#allocation4 + $0x9] sm:$0x1] %vm813, 0.0
      %866 = vst.msk [vmem:[#allocation4 + $0x19] sm:$0x1] %vm813, 0.0
      %867 = vst.msk [vmem:[#allocation4 + $0x29] sm:$0x1] %vm813, 0.0
      %868 = vst.msk [vmem:[#allocation4 + $0x39] sm:$0x1] %vm813, 0.0
      %869 = vst.msk [vmem:[#allocation4 + $0x49] sm:$0x1] %vm813, 0.0
      %870 = vst.msk [vmem:[#allocation4 + $0x59] sm:$0x1] %vm813, 0.0
      %871 = vst.msk [vmem:[#allocation4 + $0x69] sm:$0x1] %vm813, 0.0
      %872 = vst.msk [vmem:[#allocation4 + $0x79] sm:$0x1] %vm813, 0.0
      %873 = vst.msk [vmem:[#allocation4 + $0x89] sm:$0x1] %vm813, 0.0
      %874 = vst.msk [vmem:[#allocation4 + $0x99] sm:$0x1] %vm813, 0.0
      %s875 = scalar_lea.vmem [#allocation2], 16
      %vm876 = vcmask 261120
      %877 = vst.msk [vmem:[%s875 + $0x1] sm:$0xff] %vm876, %v790
      %878 = vst.msk [vmem:[%s875 + $0x11] sm:$0xff] %vm876, %v791
      %879 = vst.msk [vmem:[%s875 + $0x21] sm:$0xff] %vm876, %v792
      %880 = vst.msk [vmem:[%s875 + $0x31] sm:$0xff] %vm876, %v793
      %881 = vst.msk [vmem:[%s875 + $0x41] sm:$0xff] %vm876, %v794
      %882 = vst.msk [vmem:[%s875 + $0x51] sm:$0xff] %vm876, %v795
      %883 = vst.msk [vmem:[%s875 + $0x61] sm:$0xff] %vm876, %v796
      %884 = vst.msk [vmem:[%s875 + $0x71] sm:$0xff] %vm876, %v797
      %885 = vst.msk [vmem:[%s875 + $0x81] sm:$0xff] %vm876, %v798
      %886 = vst.msk [vmem:[%s875 + $0x91] sm:$0xff] %vm876, %v799
      %887 = vst.msk [vmem:[%s875 + $0xa1] sm:$0xff] %vm876, %v800
      %888 = vst.msk [vmem:[%s875 + $0xb1] sm:$0xff] %vm876, %v801
      %889 = vst.msk [vmem:[%s875 + $0xc1] sm:$0xff] %vm876, %v802
      %890 = vst.msk [vmem:[%s875 + $0xd1] sm:$0xff] %vm876, %v803
      %891 = vst.msk [vmem:[%s875 + $0xe1] sm:$0xff] %vm876, %v804
      %892 = vst.msk [vmem:[%s875 + $0xf1] sm:$0xff] %vm876, %v805
      %909 = vrot.lane.b32.xlu0 %v790, 96
      %v910 = vpop.permute.xlu0 %909
      %911 = vrot.lane.b32.xlu0 %v791, 96
      %v912 = vpop.permute.xlu0 %911
      %913 = vrot.lane.b32.xlu0 %v792, 96
      %v914 = vpop.permute.xlu0 %913
      %915 = vrot.lane.b32.xlu0 %v793, 96
      %v916 = vpop.permute.xlu0 %915
      %917 = vrot.lane.b32.xlu0 %v794, 96
      %v918 = vpop.permute.xlu0 %917
      %919 = vrot.lane.b32.xlu0 %v795, 96
      %v920 = vpop.permute.xlu0 %919
      %921 = vrot.lane.b32.xlu0 %v796, 96
      %v922 = vpop.permute.xlu0 %921
      %923 = vrot.lane.b32.xlu0 %v797, 96
      %v924 = vpop.permute.xlu0 %923
      %925 = vrot.lane.b32.xlu0 %v798, 96
      %v926 = vpop.permute.xlu0 %925
      %927 = vrot.lane.b32.xlu0 %v799, 96
      %v928 = vpop.permute.xlu0 %927
      %929 = vrot.lane.b32.xlu0 %v800, 96
      %v930 = vpop.permute.xlu0 %929
      %931 = vrot.lane.b32.xlu0 %v801, 96
      %v932 = vpop.permute.xlu0 %931
      %933 = vrot.lane.b32.xlu0 %v802, 96
      %v934 = vpop.permute.xlu0 %933
      %935 = vrot.lane.b32.xlu0 %v803, 96
      %v936 = vpop.permute.xlu0 %935
      %937 = vrot.lane.b32.xlu0 %v804, 96
      %v938 = vpop.permute.xlu0 %937
      %939 = vrot.lane.b32.xlu0 %v805, 96
      %v940 = vpop.permute.xlu0 %939
      %vm957 = vcmask 523520
      %958 = vst.msk [vmem:[%s875 + $0x1] sm:$0xff] %vm957, %v910
      %959 = vst.msk [vmem:[%s875 + $0x11] sm:$0xff] %vm957, %v912
      %960 = vst.msk [vmem:[%s875 + $0x21] sm:$0xff] %vm957, %v914
      %961 = vst.msk [vmem:[%s875 + $0x31] sm:$0xff] %vm957, %v916
      %962 = vst.msk [vmem:[%s875 + $0x41] sm:$0xff] %vm957, %v918
      %963 = vst.msk [vmem:[%s875 + $0x51] sm:$0xff] %vm957, %v920
      %964 = vst.msk [vmem:[%s875 + $0x61] sm:$0xff] %vm957, %v922
      %965 = vst.msk [vmem:[%s875 + $0x71] sm:$0xff] %vm957, %v924
      %966 = vst.msk [vmem:[%s875 + $0x81] sm:$0xff] %vm957, %v926
      %967 = vst.msk [vmem:[%s875 + $0x91] sm:$0xff] %vm957, %v928
      %968 = vst.msk [vmem:[%s875 + $0xa1] sm:$0xff] %vm957, %v930
      %969 = vst.msk [vmem:[%s875 + $0xb1] sm:$0xff] %vm957, %v932
      %970 = vst.msk [vmem:[%s875 + $0xc1] sm:$0xff] %vm957, %v934
      %971 = vst.msk [vmem:[%s875 + $0xd1] sm:$0xff] %vm957, %v936
      %972 = vst.msk [vmem:[%s875 + $0xe1] sm:$0xff] %vm957, %v938
      %973 = vst.msk [vmem:[%s875 + $0xf1] sm:$0xff] %vm957, %v940
      %v974 = vld [vmem:[#allocation2] sm:$0xff]
      %v975 = vld [vmem:[#allocation2 + $0x10] sm:$0xff]
      %v976 = vld [vmem:[#allocation2 + $0x20] sm:$0xff]
      %v977 = vld [vmem:[#allocation2 + $0x30] sm:$0xff]
      %v978 = vld [vmem:[#allocation2 + $0x40] sm:$0xff]
      %v979 = vld [vmem:[#allocation2 + $0x50] sm:$0xff]
      %v980 = vld [vmem:[#allocation2 + $0x60] sm:$0xff]
      %v981 = vld [vmem:[#allocation2 + $0x70] sm:$0xff]
      %v982 = vld [vmem:[#allocation2 + $0x80] sm:$0xff]
      %v983 = vld [vmem:[#allocation2 + $0x90] sm:$0xff]
      %v984 = vld [vmem:[#allocation2 + $0xa0] sm:$0xff]
      %v985 = vld [vmem:[#allocation2 + $0xb0] sm:$0xff]
      %v986 = vld [vmem:[#allocation2 + $0xc0] sm:$0xff]
      %v987 = vld [vmem:[#allocation2 + $0xd0] sm:$0xff]
      %v988 = vld [vmem:[#allocation2 + $0xe0] sm:$0xff]
      %v989 = vld [vmem:[#allocation2 + $0xf0] sm:$0xff]
      %1006 = vrot.lane.b32.xlu0 %v974, 96
      %v1007 = vpop.permute.xlu0 %1006
      %1008 = vrot.lane.b32.xlu0 %v975, 96
      %v1009 = vpop.permute.xlu0 %1008
      %1010 = vrot.lane.b32.xlu0 %v976, 96
      %v1011 = vpop.permute.xlu0 %1010
      %1012 = vrot.lane.b32.xlu0 %v977, 96
      %v1013 = vpop.permute.xlu0 %1012
      %1014 = vrot.lane.b32.xlu0 %v978, 96
      %v1015 = vpop.permute.xlu0 %1014
      %1016 = vrot.lane.b32.xlu0 %v979, 96
      %v1017 = vpop.permute.xlu0 %1016
      %1018 = vrot.lane.b32.xlu0 %v980, 96
      %v1019 = vpop.permute.xlu0 %1018
      %1020 = vrot.lane.b32.xlu0 %v981, 96
      %v1021 = vpop.permute.xlu0 %1020
      %1022 = vrot.lane.b32.xlu0 %v982, 96
      %v1023 = vpop.permute.xlu0 %1022
      %1024 = vrot.lane.b32.xlu0 %v983, 96
      %v1025 = vpop.permute.xlu0 %1024
      %1026 = vrot.lane.b32.xlu0 %v984, 96
      %v1027 = vpop.permute.xlu0 %1026
      %1028 = vrot.lane.b32.xlu0 %v985, 96
      %v1029 = vpop.permute.xlu0 %1028
      %1030 = vrot.lane.b32.xlu0 %v986, 96
      %v1031 = vpop.permute.xlu0 %1030
      %1032 = vrot.lane.b32.xlu0 %v987, 96
      %v1033 = vpop.permute.xlu0 %1032
      %1034 = vrot.lane.b32.xlu0 %v988, 96
      %v1035 = vpop.permute.xlu0 %1034
      %1036 = vrot.lane.b32.xlu0 %v989, 96
      %v1037 = vpop.permute.xlu0 %1036
      %1054 = vst.msk [vmem:[#allocation3] sm:$0xff] %vm876, %v1007
      %1055 = vst.msk [vmem:[#allocation3 + $0x18] sm:$0xff] %vm876, %v1009
      %1056 = vst.msk [vmem:[#allocation3 + $0x30] sm:$0xff] %vm876, %v1011
      %1057 = vst.msk [vmem:[#allocation3 + $0x48] sm:$0xff] %vm876, %v1013
      %1058 = vst.msk [vmem:[#allocation3 + $0x60] sm:$0xff] %vm876, %v1015
      %1059 = vst.msk [vmem:[#allocation3 + $0x78] sm:$0xff] %vm876, %v1017
      %1060 = vst.msk [vmem:[#allocation3 + $0x90] sm:$0xff] %vm876, %v1019
      %1061 = vst.msk [vmem:[#allocation3 + $0xa8] sm:$0xff] %vm876, %v1021
      %1062 = vst.msk [vmem:[#allocation3 + $0xc0] sm:$0xff] %vm876, %v1023
      %1063 = vst.msk [vmem:[#allocation3 + $0xd8] sm:$0xff] %vm876, %v1025
      %1064 = vst.msk [vmem:[#allocation3 + $0xf0] sm:$0xff] %vm876, %v1027
      %1065 = vst.msk [vmem:[#allocation3 + $0x108] sm:$0xff] %vm876, %v1029
      %1066 = vst.msk [vmem:[#allocation3 + $0x120] sm:$0xff] %vm876, %v1031
      %1067 = vst.msk [vmem:[#allocation3 + $0x138] sm:$0xff] %vm876, %v1033
      %1068 = vst.msk [vmem:[#allocation3 + $0x150] sm:$0xff] %vm876, %v1035
      %1069 = vst.msk [vmem:[#allocation3 + $0x168] sm:$0xff] %vm876, %v1037
      %v1070 = vld [vmem:[#allocation2 + $0x1] sm:$0xff]
      %v1071 = vld [vmem:[#allocation2 + $0x11] sm:$0xff]
      %v1072 = vld [vmem:[#allocation2 + $0x21] sm:$0xff]
      %v1073 = vld [vmem:[#allocation2 + $0x31] sm:$0xff]
      %v1074 = vld [vmem:[#allocation2 + $0x41] sm:$0xff]
      %v1075 = vld [vmem:[#allocation2 + $0x51] sm:$0xff]
      %v1076 = vld [vmem:[#allocation2 + $0x61] sm:$0xff]
      %v1077 = vld [vmem:[#allocation2 + $0x71] sm:$0xff]
      %v1078 = vld [vmem:[#allocation2 + $0x81] sm:$0xff]
      %v1079 = vld [vmem:[#allocation2 + $0x91] sm:$0xff]
      %v1080 = vld [vmem:[#allocation2 + $0xa1] sm:$0xff]
      %v1081 = vld [vmem:[#allocation2 + $0xb1] sm:$0xff]
      %v1082 = vld [vmem:[#allocation2 + $0xc1] sm:$0xff]
      %v1083 = vld [vmem:[#allocation2 + $0xd1] sm:$0xff]
      %v1084 = vld [vmem:[#allocation2 + $0xe1] sm:$0xff]
      %v1085 = vld [vmem:[#allocation2 + $0xf1] sm:$0xff]
      %1102 = vrot.lane.b32.xlu0 %v1070, 32
      %v1103 = vpop.permute.xlu0 %1102
      %1104 = vrot.lane.b32.xlu0 %v1071, 32
      %v1105 = vpop.permute.xlu0 %1104
      %1106 = vrot.lane.b32.xlu0 %v1072, 32
      %v1107 = vpop.permute.xlu0 %1106
      %1108 = vrot.lane.b32.xlu0 %v1073, 32
      %v1109 = vpop.permute.xlu0 %1108
      %1110 = vrot.lane.b32.xlu0 %v1074, 32
      %v1111 = vpop.permute.xlu0 %1110
      %1112 = vrot.lane.b32.xlu0 %v1075, 32
      %v1113 = vpop.permute.xlu0 %1112
      %1114 = vrot.lane.b32.xlu0 %v1076, 32
      %v1115 = vpop.permute.xlu0 %1114
      %1116 = vrot.lane.b32.xlu0 %v1077, 32
      %v1117 = vpop.permute.xlu0 %1116
      %1118 = vrot.lane.b32.xlu0 %v1078, 32
      %v1119 = vpop.permute.xlu0 %1118
      %1120 = vrot.lane.b32.xlu0 %v1079, 32
      %v1121 = vpop.permute.xlu0 %1120
      %1122 = vrot.lane.b32.xlu0 %v1080, 32
      %v1123 = vpop.permute.xlu0 %1122
      %1124 = vrot.lane.b32.xlu0 %v1081, 32
      %v1125 = vpop.permute.xlu0 %1124
      %1126 = vrot.lane.b32.xlu0 %v1082, 32
      %v1127 = vpop.permute.xlu0 %1126
      %1128 = vrot.lane.b32.xlu0 %v1083, 32
      %v1129 = vpop.permute.xlu0 %1128
      %1130 = vrot.lane.b32.xlu0 %v1084, 32
      %v1131 = vpop.permute.xlu0 %1130
      %1132 = vrot.lane.b32.xlu0 %v1085, 32
      %v1133 = vpop.permute.xlu0 %1132
      %1150 = vst.msk [vmem:[#allocation3] sm:$0xff] %vm957, %v1103
      %1151 = vst.msk [vmem:[#allocation3 + $0x18] sm:$0xff] %vm957, %v1105
      %1152 = vst.msk [vmem:[#allocation3 + $0x30] sm:$0xff] %vm957, %v1107
      %1153 = vst.msk [vmem:[#allocation3 + $0x48] sm:$0xff] %vm957, %v1109
      %1154 = vst.msk [vmem:[#allocation3 + $0x60] sm:$0xff] %vm957, %v1111
      %1155 = vst.msk [vmem:[#allocation3 + $0x78] sm:$0xff] %vm957, %v1113
      %1156 = vst.msk [vmem:[#allocation3 + $0x90] sm:$0xff] %vm957, %v1115
      %1157 = vst.msk [vmem:[#allocation3 + $0xa8] sm:$0xff] %vm957, %v1117
      %1158 = vst.msk [vmem:[#allocation3 + $0xc0] sm:$0xff] %vm957, %v1119
      %1159 = vst.msk [vmem:[#allocation3 + $0xd8] sm:$0xff] %vm957, %v1121
      %1160 = vst.msk [vmem:[#allocation3 + $0xf0] sm:$0xff] %vm957, %v1123
      %1161 = vst.msk [vmem:[#allocation3 + $0x108] sm:$0xff] %vm957, %v1125
      %1162 = vst.msk [vmem:[#allocation3 + $0x120] sm:$0xff] %vm957, %v1127
      %1163 = vst.msk [vmem:[#allocation3 + $0x138] sm:$0xff] %vm957, %v1129
      %1164 = vst.msk [vmem:[#allocation3 + $0x150] sm:$0xff] %vm957, %v1131
      %1165 = vst.msk [vmem:[#allocation3 + $0x168] sm:$0xff] %vm957, %v1133
      %v1166 = vld [vmem:[#allocation2 + $0x1] sm:$0xff]
      %v1167 = vld [vmem:[#allocation2 + $0x11] sm:$0xff]
      %v1168 = vld [vmem:[#allocation2 + $0x21] sm:$0xff]
      %v1169 = vld [vmem:[#allocation2 + $0x31] sm:$0xff]
      %v1170 = vld [vmem:[#allocation2 + $0x41] sm:$0xff]
      %v1171 = vld [vmem:[#allocation2 + $0x51] sm:$0xff]
      %v1172 = vld [vmem:[#allocation2 + $0x61] sm:$0xff]
      %v1173 = vld [vmem:[#allocation2 + $0x71] sm:$0xff]
      %v1174 = vld [vmem:[#allocation2 + $0x81] sm:$0xff]
      %v1175 = vld [vmem:[#allocation2 + $0x91] sm:$0xff]
      %v1176 = vld [vmem:[#allocation2 + $0xa1] sm:$0xff]
      %v1177 = vld [vmem:[#allocation2 + $0xb1] sm:$0xff]
      %v1178 = vld [vmem:[#allocation2 + $0xc1] sm:$0xff]
      %v1179 = vld [vmem:[#allocation2 + $0xd1] sm:$0xff]
      %v1180 = vld [vmem:[#allocation2 + $0xe1] sm:$0xff]
      %v1181 = vld [vmem:[#allocation2 + $0xf1] sm:$0xff]
      %1198 = vrot.lane.b32.xlu0 %v1166, 32
      %v1199 = vpop.permute.xlu0 %1198
      %1200 = vrot.lane.b32.xlu0 %v1167, 32
      %v1201 = vpop.permute.xlu0 %1200
      %1202 = vrot.lane.b32.xlu0 %v1168, 32
      %v1203 = vpop.permute.xlu0 %1202
      %1204 = vrot.lane.b32.xlu0 %v1169, 32
      %v1205 = vpop.permute.xlu0 %1204
      %1206 = vrot.lane.b32.xlu0 %v1170, 32
      %v1207 = vpop.permute.xlu0 %1206
      %1208 = vrot.lane.b32.xlu0 %v1171, 32
      %v1209 = vpop.permute.xlu0 %1208
      %1210 = vrot.lane.b32.xlu0 %v1172, 32
      %v1211 = vpop.permute.xlu0 %1210
      %1212 = vrot.lane.b32.xlu0 %v1173, 32
      %v1213 = vpop.permute.xlu0 %1212
      %1214 = vrot.lane.b32.xlu0 %v1174, 32
      %v1215 = vpop.permute.xlu0 %1214
      %1216 = vrot.lane.b32.xlu0 %v1175, 32
      %v1217 = vpop.permute.xlu0 %1216
      %1218 = vrot.lane.b32.xlu0 %v1176, 32
      %v1219 = vpop.permute.xlu0 %1218
      %1220 = vrot.lane.b32.xlu0 %v1177, 32
      %v1221 = vpop.permute.xlu0 %1220
      %1222 = vrot.lane.b32.xlu0 %v1178, 32
      %v1223 = vpop.permute.xlu0 %1222
      %1224 = vrot.lane.b32.xlu0 %v1179, 32
      %v1225 = vpop.permute.xlu0 %1224
      %1226 = vrot.lane.b32.xlu0 %v1180, 32
      %v1227 = vpop.permute.xlu0 %1226
      %1228 = vrot.lane.b32.xlu0 %v1181, 32
      %v1229 = vpop.permute.xlu0 %1228
      %vm1246 = vcmask 785920
      %1247 = vst.msk [vmem:[#allocation3] sm:$0xff] %vm1246, %v1199
      %1248 = vst.msk [vmem:[#allocation3 + $0x18] sm:$0xff] %vm1246, %v1201
      %1249 = vst.msk [vmem:[#allocation3 + $0x30] sm:$0xff] %vm1246, %v1203
      %1250 = vst.msk [vmem:[#allocation3 + $0x48] sm:$0xff] %vm1246, %v1205
      %1251 = vst.msk [vmem:[#allocation3 + $0x60] sm:$0xff] %vm1246, %v1207
      %1252 = vst.msk [vmem:[#allocation3 + $0x78] sm:$0xff] %vm1246, %v1209
      %1253 = vst.msk [vmem:[#allocation3 + $0x90] sm:$0xff] %vm1246, %v1211
      %1254 = vst.msk [vmem:[#allocation3 + $0xa8] sm:$0xff] %vm1246, %v1213
      %1255 = vst.msk [vmem:[#allocation3 + $0xc0] sm:$0xff] %vm1246, %v1215
      %1256 = vst.msk [vmem:[#allocation3 + $0xd8] sm:$0xff] %vm1246, %v1217
      %1257 = vst.msk [vmem:[#allocation3 + $0xf0] sm:$0xff] %vm1246, %v1219
      %1258 = vst.msk [vmem:[#allocation3 + $0x108] sm:$0xff] %vm1246, %v1221
      %1259 = vst.msk [vmem:[#allocation3 + $0x120] sm:$0xff] %vm1246, %v1223
      %1260 = vst.msk [vmem:[#allocation3 + $0x138] sm:$0xff] %vm1246, %v1225
      %1261 = vst.msk [vmem:[#allocation3 + $0x150] sm:$0xff] %vm1246, %v1227
      %1262 = vst.msk [vmem:[#allocation3 + $0x168] sm:$0xff] %vm1246, %v1229
      %v1263 = vld [vmem:[#allocation2 + $0x2] sm:$0xff]
      %v1264 = vld [vmem:[#allocation2 + $0x12] sm:$0xff]
      %v1265 = vld [vmem:[#allocation2 + $0x22] sm:$0xff]
      %v1266 = vld [vmem:[#allocation2 + $0x32] sm:$0xff]
      %v1267 = vld [vmem:[#allocation2 + $0x42] sm:$0xff]
      %v1268 = vld [vmem:[#allocation2 + $0x52] sm:$0xff]
      %v1269 = vld [vmem:[#allocation2 + $0x62] sm:$0xff]
      %v1270 = vld [vmem:[#allocation2 + $0x72] sm:$0xff]
      %v1271 = vld [vmem:[#allocation2 + $0x82] sm:$0xff]
      %v1272 = vld [vmem:[#allocation2 + $0x92] sm:$0xff]
      %v1273 = vld [vmem:[#allocation2 + $0xa2] sm:$0xff]
      %v1274 = vld [vmem:[#allocation2 + $0xb2] sm:$0xff]
      %v1275 = vld [vmem:[#allocation2 + $0xc2] sm:$0xff]
      %v1276 = vld [vmem:[#allocation2 + $0xd2] sm:$0xff]
      %v1277 = vld [vmem:[#allocation2 + $0xe2] sm:$0xff]
      %v1278 = vld [vmem:[#allocation2 + $0xf2] sm:$0xff]
      %1295 = vrot.lane.b32.xlu0 %v1263, 96
      %v1296 = vpop.permute.xlu0 %1295
      %1297 = vrot.lane.b32.xlu0 %v1264, 96
      %v1298 = vpop.permute.xlu0 %1297
      %1299 = vrot.lane.b32.xlu0 %v1265, 96
      %v1300 = vpop.permute.xlu0 %1299
      %1301 = vrot.lane.b32.xlu0 %v1266, 96
      %v1302 = vpop.permute.xlu0 %1301
      %1303 = vrot.lane.b32.xlu0 %v1267, 96
      %v1304 = vpop.permute.xlu0 %1303
      %1305 = vrot.lane.b32.xlu0 %v1268, 96
      %v1306 = vpop.permute.xlu0 %1305
      %1307 = vrot.lane.b32.xlu0 %v1269, 96
      %v1308 = vpop.permute.xlu0 %1307
      %1309 = vrot.lane.b32.xlu0 %v1270, 96
      %v1310 = vpop.permute.xlu0 %1309
      %1311 = vrot.lane.b32.xlu0 %v1271, 96
      %v1312 = vpop.permute.xlu0 %1311
      %1313 = vrot.lane.b32.xlu0 %v1272, 96
      %v1314 = vpop.permute.xlu0 %1313
      %1315 = vrot.lane.b32.xlu0 %v1273, 96
      %v1316 = vpop.permute.xlu0 %1315
      %1317 = vrot.lane.b32.xlu0 %v1274, 96
      %v1318 = vpop.permute.xlu0 %1317
      %1319 = vrot.lane.b32.xlu0 %v1275, 96
      %v1320 = vpop.permute.xlu0 %1319
      %1321 = vrot.lane.b32.xlu0 %v1276, 96
      %v1322 = vpop.permute.xlu0 %1321
      %1323 = vrot.lane.b32.xlu0 %v1277, 96
      %v1324 = vpop.permute.xlu0 %1323
      %1325 = vrot.lane.b32.xlu0 %v1278, 96
      %v1326 = vpop.permute.xlu0 %1325
      %vm1343 = vcmask 1048320
      %1344 = vst.msk [vmem:[#allocation3] sm:$0xff] %vm1343, %v1296
      %1345 = vst.msk [vmem:[#allocation3 + $0x18] sm:$0xff] %vm1343, %v1298
      %1346 = vst.msk [vmem:[#allocation3 + $0x30] sm:$0xff] %vm1343, %v1300
      %1347 = vst.msk [vmem:[#allocation3 + $0x48] sm:$0xff] %vm1343, %v1302
      %1348 = vst.msk [vmem:[#allocation3 + $0x60] sm:$0xff] %vm1343, %v1304
      %1349 = vst.msk [vmem:[#allocation3 + $0x78] sm:$0xff] %vm1343, %v1306
      %1350 = vst.msk [vmem:[#allocation3 + $0x90] sm:$0xff] %vm1343, %v1308
      %1351 = vst.msk [vmem:[#allocation3 + $0xa8] sm:$0xff] %vm1343, %v1310
      %1352 = vst.msk [vmem:[#allocation3 + $0xc0] sm:$0xff] %vm1343, %v1312
      %1353 = vst.msk [vmem:[#allocation3 + $0xd8] sm:$0xff] %vm1343, %v1314
      %1354 = vst.msk [vmem:[#allocation3 + $0xf0] sm:$0xff] %vm1343, %v1316
      %1355 = vst.msk [vmem:[#allocation3 + $0x108] sm:$0xff] %vm1343, %v1318
      %1356 = vst.msk [vmem:[#allocation3 + $0x120] sm:$0xff] %vm1343, %v1320
      %1357 = vst.msk [vmem:[#allocation3 + $0x138] sm:$0xff] %vm1343, %v1322
      %1358 = vst.msk [vmem:[#allocation3 + $0x150] sm:$0xff] %vm1343, %v1324
      %1359 = vst.msk [vmem:[#allocation3 + $0x168] sm:$0xff] %vm1343, %v1326
      %v1360 = vld [vmem:[%s875] sm:$0xff]
      %v1361 = vld [vmem:[%s875 + $0x10] sm:$0xff]
      %v1362 = vld [vmem:[%s875 + $0x20] sm:$0xff]
      %v1363 = vld [vmem:[%s875 + $0x30] sm:$0xff]
      %v1364 = vld [vmem:[%s875 + $0x40] sm:$0xff]
      %v1365 = vld [vmem:[%s875 + $0x50] sm:$0xff]
      %v1366 = vld [vmem:[%s875 + $0x60] sm:$0xff]
      %v1367 = vld [vmem:[%s875 + $0x70] sm:$0xff]
      %v1368 = vld [vmem:[%s875 + $0x80] sm:$0xff]
      %v1369 = vld [vmem:[%s875 + $0x90] sm:$0xff]
      %v1370 = vld [vmem:[%s875 + $0xa0] sm:$0xff]
      %v1371 = vld [vmem:[%s875 + $0xb0] sm:$0xff]
      %v1372 = vld [vmem:[%s875 + $0xc0] sm:$0xff]
      %v1373 = vld [vmem:[%s875 + $0xd0] sm:$0xff]
      %v1374 = vld [vmem:[%s875 + $0xe0] sm:$0xff]
      %v1375 = vld [vmem:[%s875 + $0xf0] sm:$0xff]
      %1392 = vrot.lane.b32.xlu0 %v1360, 96
      %v1393 = vpop.permute.xlu0 %1392
      %1394 = vrot.lane.b32.xlu0 %v1361, 96
      %v1395 = vpop.permute.xlu0 %1394
      %1396 = vrot.lane.b32.xlu0 %v1362, 96
      %v1397 = vpop.permute.xlu0 %1396
      %1398 = vrot.lane.b32.xlu0 %v1363, 96
      %v1399 = vpop.permute.xlu0 %1398
      %1400 = vrot.lane.b32.xlu0 %v1364, 96
      %v1401 = vpop.permute.xlu0 %1400
      %1402 = vrot.lane.b32.xlu0 %v1365, 96
      %v1403 = vpop.permute.xlu0 %1402
      %1404 = vrot.lane.b32.xlu0 %v1366, 96
      %v1405 = vpop.permute.xlu0 %1404
      %1406 = vrot.lane.b32.xlu0 %v1367, 96
      %v1407 = vpop.permute.xlu0 %1406
      %1408 = vrot.lane.b32.xlu0 %v1368, 96
      %v1409 = vpop.permute.xlu0 %1408
      %1410 = vrot.lane.b32.xlu0 %v1369, 96
      %v1411 = vpop.permute.xlu0 %1410
      %1412 = vrot.lane.b32.xlu0 %v1370, 96
      %v1413 = vpop.permute.xlu0 %1412
      %1414 = vrot.lane.b32.xlu0 %v1371, 96
      %v1415 = vpop.permute.xlu0 %1414
      %1416 = vrot.lane.b32.xlu0 %v1372, 96
      %v1417 = vpop.permute.xlu0 %1416
      %1418 = vrot.lane.b32.xlu0 %v1373, 96
      %v1419 = vpop.permute.xlu0 %1418
      %1420 = vrot.lane.b32.xlu0 %v1374, 96
      %v1421 = vpop.permute.xlu0 %1420
      %1422 = vrot.lane.b32.xlu0 %v1375, 96
      %v1423 = vpop.permute.xlu0 %1422
      %1440 = vst.msk [vmem:[#allocation3 + $0x8] sm:$0xff] %vm876, %v1393
      %1441 = vst.msk [vmem:[#allocation3 + $0x20] sm:$0xff] %vm876, %v1395
      %1442 = vst.msk [vmem:[#allocation3 + $0x38] sm:$0xff] %vm876, %v1397
      %1443 = vst.msk [vmem:[#allocation3 + $0x50] sm:$0xff] %vm876, %v1399
      %1444 = vst.msk [vmem:[#allocation3 + $0x68] sm:$0xff] %vm876, %v1401
      %1445 = vst.msk [vmem:[#allocation3 + $0x80] sm:$0xff] %vm876, %v1403
      %1446 = vst.msk [vmem:[#allocation3 + $0x98] sm:$0xff] %vm876, %v1405
      %1447 = vst.msk [vmem:[#allocation3 + $0xb0] sm:$0xff] %vm876, %v1407
      %1448 = vst.msk [vmem:[#allocation3 + $0xc8] sm:$0xff] %vm876, %v1409
      %1449 = vst.msk [vmem:[#allocation3 + $0xe0] sm:$0xff] %vm876, %v1411
      %1450 = vst.msk [vmem:[#allocation3 + $0xf8] sm:$0xff] %vm876, %v1413
      %1451 = vst.msk [vmem:[#allocation3 + $0x110] sm:$0xff] %vm876, %v1415
      %1452 = vst.msk [vmem:[#allocation3 + $0x128] sm:$0xff] %vm876, %v1417
      %1453 = vst.msk [vmem:[#allocation3 + $0x140] sm:$0xff] %vm876, %v1419
      %1454 = vst.msk [vmem:[#allocation3 + $0x158] sm:$0xff] %vm876, %v1421
      %1455 = vst.msk [vmem:[#allocation3 + $0x170] sm:$0xff] %vm876, %v1423
      %v1456 = vld [vmem:[%s875 + $0x1] sm:$0xff]
      %v1457 = vld [vmem:[%s875 + $0x11] sm:$0xff]
      %v1458 = vld [vmem:[%s875 + $0x21] sm:$0xff]
      %v1459 = vld [vmem:[%s875 + $0x31] sm:$0xff]
      %v1460 = vld [vmem:[%s875 + $0x41] sm:$0xff]
      %v1461 = vld [vmem:[%s875 + $0x51] sm:$0xff]
      %v1462 = vld [vmem:[%s875 + $0x61] sm:$0xff]
      %v1463 = vld [vmem:[%s875 + $0x71] sm:$0xff]
      %v1464 = vld [vmem:[%s875 + $0x81] sm:$0xff]
      %v1465 = vld [vmem:[%s875 + $0x91] sm:$0xff]
      %v1466 = vld [vmem:[%s875 + $0xa1] sm:$0xff]
      %v1467 = vld [vmem:[%s875 + $0xb1] sm:$0xff]
      %v1468 = vld [vmem:[%s875 + $0xc1] sm:$0xff]
      %v1469 = vld [vmem:[%s875 + $0xd1] sm:$0xff]
      %v1470 = vld [vmem:[%s875 + $0xe1] sm:$0xff]
      %v1471 = vld [vmem:[%s875 + $0xf1] sm:$0xff]
      %1488 = vrot.lane.b32.xlu0 %v1456, 32
      %v1489 = vpop.permute.xlu0 %1488
      %1490 = vrot.lane.b32.xlu0 %v1457, 32
      %v1491 = vpop.permute.xlu0 %1490
      %1492 = vrot.lane.b32.xlu0 %v1458, 32
      %v1493 = vpop.permute.xlu0 %1492
      %1494 = vrot.lane.b32.xlu0 %v1459, 32
      %v1495 = vpop.permute.xlu0 %1494
      %1496 = vrot.lane.b32.xlu0 %v1460, 32
      %v1497 = vpop.permute.xlu0 %1496
      %1498 = vrot.lane.b32.xlu0 %v1461, 32
      %v1499 = vpop.permute.xlu0 %1498
      %1500 = vrot.lane.b32.xlu0 %v1462, 32
      %v1501 = vpop.permute.xlu0 %1500
      %1502 = vrot.lane.b32.xlu0 %v1463, 32
      %v1503 = vpop.permute.xlu0 %1502
      %1504 = vrot.lane.b32.xlu0 %v1464, 32
      %v1505 = vpop.permute.xlu0 %1504
      %1506 = vrot.lane.b32.xlu0 %v1465, 32
      %v1507 = vpop.permute.xlu0 %1506
      %1508 = vrot.lane.b32.xlu0 %v1466, 32
      %v1509 = vpop.permute.xlu0 %1508
      %1510 = vrot.lane.b32.xlu0 %v1467, 32
      %v1511 = vpop.permute.xlu0 %1510
      %1512 = vrot.lane.b32.xlu0 %v1468, 32
      %v1513 = vpop.permute.xlu0 %1512
      %1514 = vrot.lane.b32.xlu0 %v1469, 32
      %v1515 = vpop.permute.xlu0 %1514
      %1516 = vrot.lane.b32.xlu0 %v1470, 32
      %v1517 = vpop.permute.xlu0 %1516
      %1518 = vrot.lane.b32.xlu0 %v1471, 32
      %v1519 = vpop.permute.xlu0 %1518
      %1536 = vst.msk [vmem:[#allocation3 + $0x8] sm:$0xff] %vm957, %v1489
      %1537 = vst.msk [vmem:[#allocation3 + $0x20] sm:$0xff] %vm957, %v1491
      %1538 = vst.msk [vmem:[#allocation3 + $0x38] sm:$0xff] %vm957, %v1493
      %1539 = vst.msk [vmem:[#allocation3 + $0x50] sm:$0xff] %vm957, %v1495
      %1540 = vst.msk [vmem:[#allocation3 + $0x68] sm:$0xff] %vm957, %v1497
      %1541 = vst.msk [vmem:[#allocation3 + $0x80] sm:$0xff] %vm957, %v1499
      %1542 = vst.msk [vmem:[#allocation3 + $0x98] sm:$0xff] %vm957, %v1501
      %1543 = vst.msk [vmem:[#allocation3 + $0xb0] sm:$0xff] %vm957, %v1503
      %1544 = vst.msk [vmem:[#allocation3 + $0xc8] sm:$0xff] %vm957, %v1505
      %1545 = vst.msk [vmem:[#allocation3 + $0xe0] sm:$0xff] %vm957, %v1507
      %1546 = vst.msk [vmem:[#allocation3 + $0xf8] sm:$0xff] %vm957, %v1509
      %1547 = vst.msk [vmem:[#allocation3 + $0x110] sm:$0xff] %vm957, %v1511
      %1548 = vst.msk [vmem:[#allocation3 + $0x128] sm:$0xff] %vm957, %v1513
      %1549 = vst.msk [vmem:[#allocation3 + $0x140] sm:$0xff] %vm957, %v1515
      %1550 = vst.msk [vmem:[#allocation3 + $0x158] sm:$0xff] %vm957, %v1517
      %1551 = vst.msk [vmem:[#allocation3 + $0x170] sm:$0xff] %vm957, %v1519
      %v1552 = vld [vmem:[%s875 + $0x1] sm:$0xff]
      %v1553 = vld [vmem:[%s875 + $0x11] sm:$0xff]
      %v1554 = vld [vmem:[%s875 + $0x21] sm:$0xff]
      %v1555 = vld [vmem:[%s875 + $0x31] sm:$0xff]
      %v1556 = vld [vmem:[%s875 + $0x41] sm:$0xff]
      %v1557 = vld [vmem:[%s875 + $0x51] sm:$0xff]
      %v1558 = vld [vmem:[%s875 + $0x61] sm:$0xff]
      %v1559 = vld [vmem:[%s875 + $0x71] sm:$0xff]
      %v1560 = vld [vmem:[%s875 + $0x81] sm:$0xff]
      %v1561 = vld [vmem:[%s875 + $0x91] sm:$0xff]
      %v1562 = vld [vmem:[%s875 + $0xa1] sm:$0xff]
      %v1563 = vld [vmem:[%s875 + $0xb1] sm:$0xff]
      %v1564 = vld [vmem:[%s875 + $0xc1] sm:$0xff]
      %v1565 = vld [vmem:[%s875 + $0xd1] sm:$0xff]
      %v1566 = vld [vmem:[%s875 + $0xe1] sm:$0xff]
      %v1567 = vld [vmem:[%s875 + $0xf1] sm:$0xff]
      %1584 = vrot.lane.b32.xlu0 %v1552, 32
      %v1585 = vpop.permute.xlu0 %1584
      %1586 = vrot.lane.b32.xlu0 %v1553, 32
      %v1587 = vpop.permute.xlu0 %1586
      %1588 = vrot.lane.b32.xlu0 %v1554, 32
      %v1589 = vpop.permute.xlu0 %1588
      %1590 = vrot.lane.b32.xlu0 %v1555, 32
      %v1591 = vpop.permute.xlu0 %1590
      %1592 = vrot.lane.b32.xlu0 %v1556, 32
      %v1593 = vpop.permute.xlu0 %1592
      %1594 = vrot.lane.b32.xlu0 %v1557, 32
      %v1595 = vpop.permute.xlu0 %1594
      %1596 = vrot.lane.b32.xlu0 %v1558, 32
      %v1597 = vpop.permute.xlu0 %1596
      %1598 = vrot.lane.b32.xlu0 %v1559, 32
      %v1599 = vpop.permute.xlu0 %1598
      %1600 = vrot.lane.b32.xlu0 %v1560, 32
      %v1601 = vpop.permute.xlu0 %1600
      %1602 = vrot.lane.b32.xlu0 %v1561, 32
      %v1603 = vpop.permute.xlu0 %1602
      %1604 = vrot.lane.b32.xlu0 %v1562, 32
      %v1605 = vpop.permute.xlu0 %1604
      %1606 = vrot.lane.b32.xlu0 %v1563, 32
      %v1607 = vpop.permute.xlu0 %1606
      %1608 = vrot.lane.b32.xlu0 %v1564, 32
      %v1609 = vpop.permute.xlu0 %1608
      %1610 = vrot.lane.b32.xlu0 %v1565, 32
      %v1611 = vpop.permute.xlu0 %1610
      %1612 = vrot.lane.b32.xlu0 %v1566, 32
      %v1613 = vpop.permute.xlu0 %1612
      %1614 = vrot.lane.b32.xlu0 %v1567, 32
      %v1615 = vpop.permute.xlu0 %1614
      %1632 = vst.msk [vmem:[#allocation3 + $0x8] sm:$0xff] %vm1246, %v1585
      %1633 = vst.msk [vmem:[#allocation3 + $0x20] sm:$0xff] %vm1246, %v1587
      %1634 = vst.msk [vmem:[#allocation3 + $0x38] sm:$0xff] %vm1246, %v1589
      %1635 = vst.msk [vmem:[#allocation3 + $0x50] sm:$0xff] %vm1246, %v1591
      %1636 = vst.msk [vmem:[#allocation3 + $0x68] sm:$0xff] %vm1246, %v1593
      %1637 = vst.msk [vmem:[#allocation3 + $0x80] sm:$0xff] %vm1246, %v1595
      %1638 = vst.msk [vmem:[#allocation3 + $0x98] sm:$0xff] %vm1246, %v1597
      %1639 = vst.msk [vmem:[#allocation3 + $0xb0] sm:$0xff] %vm1246, %v1599
      %1640 = vst.msk [vmem:[#allocation3 + $0xc8] sm:$0xff] %vm1246, %v1601
      %1641 = vst.msk [vmem:[#allocation3 + $0xe0] sm:$0xff] %vm1246, %v1603
      %1642 = vst.msk [vmem:[#allocation3 + $0xf8] sm:$0xff] %vm1246, %v1605
      %1643 = vst.msk [vmem:[#allocation3 + $0x110] sm:$0xff] %vm1246, %v1607
      %1644 = vst.msk [vmem:[#allocation3 + $0x128] sm:$0xff] %vm1246, %v1609
      %1645 = vst.msk [vmem:[#allocation3 + $0x140] sm:$0xff] %vm1246, %v1611
      %1646 = vst.msk [vmem:[#allocation3 + $0x158] sm:$0xff] %vm1246, %v1613
      %1647 = vst.msk [vmem:[#allocation3 + $0x170] sm:$0xff] %vm1246, %v1615
      %v1648 = vld [vmem:[%s875 + $0x2] sm:$0xff]
      %v1649 = vld [vmem:[%s875 + $0x12] sm:$0xff]
      %v1650 = vld [vmem:[%s875 + $0x22] sm:$0xff]
      %v1651 = vld [vmem:[%s875 + $0x32] sm:$0xff]
      %v1652 = vld [vmem:[%s875 + $0x42] sm:$0xff]
      %v1653 = vld [vmem:[%s875 + $0x52] sm:$0xff]
      %v1654 = vld [vmem:[%s875 + $0x62] sm:$0xff]
      %v1655 = vld [vmem:[%s875 + $0x72] sm:$0xff]
      %v1656 = vld [vmem:[%s875 + $0x82] sm:$0xff]
      %v1657 = vld [vmem:[%s875 + $0x92] sm:$0xff]
      %v1658 = vld [vmem:[%s875 + $0xa2] sm:$0xff]
      %v1659 = vld [vmem:[%s875 + $0xb2] sm:$0xff]
      %v1660 = vld [vmem:[%s875 + $0xc2] sm:$0xff]
      %v1661 = vld [vmem:[%s875 + $0xd2] sm:$0xff]
      %v1662 = vld [vmem:[%s875 + $0xe2] sm:$0xff]
      %v1663 = vld [vmem:[%s875 + $0xf2] sm:$0xff]
      %1680 = vrot.lane.b32.xlu0 %v1648, 96
      %v1681 = vpop.permute.xlu0 %1680
      %1682 = vrot.lane.b32.xlu0 %v1649, 96
      %v1683 = vpop.permute.xlu0 %1682
      %1684 = vrot.lane.b32.xlu0 %v1650, 96
      %v1685 = vpop.permute.xlu0 %1684
      %1686 = vrot.lane.b32.xlu0 %v1651, 96
      %v1687 = vpop.permute.xlu0 %1686
      %1688 = vrot.lane.b32.xlu0 %v1652, 96
      %v1689 = vpop.permute.xlu0 %1688
      %1690 = vrot.lane.b32.xlu0 %v1653, 96
      %v1691 = vpop.permute.xlu0 %1690
      %1692 = vrot.lane.b32.xlu0 %v1654, 96
      %v1693 = vpop.permute.xlu0 %1692
      %1694 = vrot.lane.b32.xlu0 %v1655, 96
      %v1695 = vpop.permute.xlu0 %1694
      %1696 = vrot.lane.b32.xlu0 %v1656, 96
      %v1697 = vpop.permute.xlu0 %1696
      %1698 = vrot.lane.b32.xlu0 %v1657, 96
      %v1699 = vpop.permute.xlu0 %1698
      %1700 = vrot.lane.b32.xlu0 %v1658, 96
      %v1701 = vpop.permute.xlu0 %1700
      %1702 = vrot.lane.b32.xlu0 %v1659, 96
      %v1703 = vpop.permute.xlu0 %1702
      %1704 = vrot.lane.b32.xlu0 %v1660, 96
      %v1705 = vpop.permute.xlu0 %1704
      %1706 = vrot.lane.b32.xlu0 %v1661, 96
      %v1707 = vpop.permute.xlu0 %1706
      %1708 = vrot.lane.b32.xlu0 %v1662, 96
      %v1709 = vpop.permute.xlu0 %1708
      %1710 = vrot.lane.b32.xlu0 %v1663, 96
      %v1711 = vpop.permute.xlu0 %1710
      %1728 = vst.msk [vmem:[#allocation3 + $0x8] sm:$0xff] %vm1343, %v1681
      %1729 = vst.msk [vmem:[#allocation3 + $0x20] sm:$0xff] %vm1343, %v1683
      %1730 = vst.msk [vmem:[#allocation3 + $0x38] sm:$0xff] %vm1343, %v1685
      %1731 = vst.msk [vmem:[#allocation3 + $0x50] sm:$0xff] %vm1343, %v1687
      %1732 = vst.msk [vmem:[#allocation3 + $0x68] sm:$0xff] %vm1343, %v1689
      %1733 = vst.msk [vmem:[#allocation3 + $0x80] sm:$0xff] %vm1343, %v1691
      %1734 = vst.msk [vmem:[#allocation3 + $0x98] sm:$0xff] %vm1343, %v1693
      %1735 = vst.msk [vmem:[#allocation3 + $0xb0] sm:$0xff] %vm1343, %v1695
      %1736 = vst.msk [vmem:[#allocation3 + $0xc8] sm:$0xff] %vm1343, %v1697
      %1737 = vst.msk [vmem:[#allocation3 + $0xe0] sm:$0xff] %vm1343, %v1699
      %1738 = vst.msk [vmem:[#allocation3 + $0xf8] sm:$0xff] %vm1343, %v1701
      %1739 = vst.msk [vmem:[#allocation3 + $0x110] sm:$0xff] %vm1343, %v1703
      %1740 = vst.msk [vmem:[#allocation3 + $0x128] sm:$0xff] %vm1343, %v1705
      %1741 = vst.msk [vmem:[#allocation3 + $0x140] sm:$0xff] %vm1343, %v1707
      %1742 = vst.msk [vmem:[#allocation3 + $0x158] sm:$0xff] %vm1343, %v1709
      %1743 = vst.msk [vmem:[#allocation3 + $0x170] sm:$0xff] %vm1343, %v1711
      %s1744 = scalar_lea.vmem [#allocation2], 32
      %v1745 = vld [vmem:[%s1744] sm:$0xff]
      %v1746 = vld [vmem:[%s1744 + $0x10] sm:$0xff]
      %v1747 = vld [vmem:[%s1744 + $0x20] sm:$0xff]
      %v1748 = vld [vmem:[%s1744 + $0x30] sm:$0xff]
      %v1749 = vld [vmem:[%s1744 + $0x40] sm:$0xff]
      %v1750 = vld [vmem:[%s1744 + $0x50] sm:$0xff]
      %v1751 = vld [vmem:[%s1744 + $0x60] sm:$0xff]
      %v1752 = vld [vmem:[%s1744 + $0x70] sm:$0xff]
      %v1753 = vld [vmem:[%s1744 + $0x80] sm:$0xff]
      %v1754 = vld [vmem:[%s1744 + $0x90] sm:$0xff]
      %v1755 = vld [vmem:[%s1744 + $0xa0] sm:$0xff]
      %v1756 = vld [vmem:[%s1744 + $0xb0] sm:$0xff]
      %v1757 = vld [vmem:[%s1744 + $0xc0] sm:$0xff]
      %v1758 = vld [vmem:[%s1744 + $0xd0] sm:$0xff]
      %v1759 = vld [vmem:[%s1744 + $0xe0] sm:$0xff]
      %v1760 = vld [vmem:[%s1744 + $0xf0] sm:$0xff]
      %1777 = vrot.lane.b32.xlu0 %v1745, 96
      %v1778 = vpop.permute.xlu0 %1777
      %1779 = vrot.lane.b32.xlu0 %v1746, 96
      %v1780 = vpop.permute.xlu0 %1779
      %1781 = vrot.lane.b32.xlu0 %v1747, 96
      %v1782 = vpop.permute.xlu0 %1781
      %1783 = vrot.lane.b32.xlu0 %v1748, 96
      %v1784 = vpop.permute.xlu0 %1783
      %1785 = vrot.lane.b32.xlu0 %v1749, 96
      %v1786 = vpop.permute.xlu0 %1785
      %1787 = vrot.lane.b32.xlu0 %v1750, 96
      %v1788 = vpop.permute.xlu0 %1787
      %1789 = vrot.lane.b32.xlu0 %v1751, 96
      %v1790 = vpop.permute.xlu0 %1789
      %1791 = vrot.lane.b32.xlu0 %v1752, 96
      %v1792 = vpop.permute.xlu0 %1791
      %1793 = vrot.lane.b32.xlu0 %v1753, 96
      %v1794 = vpop.permute.xlu0 %1793
      %1795 = vrot.lane.b32.xlu0 %v1754, 96
      %v1796 = vpop.permute.xlu0 %1795
      %1797 = vrot.lane.b32.xlu0 %v1755, 96
      %v1798 = vpop.permute.xlu0 %1797
      %1799 = vrot.lane.b32.xlu0 %v1756, 96
      %v1800 = vpop.permute.xlu0 %1799
      %1801 = vrot.lane.b32.xlu0 %v1757, 96
      %v1802 = vpop.permute.xlu0 %1801
      %1803 = vrot.lane.b32.xlu0 %v1758, 96
      %v1804 = vpop.permute.xlu0 %1803
      %1805 = vrot.lane.b32.xlu0 %v1759, 96
      %v1806 = vpop.permute.xlu0 %1805
      %1807 = vrot.lane.b32.xlu0 %v1760, 96
      %v1808 = vpop.permute.xlu0 %1807
      %1825 = vst.msk [vmem:[#allocation3 + $0x10] sm:$0xff] %vm876, %v1778
      %1826 = vst.msk [vmem:[#allocation3 + $0x28] sm:$0xff] %vm876, %v1780
      %1827 = vst.msk [vmem:[#allocation3 + $0x40] sm:$0xff] %vm876, %v1782
      %1828 = vst.msk [vmem:[#allocation3 + $0x58] sm:$0xff] %vm876, %v1784
      %1829 = vst.msk [vmem:[#allocation3 + $0x70] sm:$0xff] %vm876, %v1786
      %1830 = vst.msk [vmem:[#allocation3 + $0x88] sm:$0xff] %vm876, %v1788
      %1831 = vst.msk [vmem:[#allocation3 + $0xa0] sm:$0xff] %vm876, %v1790
      %1832 = vst.msk [vmem:[#allocation3 + $0xb8] sm:$0xff] %vm876, %v1792
      %1833 = vst.msk [vmem:[#allocation3 + $0xd0] sm:$0xff] %vm876, %v1794
      %1834 = vst.msk [vmem:[#allocation3 + $0xe8] sm:$0xff] %vm876, %v1796
      %1835 = vst.msk [vmem:[#allocation3 + $0x100] sm:$0xff] %vm876, %v1798
      %1836 = vst.msk [vmem:[#allocation3 + $0x118] sm:$0xff] %vm876, %v1800
      %1837 = vst.msk [vmem:[#allocation3 + $0x130] sm:$0xff] %vm876, %v1802
      %1838 = vst.msk [vmem:[#allocation3 + $0x148] sm:$0xff] %vm876, %v1804
      %1839 = vst.msk [vmem:[#allocation3 + $0x160] sm:$0xff] %vm876, %v1806
      %1840 = vst.msk [vmem:[#allocation3 + $0x178] sm:$0xff] %vm876, %v1808
      %v1841 = vld [vmem:[%s1744 + $0x1] sm:$0xff]
      %v1842 = vld [vmem:[%s1744 + $0x11] sm:$0xff]
      %v1843 = vld [vmem:[%s1744 + $0x21] sm:$0xff]
      %v1844 = vld [vmem:[%s1744 + $0x31] sm:$0xff]
      %v1845 = vld [vmem:[%s1744 + $0x41] sm:$0xff]
      %v1846 = vld [vmem:[%s1744 + $0x51] sm:$0xff]
      %v1847 = vld [vmem:[%s1744 + $0x61] sm:$0xff]
      %v1848 = vld [vmem:[%s1744 + $0x71] sm:$0xff]
      %v1849 = vld [vmem:[%s1744 + $0x81] sm:$0xff]
      %v1850 = vld [vmem:[%s1744 + $0x91] sm:$0xff]
      %v1851 = vld [vmem:[%s1744 + $0xa1] sm:$0xff]
      %v1852 = vld [vmem:[%s1744 + $0xb1] sm:$0xff]
      %v1853 = vld [vmem:[%s1744 + $0xc1] sm:$0xff]
      %v1854 = vld [vmem:[%s1744 + $0xd1] sm:$0xff]
      %v1855 = vld [vmem:[%s1744 + $0xe1] sm:$0xff]
      %v1856 = vld [vmem:[%s1744 + $0xf1] sm:$0xff]
      %1873 = vrot.lane.b32.xlu0 %v1841, 32
      %v1874 = vpop.permute.xlu0 %1873
      %1875 = vrot.lane.b32.xlu0 %v1842, 32
      %v1876 = vpop.permute.xlu0 %1875
      %1877 = vrot.lane.b32.xlu0 %v1843, 32
      %v1878 = vpop.permute.xlu0 %1877
      %1879 = vrot.lane.b32.xlu0 %v1844, 32
      %v1880 = vpop.permute.xlu0 %1879
      %1881 = vrot.lane.b32.xlu0 %v1845, 32
      %v1882 = vpop.permute.xlu0 %1881
      %1883 = vrot.lane.b32.xlu0 %v1846, 32
      %v1884 = vpop.permute.xlu0 %1883
      %1885 = vrot.lane.b32.xlu0 %v1847, 32
      %v1886 = vpop.permute.xlu0 %1885
      %1887 = vrot.lane.b32.xlu0 %v1848, 32
      %v1888 = vpop.permute.xlu0 %1887
      %1889 = vrot.lane.b32.xlu0 %v1849, 32
      %v1890 = vpop.permute.xlu0 %1889
      %1891 = vrot.lane.b32.xlu0 %v1850, 32
      %v1892 = vpop.permute.xlu0 %1891
      %1893 = vrot.lane.b32.xlu0 %v1851, 32
      %v1894 = vpop.permute.xlu0 %1893
      %1895 = vrot.lane.b32.xlu0 %v1852, 32
      %v1896 = vpop.permute.xlu0 %1895
      %1897 = vrot.lane.b32.xlu0 %v1853, 32
      %v1898 = vpop.permute.xlu0 %1897
      %1899 = vrot.lane.b32.xlu0 %v1854, 32
      %v1900 = vpop.permute.xlu0 %1899
      %1901 = vrot.lane.b32.xlu0 %v1855, 32
      %v1902 = vpop.permute.xlu0 %1901
      %1903 = vrot.lane.b32.xlu0 %v1856, 32
      %v1904 = vpop.permute.xlu0 %1903
      %1921 = vst.msk [vmem:[#allocation3 + $0x10] sm:$0xff] %vm957, %v1874
      %1922 = vst.msk [vmem:[#allocation3 + $0x28] sm:$0xff] %vm957, %v1876
      %1923 = vst.msk [vmem:[#allocation3 + $0x40] sm:$0xff] %vm957, %v1878
      %1924 = vst.msk [vmem:[#allocation3 + $0x58] sm:$0xff] %vm957, %v1880
      %1925 = vst.msk [vmem:[#allocation3 + $0x70] sm:$0xff] %vm957, %v1882
      %1926 = vst.msk [vmem:[#allocation3 + $0x88] sm:$0xff] %vm957, %v1884
      %1927 = vst.msk [vmem:[#allocation3 + $0xa0] sm:$0xff] %vm957, %v1886
      %1928 = vst.msk [vmem:[#allocation3 + $0xb8] sm:$0xff] %vm957, %v1888
      %1929 = vst.msk [vmem:[#allocation3 + $0xd0] sm:$0xff] %vm957, %v1890
      %1930 = vst.msk [vmem:[#allocation3 + $0xe8] sm:$0xff] %vm957, %v1892
      %1931 = vst.msk [vmem:[#allocation3 + $0x100] sm:$0xff] %vm957, %v1894
      %1932 = vst.msk [vmem:[#allocation3 + $0x118] sm:$0xff] %vm957, %v1896
      %1933 = vst.msk [vmem:[#allocation3 + $0x130] sm:$0xff] %vm957, %v1898
      %1934 = vst.msk [vmem:[#allocation3 + $0x148] sm:$0xff] %vm957, %v1900
      %1935 = vst.msk [vmem:[#allocation3 + $0x160] sm:$0xff] %vm957, %v1902
      %1936 = vst.msk [vmem:[#allocation3 + $0x178] sm:$0xff] %vm957, %v1904
      %v1937 = vld [vmem:[%s1744 + $0x1] sm:$0xff]
      %v1938 = vld [vmem:[%s1744 + $0x11] sm:$0xff]
      %v1939 = vld [vmem:[%s1744 + $0x21] sm:$0xff]
      %v1940 = vld [vmem:[%s1744 + $0x31] sm:$0xff]
      %v1941 = vld [vmem:[%s1744 + $0x41] sm:$0xff]
      %v1942 = vld [vmem:[%s1744 + $0x51] sm:$0xff]
      %v1943 = vld [vmem:[%s1744 + $0x61] sm:$0xff]
      %v1944 = vld [vmem:[%s1744 + $0x71] sm:$0xff]
      %v1945 = vld [vmem:[%s1744 + $0x81] sm:$0xff]
      %v1946 = vld [vmem:[%s1744 + $0x91] sm:$0xff]
      %v1947 = vld [vmem:[%s1744 + $0xa1] sm:$0xff]
      %v1948 = vld [vmem:[%s1744 + $0xb1] sm:$0xff]
      %v1949 = vld [vmem:[%s1744 + $0xc1] sm:$0xff]
      %v1950 = vld [vmem:[%s1744 + $0xd1] sm:$0xff]
      %v1951 = vld [vmem:[%s1744 + $0xe1] sm:$0xff]
      %v1952 = vld [vmem:[%s1744 + $0xf1] sm:$0xff]
      %1969 = vrot.lane.b32.xlu0 %v1937, 32
      %v1970 = vpop.permute.xlu0 %1969
      %1971 = vrot.lane.b32.xlu0 %v1938, 32
      %v1972 = vpop.permute.xlu0 %1971
      %1973 = vrot.lane.b32.xlu0 %v1939, 32
      %v1974 = vpop.permute.xlu0 %1973
      %1975 = vrot.lane.b32.xlu0 %v1940, 32
      %v1976 = vpop.permute.xlu0 %1975
      %1977 = vrot.lane.b32.xlu0 %v1941, 32
      %v1978 = vpop.permute.xlu0 %1977
      %1979 = vrot.lane.b32.xlu0 %v1942, 32
      %v1980 = vpop.permute.xlu0 %1979
      %1981 = vrot.lane.b32.xlu0 %v1943, 32
      %v1982 = vpop.permute.xlu0 %1981
      %1983 = vrot.lane.b32.xlu0 %v1944, 32
      %v1984 = vpop.permute.xlu0 %1983
      %1985 = vrot.lane.b32.xlu0 %v1945, 32
      %v1986 = vpop.permute.xlu0 %1985
      %1987 = vrot.lane.b32.xlu0 %v1946, 32
      %v1988 = vpop.permute.xlu0 %1987
      %1989 = vrot.lane.b32.xlu0 %v1947, 32
      %v1990 = vpop.permute.xlu0 %1989
      %1991 = vrot.lane.b32.xlu0 %v1948, 32
      %v1992 = vpop.permute.xlu0 %1991
      %1993 = vrot.lane.b32.xlu0 %v1949, 32
      %v1994 = vpop.permute.xlu0 %1993
      %1995 = vrot.lane.b32.xlu0 %v1950, 32
      %v1996 = vpop.permute.xlu0 %1995
      %1997 = vrot.lane.b32.xlu0 %v1951, 32
      %v1998 = vpop.permute.xlu0 %1997
      %1999 = vrot.lane.b32.xlu0 %v1952, 32
      %v2000 = vpop.permute.xlu0 %1999
      %2017 = vst.msk [vmem:[#allocation3 + $0x10] sm:$0xff] %vm1246, %v1970
      %2018 = vst.msk [vmem:[#allocation3 + $0x28] sm:$0xff] %vm1246, %v1972
      %2019 = vst.msk [vmem:[#allocation3 + $0x40] sm:$0xff] %vm1246, %v1974
      %2020 = vst.msk [vmem:[#allocation3 + $0x58] sm:$0xff] %vm1246, %v1976
      %2021 = vst.msk [vmem:[#allocation3 + $0x70] sm:$0xff] %vm1246, %v1978
      %2022 = vst.msk [vmem:[#allocation3 + $0x88] sm:$0xff] %vm1246, %v1980
      %2023 = vst.msk [vmem:[#allocation3 + $0xa0] sm:$0xff] %vm1246, %v1982
      %2024 = vst.msk [vmem:[#allocation3 + $0xb8] sm:$0xff] %vm1246, %v1984
      %2025 = vst.msk [vmem:[#allocation3 + $0xd0] sm:$0xff] %vm1246, %v1986
      %2026 = vst.msk [vmem:[#allocation3 + $0xe8] sm:$0xff] %vm1246, %v1988
      %2027 = vst.msk [vmem:[#allocation3 + $0x100] sm:$0xff] %vm1246, %v1990
      %2028 = vst.msk [vmem:[#allocation3 + $0x118] sm:$0xff] %vm1246, %v1992
      %2029 = vst.msk [vmem:[#allocation3 + $0x130] sm:$0xff] %vm1246, %v1994
      %2030 = vst.msk [vmem:[#allocation3 + $0x148] sm:$0xff] %vm1246, %v1996
      %2031 = vst.msk [vmem:[#allocation3 + $0x160] sm:$0xff] %vm1246, %v1998
      %2032 = vst.msk [vmem:[#allocation3 + $0x178] sm:$0xff] %vm1246, %v2000
      %v2033 = vld [vmem:[%s1744 + $0x2] sm:$0xff]
      %v2034 = vld [vmem:[%s1744 + $0x12] sm:$0xff]
      %v2035 = vld [vmem:[%s1744 + $0x22] sm:$0xff]
      %v2036 = vld [vmem:[%s1744 + $0x32] sm:$0xff]
      %v2037 = vld [vmem:[%s1744 + $0x42] sm:$0xff]
      %v2038 = vld [vmem:[%s1744 + $0x52] sm:$0xff]
      %v2039 = vld [vmem:[%s1744 + $0x62] sm:$0xff]
      %v2040 = vld [vmem:[%s1744 + $0x72] sm:$0xff]
      %v2041 = vld [vmem:[%s1744 + $0x82] sm:$0xff]
      %v2042 = vld [vmem:[%s1744 + $0x92] sm:$0xff]
      %v2043 = vld [vmem:[%s1744 + $0xa2] sm:$0xff]
      %v2044 = vld [vmem:[%s1744 + $0xb2] sm:$0xff]
      %v2045 = vld [vmem:[%s1744 + $0xc2] sm:$0xff]
      %v2046 = vld [vmem:[%s1744 + $0xd2] sm:$0xff]
      %v2047 = vld [vmem:[%s1744 + $0xe2] sm:$0xff]
      %v2048 = vld [vmem:[%s1744 + $0xf2] sm:$0xff]
      %2065 = vrot.lane.b32.xlu0 %v2033, 96
      %v2066 = vpop.permute.xlu0 %2065
      %2067 = vrot.lane.b32.xlu0 %v2034, 96
      %v2068 = vpop.permute.xlu0 %2067
      %2069 = vrot.lane.b32.xlu0 %v2035, 96
      %v2070 = vpop.permute.xlu0 %2069
      %2071 = vrot.lane.b32.xlu0 %v2036, 96
      %v2072 = vpop.permute.xlu0 %2071
      %2073 = vrot.lane.b32.xlu0 %v2037, 96
      %v2074 = vpop.permute.xlu0 %2073
      %2075 = vrot.lane.b32.xlu0 %v2038, 96
      %v2076 = vpop.permute.xlu0 %2075
      %2077 = vrot.lane.b32.xlu0 %v2039, 96
      %v2078 = vpop.permute.xlu0 %2077
      %2079 = vrot.lane.b32.xlu0 %v2040, 96
      %v2080 = vpop.permute.xlu0 %2079
      %2081 = vrot.lane.b32.xlu0 %v2041, 96
      %v2082 = vpop.permute.xlu0 %2081
      %2083 = vrot.lane.b32.xlu0 %v2042, 96
      %v2084 = vpop.permute.xlu0 %2083
      %2085 = vrot.lane.b32.xlu0 %v2043, 96
      %v2086 = vpop.permute.xlu0 %2085
      %2087 = vrot.lane.b32.xlu0 %v2044, 96
      %v2088 = vpop.permute.xlu0 %2087
      %2089 = vrot.lane.b32.xlu0 %v2045, 96
      %v2090 = vpop.permute.xlu0 %2089
      %2091 = vrot.lane.b32.xlu0 %v2046, 96
      %v2092 = vpop.permute.xlu0 %2091
      %2093 = vrot.lane.b32.xlu0 %v2047, 96
      %v2094 = vpop.permute.xlu0 %2093
      %2095 = vrot.lane.b32.xlu0 %v2048, 96
      %v2096 = vpop.permute.xlu0 %2095
      %2113 = vst.msk [vmem:[#allocation3 + $0x10] sm:$0xff] %vm1343, %v2066
      %2114 = vst.msk [vmem:[#allocation3 + $0x28] sm:$0xff] %vm1343, %v2068
      %2115 = vst.msk [vmem:[#allocation3 + $0x40] sm:$0xff] %vm1343, %v2070
      %2116 = vst.msk [vmem:[#allocation3 + $0x58] sm:$0xff] %vm1343, %v2072
      %2117 = vst.msk [vmem:[#allocation3 + $0x70] sm:$0xff] %vm1343, %v2074
      %2118 = vst.msk [vmem:[#allocation3 + $0x88] sm:$0xff] %vm1343, %v2076
      %2119 = vst.msk [vmem:[#allocation3 + $0xa0] sm:$0xff] %vm1343, %v2078
      %2120 = vst.msk [vmem:[#allocation3 + $0xb8] sm:$0xff] %vm1343, %v2080
      %2121 = vst.msk [vmem:[#allocation3 + $0xd0] sm:$0xff] %vm1343, %v2082
      %2122 = vst.msk [vmem:[#allocation3 + $0xe8] sm:$0xff] %vm1343, %v2084
      %2123 = vst.msk [vmem:[#allocation3 + $0x100] sm:$0xff] %vm1343, %v2086
      %2124 = vst.msk [vmem:[#allocation3 + $0x118] sm:$0xff] %vm1343, %v2088
      %2125 = vst.msk [vmem:[#allocation3 + $0x130] sm:$0xff] %vm1343, %v2090
      %2126 = vst.msk [vmem:[#allocation3 + $0x148] sm:$0xff] %vm1343, %v2092
      %2127 = vst.msk [vmem:[#allocation3 + $0x160] sm:$0xff] %vm1343, %v2094
      %2128 = vst.msk [vmem:[#allocation3 + $0x178] sm:$0xff] %vm1343, %v2096
      %v2129 = vld [vmem:[#allocation3] sm:$0xff]
      %v2130 = vld [vmem:[#allocation3 + $0x8] sm:$0xff]
      %v2131 = vld [vmem:[#allocation3 + $0x10] sm:$0xff]
      %v2132 = vld [vmem:[#allocation3 + $0x18] sm:$0xff]
      %v2133 = vld [vmem:[#allocation3 + $0x20] sm:$0xff]
      %v2134 = vld [vmem:[#allocation3 + $0x28] sm:$0xff]
      %v2135 = vld [vmem:[#allocation3 + $0x30] sm:$0xff]
      %v2136 = vld [vmem:[#allocation3 + $0x38] sm:$0xff]
      %v2137 = vld [vmem:[#allocation3 + $0x40] sm:$0xff]
      %v2138 = vld [vmem:[#allocation3 + $0x48] sm:$0xff]
      %v2139 = vld [vmem:[#allocation3 + $0x50] sm:$0xff]
      %v2140 = vld [vmem:[#allocation3 + $0x58] sm:$0xff]
      %v2141 = vld [vmem:[#allocation3 + $0x60] sm:$0xff]
      %v2142 = vld [vmem:[#allocation3 + $0x68] sm:$0xff]
      %v2143 = vld [vmem:[#allocation3 + $0x70] sm:$0xff]
      %v2144 = vld [vmem:[#allocation3 + $0x78] sm:$0xff]
      %v2145 = vld [vmem:[#allocation3 + $0x80] sm:$0xff]
      %v2146 = vld [vmem:[#allocation3 + $0x88] sm:$0xff]
      %v2147 = vld [vmem:[#allocation3 + $0x90] sm:$0xff]
      %v2148 = vld [vmem:[#allocation3 + $0x98] sm:$0xff]
      %v2149 = vld [vmem:[#allocation3 + $0xa0] sm:$0xff]
      %v2150 = vld [vmem:[#allocation3 + $0xa8] sm:$0xff]
      %v2151 = vld [vmem:[#allocation3 + $0xb0] sm:$0xff]
      %v2152 = vld [vmem:[#allocation3 + $0xb8] sm:$0xff]
      %v2153 = vld [vmem:[#allocation3 + $0xc0] sm:$0xff]
      %v2154 = vld [vmem:[#allocation3 + $0xc8] sm:$0xff]
      %v2155 = vld [vmem:[#allocation3 + $0xd0] sm:$0xff]
      %v2156 = vld [vmem:[#allocation3 + $0xd8] sm:$0xff]
      %v2157 = vld [vmem:[#allocation3 + $0xe0] sm:$0xff]
      %v2158 = vld [vmem:[#allocation3 + $0xe8] sm:$0xff]
      %v2159 = vld [vmem:[#allocation3 + $0xf0] sm:$0xff]
      %v2160 = vld [vmem:[#allocation3 + $0xf8] sm:$0xff]
      %v2161 = vld [vmem:[#allocation3 + $0x100] sm:$0xff]
      %v2162 = vld [vmem:[#allocation3 + $0x108] sm:$0xff]
      %v2163 = vld [vmem:[#allocation3 + $0x110] sm:$0xff]
      %v2164 = vld [vmem:[#allocation3 + $0x118] sm:$0xff]
      %v2165 = vld [vmem:[#allocation3 + $0x120] sm:$0xff]
      %v2166 = vld [vmem:[#allocation3 + $0x128] sm:$0xff]
      %v2167 = vld [vmem:[#allocation3 + $0x130] sm:$0xff]
      %v2168 = vld [vmem:[#allocation3 + $0x138] sm:$0xff]
      %v2169 = vld [vmem:[#allocation3 + $0x140] sm:$0xff]
      %v2170 = vld [vmem:[#allocation3 + $0x148] sm:$0xff]
      %v2171 = vld [vmem:[#allocation3 + $0x150] sm:$0xff]
      %v2172 = vld [vmem:[#allocation3 + $0x158] sm:$0xff]
      %v2173 = vld [vmem:[#allocation3 + $0x160] sm:$0xff]
      %v2174 = vld [vmem:[#allocation3 + $0x168] sm:$0xff]
      %v2175 = vld [vmem:[#allocation3 + $0x170] sm:$0xff]
      %v2176 = vld [vmem:[#allocation3 + $0x178] sm:$0xff]
      %v2177 = vld [vmem:[%s3] sm:$0xff]
      %v2178 = vld [vmem:[%s3 + $0x8] sm:$0xff]
      %v2179 = vld [vmem:[%s3 + $0x10] sm:$0xff]
      %v2180 = vld [vmem:[%s3 + $0x18] sm:$0xff]
      %v2181 = vld [vmem:[%s3 + $0x20] sm:$0xff]
      %v2182 = vld [vmem:[%s3 + $0x28] sm:$0xff]
      %v2183 = vld [vmem:[%s3 + $0x30] sm:$0xff]
      %v2184 = vld [vmem:[%s3 + $0x38] sm:$0xff]
      %v2185 = vld [vmem:[%s3 + $0x40] sm:$0xff]
      %v2186 = vld [vmem:[%s3 + $0x48] sm:$0xff]
      %v2187 = vld [vmem:[%s3 + $0x50] sm:$0xff]
      %v2188 = vld [vmem:[%s3 + $0x58] sm:$0xff]
      %v2189 = vld [vmem:[%s3 + $0x60] sm:$0xff]
      %v2190 = vld [vmem:[%s3 + $0x68] sm:$0xff]
      %v2191 = vld [vmem:[%s3 + $0x70] sm:$0xff]
      %v2192 = vld [vmem:[%s3 + $0x78] sm:$0xff]
      %v2193 = vld [vmem:[%s3 + $0x80] sm:$0xff]
      %v2194 = vld [vmem:[%s3 + $0x88] sm:$0xff]
      %v2195 = vld [vmem:[%s3 + $0x90] sm:$0xff]
      %v2196 = vld [vmem:[%s3 + $0x98] sm:$0xff]
      %v2197 = vld [vmem:[%s3 + $0xa0] sm:$0xff]
      %v2198 = vld [vmem:[%s3 + $0xa8] sm:$0xff]
      %v2199 = vld [vmem:[%s3 + $0xb0] sm:$0xff]
      %v2200 = vld [vmem:[%s3 + $0xb8] sm:$0xff]
      %v2201 = vld [vmem:[%s3 + $0xc0] sm:$0xff]
      %v2202 = vld [vmem:[%s3 + $0xc8] sm:$0xff]
      %v2203 = vld [vmem:[%s3 + $0xd0] sm:$0xff]
      %v2204 = vld [vmem:[%s3 + $0xd8] sm:$0xff]
      %v2205 = vld [vmem:[%s3 + $0xe0] sm:$0xff]
      %v2206 = vld [vmem:[%s3 + $0xe8] sm:$0xff]
      %v2207 = vld [vmem:[%s3 + $0xf0] sm:$0xff]
      %v2208 = vld [vmem:[%s3 + $0xf8] sm:$0xff]
      %v2209 = vld [vmem:[%s3 + $0x100] sm:$0xff]
      %v2210 = vld [vmem:[%s3 + $0x108] sm:$0xff]
      %v2211 = vld [vmem:[%s3 + $0x110] sm:$0xff]
      %v2212 = vld [vmem:[%s3 + $0x118] sm:$0xff]
      %v2213 = vld [vmem:[%s3 + $0x120] sm:$0xff]
      %v2214 = vld [vmem:[%s3 + $0x128] sm:$0xff]
      %v2215 = vld [vmem:[%s3 + $0x130] sm:$0xff]
      %v2216 = vld [vmem:[%s3 + $0x138] sm:$0xff]
      %v2217 = vld [vmem:[%s3 + $0x140] sm:$0xff]
      %v2218 = vld [vmem:[%s3 + $0x148] sm:$0xff]
      %v2219 = vld [vmem:[%s3 + $0x150] sm:$0xff]
      %v2220 = vld [vmem:[%s3 + $0x158] sm:$0xff]
      %v2221 = vld [vmem:[%s3 + $0x160] sm:$0xff]
      %v2222 = vld [vmem:[%s3 + $0x168] sm:$0xff]
      %v2223 = vld [vmem:[%s3 + $0x170] sm:$0xff]
      %v2224 = vld [vmem:[%s3 + $0x178] sm:$0xff]
      %v2225 = vld [vmem:[%s4] sm:$0x1]
      %v2227 = vlaneseq
      %v2228 = vshrl.u32 %v2227, 7
      %v2229 = vsub.s32 0, %v2228
      %v2230 = vrot.slane %v2225, %v2229
      %2232 = vmatprep.subr.mxu0 0.0
      %2233 = vmatpush1.msra.mxu0 %v2177
      %2234 = vmatprep.subr.mxu0 0.0
      %2235 = vmatpush1.msra.mxu0 %v2178
      %2236 = vmatprep.subr.mxu0 0.0
      %2237 = vmatpush1.msra.mxu0 %v2179
      %2238 = vmatprep.subr.mxu0 0.0
      %2239 = vmatpush1.msra.mxu0 %v2180
      %2240 = vmatprep.subr.mxu0 0.0
      %2241 = vmatpush1.msra.mxu0 %v2181
      %2242 = vmatprep.subr.mxu0 0.0
      %2243 = vmatpush1.msra.mxu0 %v2182
      %2244 = vmatprep.subr.mxu0 0.0
      %2245 = vmatpush1.msra.mxu0 %v2183
      %2246 = vmatprep.subr.mxu0 0.0
      %2247 = vmatpush1.msra.mxu0 %v2184
      %2248 = vmatprep.subr.mxu0 0.0
      %2249 = vmatpush1.msra.mxu0 %v2185
      %2250 = vmatprep.subr.mxu0 0.0
      %2251 = vmatpush1.msra.mxu0 %v2186
      %2252 = vmatprep.subr.mxu0 0.0
      %2253 = vmatpush1.msra.mxu0 %v2187
      %2254 = vmatprep.subr.mxu0 0.0
      %2255 = vmatpush1.msra.mxu0 %v2188
      %2256 = vmatprep.subr.mxu0 0.0
      %2257 = vmatpush1.msra.mxu0 %v2189
      %2258 = vmatprep.subr.mxu0 0.0
      %2259 = vmatpush1.msra.mxu0 %v2190
      %2260 = vmatprep.subr.mxu0 0.0
      %2261 = vmatpush1.msra.mxu0 %v2191
      %2262 = vmatprep.subr.mxu0 0.0
      %2263 = vmatpush1.msra.mxu0 %v2192
      %2264 = vmatprep.subr.mxu0 0.0
      %2265 = vmatpush1.msra.mxu0 %v2193
      %2266 = vmatprep.subr.mxu0 0.0
      %2267 = vmatpush1.msra.mxu0 %v2194
      %2268 = vmatprep.subr.mxu0 0.0
      %2269 = vmatpush1.msra.mxu0 %v2195
      %2270 = vmatprep.subr.mxu0 0.0
      %2271 = vmatpush1.msra.mxu0 %v2196
      %2272 = vmatprep.subr.mxu0 0.0
      %2273 = vmatpush1.msra.mxu0 %v2197
      %2274 = vmatprep.subr.mxu0 0.0
      %2275 = vmatpush1.msra.mxu0 %v2198
      %2276 = vmatprep.subr.mxu0 0.0
      %2277 = vmatpush1.msra.mxu0 %v2199
      %2278 = vmatprep.subr.mxu0 0.0
      %2279 = vmatpush1.msra.mxu0 %v2200
      %2280 = vmatprep.subr.mxu0 0.0
      %2281 = vmatpush1.msra.mxu0 %v2201
      %2282 = vmatprep.subr.mxu0 0.0
      %2283 = vmatpush1.msra.mxu0 %v2202
      %2284 = vmatprep.subr.mxu0 0.0
      %2285 = vmatpush1.msra.mxu0 %v2203
      %2286 = vmatprep.subr.mxu0 0.0
      %2287 = vmatpush1.msra.mxu0 %v2204
      %2288 = vmatprep.subr.mxu0 0.0
      %2289 = vmatpush1.msra.mxu0 %v2205
      %2290 = vmatprep.subr.mxu0 0.0
      %2291 = vmatpush1.msra.mxu0 %v2206
      %2292 = vmatprep.subr.mxu0 0.0
      %2293 = vmatpush1.msra.mxu0 %v2207
      %2294 = vmatprep.subr.mxu0 0.0
      %2295 = vmatpush1.msra.mxu0 %v2208
      %2296 = vmatprep.mubr.f32.mxu0 %v2130
      %2297 = vmatmul.mubr.f32.gmra.mrb[0].mxu0 %v2129
      %v2298 = vpop.f32.mrb[0].mxu0
      %v2299 = vadd.f32 %v2230, %v2298
      %v2300 = vpop.f32.mrb[0].mxu0
      %2301 = vmatprep.mubr.f32.mxu0 %v2133
      %2302 = vmatmul.mubr.f32.gmra.mrb[0].mxu0 %v2132
      %v2303 = vpop.f32.mrb[0].mxu0
      %v2304 = vadd.f32 %v2230, %v2303
      %v2305 = vpop.f32.mrb[0].mxu0
      %2306 = vmatprep.mubr.f32.mxu0 %v2136
      %2307 = vmatmul.mubr.f32.gmra.mrb[0].mxu0 %v2135
      %v2308 = vpop.f32.mrb[0].mxu0
      %v2309 = vadd.f32 %v2230, %v2308
      %v2310 = vpop.f32.mrb[0].mxu0
      %2311 = vmatprep.mubr.f32.mxu0 %v2139
      %2312 = vmatmul.mubr.f32.gmra.mrb[0].mxu0 %v2138
      %v2313 = vpop.f32.mrb[0].mxu0
      %v2314 = vadd.f32 %v2230, %v2313
      %v2315 = vpop.f32.mrb[0].mxu0
      %2316 = vmatprep.mubr.f32.mxu0 %v2142
      %2317 = vmatmul.mubr.f32.gmra.mrb[0].mxu0 %v2141
      %v2318 = vpop.f32.mrb[0].mxu0
      %v2319 = vadd.f32 %v2230, %v2318
      %v2320 = vpop.f32.mrb[0].mxu0
      %2321 = vmatprep.mubr.f32.mxu0 %v2145
      %2322 = vmatmul.mubr.f32.gmra.mrb[0].mxu0 %v2144
      %v2323 = vpop.f32.mrb[0].mxu0
      %v2324 = vadd.f32 %v2230, %v2323
      %v2325 = vpop.f32.mrb[0].mxu0
      %2326 = vmatprep.mubr.f32.mxu0 %v2148
      %2327 = vmatmul.mubr.f32.gmra.mrb[0].mxu0 %v2147
      %v2328 = vpop.f32.mrb[0].mxu0
      %v2329 = vadd.f32 %v2230, %v2328
      %v2330 = vpop.f32.mrb[0].mxu0
      %2331 = vmatprep.mubr.f32.mxu0 %v2151
      %2332 = vmatmul.mubr.f32.gmra.mrb[0].mxu0 %v2150
      %v2333 = vpop.f32.mrb[0].mxu0
      %v2334 = vadd.f32 %v2230, %v2333
      %v2335 = vpop.f32.mrb[0].mxu0
      %2336 = vmatprep.mubr.f32.mxu0 %v2154
      %2337 = vmatmul.mubr.f32.gmra.mrb[0].mxu0 %v2153
      %v2338 = vpop.f32.mrb[0].mxu0
      %v2339 = vadd.f32 %v2230, %v2338
      %v2340 = vpop.f32.mrb[0].mxu0
      %2341 = vmatprep.mubr.f32.mxu0 %v2157
      %2342 = vmatmul.mubr.f32.gmra.mrb[0].mxu0 %v2156
      %v2343 = vpop.f32.mrb[0].mxu0
      %v2344 = vadd.f32 %v2230, %v2343
      %v2345 = vpop.f32.mrb[0].mxu0
      %2346 = vmatprep.mubr.f32.mxu0 %v2160
      %2347 = vmatmul.mubr.f32.gmra.mrb[0].mxu0 %v2159
      %v2348 = vpop.f32.mrb[0].mxu0
      %v2349 = vadd.f32 %v2230, %v2348
      %v2350 = vpop.f32.mrb[0].mxu0
      %2351 = vmatprep.mubr.f32.mxu0 %v2163
      %2352 = vmatmul.mubr.f32.gmra.mrb[0].mxu0 %v2162
      %v2353 = vpop.f32.mrb[0].mxu0
      %v2354 = vadd.f32 %v2230, %v2353
      %v2355 = vpop.f32.mrb[0].mxu0
      %2356 = vmatprep.mubr.f32.mxu0 %v2166
      %2357 = vmatmul.mubr.f32.gmra.mrb[0].mxu0 %v2165
      %v2358 = vpop.f32.mrb[0].mxu0
      %v2359 = vadd.f32 %v2230, %v2358
      %v2360 = vpop.f32.mrb[0].mxu0
      %2361 = vmatprep.mubr.f32.mxu0 %v2169
      %2362 = vmatmul.mubr.f32.gmra.mrb[0].mxu0 %v2168
      %v2363 = vpop.f32.mrb[0].mxu0
      %v2364 = vadd.f32 %v2230, %v2363
      %v2365 = vpop.f32.mrb[0].mxu0
      %2366 = vmatprep.mubr.f32.mxu0 %v2172
      %2367 = vmatmul.mubr.f32.gmra.mrb[0].mxu0 %v2171
      %v2368 = vpop.f32.mrb[0].mxu0
      %v2369 = vadd.f32 %v2230, %v2368
      %v2370 = vpop.f32.mrb[0].mxu0
      %2371 = vmatprep.mubr.f32.mxu0 %v2175
      %2372 = vmatmul.mubr.f32.gmra.mrb[0].mxu0 %v2174
      %v2373 = vpop.f32.mrb[0].mxu0
      %v2374 = vadd.f32 %v2230, %v2373
      %v2375 = vpop.f32.mrb[0].mxu0
      %2376 = vdwg.mxu0
      %2377 = vmatprep.subr.mxu0 0.0
      %2378 = vmatpush1.msra.mxu0 %v2209
      %2379 = vmatprep.subr.mxu0 0.0
      %2380 = vmatpush1.msra.mxu0 %v2210
      %2381 = vmatprep.subr.mxu0 0.0
      %2382 = vmatpush1.msra.mxu0 %v2211
      %2383 = vmatprep.subr.mxu0 0.0
      %2384 = vmatpush1.msra.mxu0 %v2212
      %2385 = vmatprep.subr.mxu0 0.0
      %2386 = vmatpush1.msra.mxu0 %v2213
      %2387 = vmatprep.subr.mxu0 0.0
      %2388 = vmatpush1.msra.mxu0 %v2214
      %2389 = vmatprep.subr.mxu0 0.0
      %2390 = vmatpush1.msra.mxu0 %v2215
      %2391 = vmatprep.subr.mxu0 0.0
      %2392 = vmatpush1.msra.mxu0 %v2216
      %2393 = vmatprep.subr.mxu0 0.0
      %2394 = vmatpush1.msra.mxu0 %v2217
      %2395 = vmatprep.subr.mxu0 0.0
      %2396 = vmatpush1.msra.mxu0 %v2218
      %2397 = vmatprep.subr.mxu0 0.0
      %2398 = vmatpush1.msra.mxu0 %v2219
      %2399 = vmatprep.subr.mxu0 0.0
      %2400 = vmatpush1.msra.mxu0 %v2220
      %2401 = vmatprep.subr.mxu0 0.0
      %2402 = vmatpush1.msra.mxu0 %v2221
      %2403 = vmatprep.subr.mxu0 0.0
      %2404 = vmatpush1.msra.mxu0 %v2222
      %2405 = vmatprep.subr.mxu0 0.0
      %2406 = vmatpush1.msra.mxu0 %v2223
      %2407 = vmatprep.subr.mxu0 0.0
      %2408 = vmatpush1.msra.mxu0 %v2224
      %2409 = vmatprep.subr.mxu0 0.0
      %2410 = vmatpush1.msra.mxu0 0.0
      %2411 = vmatprep.subr.mxu0 0.0
      %2412 = vmatpush1.msra.mxu0 0.0
      %2413 = vmatprep.subr.mxu0 0.0
      %2414 = vmatpush1.msra.mxu0 0.0
      %2415 = vmatprep.subr.mxu0 0.0
      %2416 = vmatpush1.msra.mxu0 0.0
      %2417 = vmatprep.subr.mxu0 0.0
      %2418 = vmatpush1.msra.mxu0 0.0
      %2419 = vmatprep.subr.mxu0 0.0
      %2420 = vmatpush1.msra.mxu0 0.0
      %2421 = vmatprep.subr.mxu0 0.0
      %2422 = vmatpush1.msra.mxu0 0.0
      %2423 = vmatprep.subr.mxu0 0.0
      %2424 = vmatpush1.msra.mxu0 0.0
      %2425 = vmatprep.subr.mxu0 0.0
      %2426 = vmatpush1.msra.mxu0 0.0
      %2427 = vmatprep.subr.mxu0 0.0
      %2428 = vmatpush1.msra.mxu0 0.0
      %2429 = vmatprep.subr.mxu0 0.0
      %2430 = vmatpush1.msra.mxu0 0.0
      %2431 = vmatprep.subr.mxu0 0.0
      %2432 = vmatpush1.msra.mxu0 0.0
      %2433 = vmatprep.subr.mxu0 0.0
      %2434 = vmatpush1.msra.mxu0 0.0
      %2435 = vmatprep.subr.mxu0 0.0
      %2436 = vmatpush1.msra.mxu0 0.0
      %2437 = vmatprep.subr.mxu0 0.0
      %2438 = vmatpush1.msra.mxu0 0.0
      %2439 = vmatprep.subr.mxu0 0.0
      %2440 = vmatpush1.msra.mxu0 0.0
      %2441 = vmatprep.mubr.f32.mxu0 0.0
      %2442 = vmatmul.mubr.f32.gmra.mrb[0].mxu0 %v2131
      %v2443 = vpop.f32.mrb[0].mxu0
      %v2444 = vadd.f32 %v2299, %v2443
      %v2445 = vpop.f32.mrb[0].mxu0
      %2446 = vmatprep.mubr.f32.mxu0 0.0
      %2447 = vmatmul.mubr.f32.gmra.mrb[0].mxu0 %v2134
      %v2448 = vpop.f32.mrb[0].mxu0
      %v2449 = vadd.f32 %v2304, %v2448
      %v2450 = vpop.f32.mrb[0].mxu0
      %2451 = vmatprep.mubr.f32.mxu0 0.0
      %2452 = vmatmul.mubr.f32.gmra.mrb[0].mxu0 %v2137
      %v2453 = vpop.f32.mrb[0].mxu0
      %v2454 = vadd.f32 %v2309, %v2453
      %v2455 = vpop.f32.mrb[0].mxu0
      %2456 = vmatprep.mubr.f32.mxu0 0.0
      %2457 = vmatmul.mubr.f32.gmra.mrb[0].mxu0 %v2140
      %v2458 = vpop.f32.mrb[0].mxu0
      %v2459 = vadd.f32 %v2314, %v2458
      %v2460 = vpop.f32.mrb[0].mxu0
      %2461 = vmatprep.mubr.f32.mxu0 0.0
      %2462 = vmatmul.mubr.f32.gmra.mrb[0].mxu0 %v2143
      %v2463 = vpop.f32.mrb[0].mxu0
      %v2464 = vadd.f32 %v2319, %v2463
      %v2465 = vpop.f32.mrb[0].mxu0
      %2466 = vmatprep.mubr.f32.mxu0 0.0
      %2467 = vmatmul.mubr.f32.gmra.mrb[0].mxu0 %v2146
      %v2468 = vpop.f32.mrb[0].mxu0
      %v2469 = vadd.f32 %v2324, %v2468
      %v2470 = vpop.f32.mrb[0].mxu0
      %2471 = vmatprep.mubr.f32.mxu0 0.0
      %2472 = vmatmul.mubr.f32.gmra.mrb[0].mxu0 %v2149
      %v2473 = vpop.f32.mrb[0].mxu0
      %v2474 = vadd.f32 %v2329, %v2473
      %v2475 = vpop.f32.mrb[0].mxu0
      %2476 = vmatprep.mubr.f32.mxu0 0.0
      %2477 = vmatmul.mubr.f32.gmra.mrb[0].mxu0 %v2152
      %v2478 = vpop.f32.mrb[0].mxu0
      %v2479 = vadd.f32 %v2334, %v2478
      %v2480 = vpop.f32.mrb[0].mxu0
      %2481 = vmatprep.mubr.f32.mxu0 0.0
      %2482 = vmatmul.mubr.f32.gmra.mrb[0].mxu0 %v2155
      %v2483 = vpop.f32.mrb[0].mxu0
      %v2484 = vadd.f32 %v2339, %v2483
      %v2485 = vpop.f32.mrb[0].mxu0
      %2486 = vmatprep.mubr.f32.mxu0 0.0
      %2487 = vmatmul.mubr.f32.gmra.mrb[0].mxu0 %v2158
      %v2488 = vpop.f32.mrb[0].mxu0
      %v2489 = vadd.f32 %v2344, %v2488
      %v2490 = vpop.f32.mrb[0].mxu0
      %2491 = vmatprep.mubr.f32.mxu0 0.0
      %2492 = vmatmul.mubr.f32.gmra.mrb[0].mxu0 %v2161
      %v2493 = vpop.f32.mrb[0].mxu0
      %v2494 = vadd.f32 %v2349, %v2493
      %v2495 = vpop.f32.mrb[0].mxu0
      %2496 = vmatprep.mubr.f32.mxu0 0.0
      %2497 = vmatmul.mubr.f32.gmra.mrb[0].mxu0 %v2164
      %v2498 = vpop.f32.mrb[0].mxu0
      %v2499 = vadd.f32 %v2354, %v2498
      %v2500 = vpop.f32.mrb[0].mxu0
      %2501 = vmatprep.mubr.f32.mxu0 0.0
      %2502 = vmatmul.mubr.f32.gmra.mrb[0].mxu0 %v2167
      %v2503 = vpop.f32.mrb[0].mxu0
      %v2504 = vadd.f32 %v2359, %v2503
      %v2505 = vpop.f32.mrb[0].mxu0
      %2506 = vmatprep.mubr.f32.mxu0 0.0
      %2507 = vmatmul.mubr.f32.gmra.mrb[0].mxu0 %v2170
      %v2508 = vpop.f32.mrb[0].mxu0
      %v2509 = vadd.f32 %v2364, %v2508
      %v2510 = vpop.f32.mrb[0].mxu0
      %2511 = vmatprep.mubr.f32.mxu0 0.0
      %2512 = vmatmul.mubr.f32.gmra.mrb[0].mxu0 %v2173
      %v2513 = vpop.f32.mrb[0].mxu0
      %v2514 = vadd.f32 %v2369, %v2513
      %v2515 = vpop.f32.mrb[0].mxu0
      %2516 = vmatprep.mubr.f32.mxu0 0.0
      %2517 = vmatmul.mubr.f32.gmra.mrb[0].mxu0 %v2176
      %v2518 = vpop.f32.mrb[0].mxu0
      %v2519 = vadd.f32 %v2374, %v2518
      %v2520 = vpop.f32.mrb[0].mxu0
      %2521 = vdwg.mxu0
      %v2522 = vmax.f32 %v2444, 0.0
      %v2523 = vmax.f32 %v2449, 0.0
      %v2524 = vmax.f32 %v2454, 0.0
      %v2525 = vmax.f32 %v2459, 0.0
      %v2526 = vmax.f32 %v2464, 0.0
      %v2527 = vmax.f32 %v2469, 0.0
      %v2528 = vmax.f32 %v2474, 0.0
      %v2529 = vmax.f32 %v2479, 0.0
      %v2530 = vmax.f32 %v2484, 0.0
      %v2531 = vmax.f32 %v2489, 0.0
      %v2532 = vmax.f32 %v2494, 0.0
      %v2533 = vmax.f32 %v2499, 0.0
      %v2534 = vmax.f32 %v2504, 0.0
      %v2535 = vmax.f32 %v2509, 0.0
      %v2536 = vmax.f32 %v2514, 0.0
      %v2537 = vmax.f32 %v2519, 0.0
      %v2538 = vmax.f32 %v2522, %v2523
      %v2539 = vmax.f32 %v2524, %v2525
      %v2540 = vmax.f32 %v2526, %v2527
      %v2541 = vmax.f32 %v2528, %v2529
      %v2542 = vmax.f32 %v2530, %v2531
      %v2543 = vmax.f32 %v2532, %v2533
      %v2544 = vmax.f32 %v2534, %v2535
      %v2545 = vmax.f32 %v2536, %v2537
      %2554 = vrot.lane.b32.xlu0 %v2538, 64
      %v2555 = vpop.permute.xlu0 %2554
      %2556 = vrot.lane.b32.xlu0 %v2539, 64
      %v2557 = vpop.permute.xlu0 %2556
      %2558 = vrot.lane.b32.xlu0 %v2540, 64
      %v2559 = vpop.permute.xlu0 %2558
      %2560 = vrot.lane.b32.xlu0 %v2541, 64
      %v2561 = vpop.permute.xlu0 %2560
      %2562 = vrot.lane.b32.xlu0 %v2542, 64
      %v2563 = vpop.permute.xlu0 %2562
      %2564 = vrot.lane.b32.xlu0 %v2543, 64
      %v2565 = vpop.permute.xlu0 %2564
      %2566 = vrot.lane.b32.xlu0 %v2544, 64
      %v2567 = vpop.permute.xlu0 %2566
      %2568 = vrot.lane.b32.xlu0 %v2545, 64
      %v2569 = vpop.permute.xlu0 %2568
      %v2578 = vmax.f32 %v2538, %v2555
      %v2579 = vmax.f32 %v2539, %v2557
      %v2580 = vmax.f32 %v2540, %v2559
      %v2581 = vmax.f32 %v2541, %v2561
      %v2582 = vmax.f32 %v2542, %v2563
      %v2583 = vmax.f32 %v2543, %v2565
      %v2584 = vmax.f32 %v2544, %v2567
      %v2585 = vmax.f32 %v2545, %v2569
      %s2586 = scalar_lea.vmem [#allocation4], 16
      %2587 = vst.msk [vmem:[%s2586 + $0x1] sm:$0xff] %vm806, %v2578
      %2588 = vst.msk [vmem:[%s2586 + $0x11] sm:$0xff] %vm806, %v2579
      %2589 = vst.msk [vmem:[%s2586 + $0x21] sm:$0xff] %vm806, %v2580
      %2590 = vst.msk [vmem:[%s2586 + $0x31] sm:$0xff] %vm806, %v2581
      %2591 = vst.msk [vmem:[%s2586 + $0x41] sm:$0xff] %vm806, %v2582
      %2592 = vst.msk [vmem:[%s2586 + $0x51] sm:$0xff] %vm806, %v2583
      %2593 = vst.msk [vmem:[%s2586 + $0x61] sm:$0xff] %vm806, %v2584
      %2594 = vst.msk [vmem:[%s2586 + $0x71] sm:$0xff] %vm806, %v2585
      %v2595 = vld [vmem:[#allocation4] sm:$0xff]
      %v2596 = vld [vmem:[#allocation4 + $0x10] sm:$0xff]
      %v2597 = vld [vmem:[#allocation4 + $0x20] sm:$0xff]
      %v2598 = vld [vmem:[#allocation4 + $0x30] sm:$0xff]
      %v2599 = vld [vmem:[#allocation4 + $0x40] sm:$0xff]
      %v2600 = vld [vmem:[#allocation4 + $0x50] sm:$0xff]
      %v2601 = vld [vmem:[#allocation4 + $0x60] sm:$0xff]
      %v2602 = vld [vmem:[#allocation4 + $0x70] sm:$0xff]
      %2603 = vst.msk [vmem:[#allocation5] sm:$0xff] %vm806, %v2595
      %2604 = vst.msk [vmem:[#allocation5 + $0x28] sm:$0xff] %vm806, %v2596
      %2605 = vst.msk [vmem:[#allocation5 + $0x50] sm:$0xff] %vm806, %v2597
      %2606 = vst.msk [vmem:[#allocation5 + $0x78] sm:$0xff] %vm806, %v2598
      %2607 = vst.msk [vmem:[#allocation5 + $0xa0] sm:$0xff] %vm806, %v2599
      %2608 = vst.msk [vmem:[#allocation5 + $0xc8] sm:$0xff] %vm806, %v2600
      %2609 = vst.msk [vmem:[#allocation5 + $0xf0] sm:$0xff] %vm806, %v2601
      %2610 = vst.msk [vmem:[#allocation5 + $0x118] sm:$0xff] %vm806, %v2602
      %v2611 = vld [vmem:[#allocation4 + $0x1] sm:$0xff]
      %v2612 = vld [vmem:[#allocation4 + $0x11] sm:$0xff]
      %v2613 = vld [vmem:[#allocation4 + $0x21] sm:$0xff]
      %v2614 = vld [vmem:[#allocation4 + $0x31] sm:$0xff]
      %v2615 = vld [vmem:[#allocation4 + $0x41] sm:$0xff]
      %v2616 = vld [vmem:[#allocation4 + $0x51] sm:$0xff]
      %v2617 = vld [vmem:[#allocation4 + $0x61] sm:$0xff]
      %v2618 = vld [vmem:[#allocation4 + $0x71] sm:$0xff]
      %2627 = vrot.lane.b32.xlu0 %v2611, 64
      %v2628 = vpop.permute.xlu0 %2627
      %2629 = vrot.lane.b32.xlu0 %v2612, 64
      %v2630 = vpop.permute.xlu0 %2629
      %2631 = vrot.lane.b32.xlu0 %v2613, 64
      %v2632 = vpop.permute.xlu0 %2631
      %2633 = vrot.lane.b32.xlu0 %v2614, 64
      %v2634 = vpop.permute.xlu0 %2633
      %2635 = vrot.lane.b32.xlu0 %v2615, 64
      %v2636 = vpop.permute.xlu0 %2635
      %2637 = vrot.lane.b32.xlu0 %v2616, 64
      %v2638 = vpop.permute.xlu0 %2637
      %2639 = vrot.lane.b32.xlu0 %v2617, 64
      %v2640 = vpop.permute.xlu0 %2639
      %2641 = vrot.lane.b32.xlu0 %v2618, 64
      %v2642 = vpop.permute.xlu0 %2641
      %vm2651 = vcmask 1048064
      %2652 = vst.msk [vmem:[#allocation5] sm:$0xff] %vm2651, %v2628
      %2653 = vst.msk [vmem:[#allocation5 + $0x28] sm:$0xff] %vm2651, %v2630
      %2654 = vst.msk [vmem:[#allocation5 + $0x50] sm:$0xff] %vm2651, %v2632
      %2655 = vst.msk [vmem:[#allocation5 + $0x78] sm:$0xff] %vm2651, %v2634
      %2656 = vst.msk [vmem:[#allocation5 + $0xa0] sm:$0xff] %vm2651, %v2636
      %2657 = vst.msk [vmem:[#allocation5 + $0xc8] sm:$0xff] %vm2651, %v2638
      %2658 = vst.msk [vmem:[#allocation5 + $0xf0] sm:$0xff] %vm2651, %v2640
      %2659 = vst.msk [vmem:[#allocation5 + $0x118] sm:$0xff] %vm2651, %v2642
      %v2660 = vld [vmem:[#allocation4 + $0x2] sm:$0xff]
      %v2661 = vld [vmem:[#allocation4 + $0x12] sm:$0xff]
      %v2662 = vld [vmem:[#allocation4 + $0x22] sm:$0xff]
      %v2663 = vld [vmem:[#allocation4 + $0x32] sm:$0xff]
      %v2664 = vld [vmem:[#allocation4 + $0x42] sm:$0xff]
      %v2665 = vld [vmem:[#allocation4 + $0x52] sm:$0xff]
      %v2666 = vld [vmem:[#allocation4 + $0x62] sm:$0xff]
      %v2667 = vld [vmem:[#allocation4 + $0x72] sm:$0xff]
      %2668 = vst.msk [vmem:[#allocation5 + $0x8] sm:$0xff] %vm806, %v2660
      %2669 = vst.msk [vmem:[#allocation5 + $0x30] sm:$0xff] %vm806, %v2661
      %2670 = vst.msk [vmem:[#allocation5 + $0x58] sm:$0xff] %vm806, %v2662
      %2671 = vst.msk [vmem:[#allocation5 + $0x80] sm:$0xff] %vm806, %v2663
      %2672 = vst.msk [vmem:[#allocation5 + $0xa8] sm:$0xff] %vm806, %v2664
      %2673 = vst.msk [vmem:[#allocation5 + $0xd0] sm:$0xff] %vm806, %v2665
      %2674 = vst.msk [vmem:[#allocation5 + $0xf8] sm:$0xff] %vm806, %v2666
      %2675 = vst.msk [vmem:[#allocation5 + $0x120] sm:$0xff] %vm806, %v2667
      %v2676 = vld [vmem:[%s2586] sm:$0xff]
      %v2677 = vld [vmem:[%s2586 + $0x10] sm:$0xff]
      %v2678 = vld [vmem:[%s2586 + $0x20] sm:$0xff]
      %v2679 = vld [vmem:[%s2586 + $0x30] sm:$0xff]
      %v2680 = vld [vmem:[%s2586 + $0x40] sm:$0xff]
      %v2681 = vld [vmem:[%s2586 + $0x50] sm:$0xff]
      %v2682 = vld [vmem:[%s2586 + $0x60] sm:$0xff]
      %v2683 = vld [vmem:[%s2586 + $0x70] sm:$0xff]
      %2692 = vrot.lane.b32.xlu0 %v2676, 64
      %v2693 = vpop.permute.xlu0 %2692
      %2694 = vrot.lane.b32.xlu0 %v2677, 64
      %v2695 = vpop.permute.xlu0 %2694
      %2696 = vrot.lane.b32.xlu0 %v2678, 64
      %v2697 = vpop.permute.xlu0 %2696
      %2698 = vrot.lane.b32.xlu0 %v2679, 64
      %v2699 = vpop.permute.xlu0 %2698
      %2700 = vrot.lane.b32.xlu0 %v2680, 64
      %v2701 = vpop.permute.xlu0 %2700
      %2702 = vrot.lane.b32.xlu0 %v2681, 64
      %v2703 = vpop.permute.xlu0 %2702
      %2704 = vrot.lane.b32.xlu0 %v2682, 64
      %v2705 = vpop.permute.xlu0 %2704
      %2706 = vrot.lane.b32.xlu0 %v2683, 64
      %v2707 = vpop.permute.xlu0 %2706
      %2716 = vst.msk [vmem:[#allocation5 + $0x8] sm:$0xff] %vm2651, %v2693
      %2717 = vst.msk [vmem:[#allocation5 + $0x30] sm:$0xff] %vm2651, %v2695
      %2718 = vst.msk [vmem:[#allocation5 + $0x58] sm:$0xff] %vm2651, %v2697
      %2719 = vst.msk [vmem:[#allocation5 + $0x80] sm:$0xff] %vm2651, %v2699
      %2720 = vst.msk [vmem:[#allocation5 + $0xa8] sm:$0xff] %vm2651, %v2701
      %2721 = vst.msk [vmem:[#allocation5 + $0xd0] sm:$0xff] %vm2651, %v2703
      %2722 = vst.msk [vmem:[#allocation5 + $0xf8] sm:$0xff] %vm2651, %v2705
      %2723 = vst.msk [vmem:[#allocation5 + $0x120] sm:$0xff] %vm2651, %v2707
      %v2724 = vld [vmem:[%s2586 + $0x1] sm:$0xff]
      %v2725 = vld [vmem:[%s2586 + $0x11] sm:$0xff]
      %v2726 = vld [vmem:[%s2586 + $0x21] sm:$0xff]
      %v2727 = vld [vmem:[%s2586 + $0x31] sm:$0xff]
      %v2728 = vld [vmem:[%s2586 + $0x41] sm:$0xff]
      %v2729 = vld [vmem:[%s2586 + $0x51] sm:$0xff]
      %v2730 = vld [vmem:[%s2586 + $0x61] sm:$0xff]
      %v2731 = vld [vmem:[%s2586 + $0x71] sm:$0xff]
      %2732 = vst.msk [vmem:[#allocation5 + $0x10] sm:$0xff] %vm806, %v2724
      %2733 = vst.msk [vmem:[#allocation5 + $0x38] sm:$0xff] %vm806, %v2725
      %2734 = vst.msk [vmem:[#allocation5 + $0x60] sm:$0xff] %vm806, %v2726
      %2735 = vst.msk [vmem:[#allocation5 + $0x88] sm:$0xff] %vm806, %v2727
      %2736 = vst.msk [vmem:[#allocation5 + $0xb0] sm:$0xff] %vm806, %v2728
      %2737 = vst.msk [vmem:[#allocation5 + $0xd8] sm:$0xff] %vm806, %v2729
      %2738 = vst.msk [vmem:[#allocation5 + $0x100] sm:$0xff] %vm806, %v2730
      %2739 = vst.msk [vmem:[#allocation5 + $0x128] sm:$0xff] %vm806, %v2731
      %v2740 = vld [vmem:[%s2586 + $0x2] sm:$0xff]
      %v2741 = vld [vmem:[%s2586 + $0x12] sm:$0xff]
      %v2742 = vld [vmem:[%s2586 + $0x22] sm:$0xff]
      %v2743 = vld [vmem:[%s2586 + $0x32] sm:$0xff]
      %v2744 = vld [vmem:[%s2586 + $0x42] sm:$0xff]
      %v2745 = vld [vmem:[%s2586 + $0x52] sm:$0xff]
      %v2746 = vld [vmem:[%s2586 + $0x62] sm:$0xff]
      %v2747 = vld [vmem:[%s2586 + $0x72] sm:$0xff]
      %2756 = vrot.lane.b32.xlu0 %v2740, 64
      %v2757 = vpop.permute.xlu0 %2756
      %2758 = vrot.lane.b32.xlu0 %v2741, 64
      %v2759 = vpop.permute.xlu0 %2758
      %2760 = vrot.lane.b32.xlu0 %v2742, 64
      %v2761 = vpop.permute.xlu0 %2760
      %2762 = vrot.lane.b32.xlu0 %v2743, 64
      %v2763 = vpop.permute.xlu0 %2762
      %2764 = vrot.lane.b32.xlu0 %v2744, 64
      %v2765 = vpop.permute.xlu0 %2764
      %2766 = vrot.lane.b32.xlu0 %v2745, 64
      %v2767 = vpop.permute.xlu0 %2766
      %2768 = vrot.lane.b32.xlu0 %v2746, 64
      %v2769 = vpop.permute.xlu0 %2768
      %2770 = vrot.lane.b32.xlu0 %v2747, 64
      %v2771 = vpop.permute.xlu0 %2770
      %2780 = vst.msk [vmem:[#allocation5 + $0x10] sm:$0xff] %vm2651, %v2757
      %2781 = vst.msk [vmem:[#allocation5 + $0x38] sm:$0xff] %vm2651, %v2759
      %2782 = vst.msk [vmem:[#allocation5 + $0x60] sm:$0xff] %vm2651, %v2761
      %2783 = vst.msk [vmem:[#allocation5 + $0x88] sm:$0xff] %vm2651, %v2763
      %2784 = vst.msk [vmem:[#allocation5 + $0xb0] sm:$0xff] %vm2651, %v2765
      %2785 = vst.msk [vmem:[#allocation5 + $0xd8] sm:$0xff] %vm2651, %v2767
      %2786 = vst.msk [vmem:[#allocation5 + $0x100] sm:$0xff] %vm2651, %v2769
      %2787 = vst.msk [vmem:[#allocation5 + $0x128] sm:$0xff] %vm2651, %v2771
      %s2788 = scalar_lea.vmem [#allocation4], 32
      %v2789 = vld [vmem:[%s2788] sm:$0xff]
      %v2790 = vld [vmem:[%s2788 + $0x10] sm:$0xff]
      %v2791 = vld [vmem:[%s2788 + $0x20] sm:$0xff]
      %v2792 = vld [vmem:[%s2788 + $0x30] sm:$0xff]
      %v2793 = vld [vmem:[%s2788 + $0x40] sm:$0xff]
      %v2794 = vld [vmem:[%s2788 + $0x50] sm:$0xff]
      %v2795 = vld [vmem:[%s2788 + $0x60] sm:$0xff]
      %v2796 = vld [vmem:[%s2788 + $0x70] sm:$0xff]
      %2797 = vst.msk [vmem:[#allocation5 + $0x18] sm:$0xff] %vm806, %v2789
      %2798 = vst.msk [vmem:[#allocation5 + $0x40] sm:$0xff] %vm806, %v2790
      %2799 = vst.msk [vmem:[#allocation5 + $0x68] sm:$0xff] %vm806, %v2791
      %2800 = vst.msk [vmem:[#allocation5 + $0x90] sm:$0xff] %vm806, %v2792
      %2801 = vst.msk [vmem:[#allocation5 + $0xb8] sm:$0xff] %vm806, %v2793
      %2802 = vst.msk [vmem:[#allocation5 + $0xe0] sm:$0xff] %vm806, %v2794
      %2803 = vst.msk [vmem:[#allocation5 + $0x108] sm:$0xff] %vm806, %v2795
      %2804 = vst.msk [vmem:[#allocation5 + $0x130] sm:$0xff] %vm806, %v2796
      %v2805 = vld [vmem:[%s2788 + $0x1] sm:$0xff]
      %v2806 = vld [vmem:[%s2788 + $0x11] sm:$0xff]
      %v2807 = vld [vmem:[%s2788 + $0x21] sm:$0xff]
      %v2808 = vld [vmem:[%s2788 + $0x31] sm:$0xff]
      %v2809 = vld [vmem:[%s2788 + $0x41] sm:$0xff]
      %v2810 = vld [vmem:[%s2788 + $0x51] sm:$0xff]
      %v2811 = vld [vmem:[%s2788 + $0x61] sm:$0xff]
      %v2812 = vld [vmem:[%s2788 + $0x71] sm:$0xff]
      %2821 = vrot.lane.b32.xlu0 %v2805, 64
      %v2822 = vpop.permute.xlu0 %2821
      %2823 = vrot.lane.b32.xlu0 %v2806, 64
      %v2824 = vpop.permute.xlu0 %2823
      %2825 = vrot.lane.b32.xlu0 %v2807, 64
      %v2826 = vpop.permute.xlu0 %2825
      %2827 = vrot.lane.b32.xlu0 %v2808, 64
      %v2828 = vpop.permute.xlu0 %2827
      %2829 = vrot.lane.b32.xlu0 %v2809, 64
      %v2830 = vpop.permute.xlu0 %2829
      %2831 = vrot.lane.b32.xlu0 %v2810, 64
      %v2832 = vpop.permute.xlu0 %2831
      %2833 = vrot.lane.b32.xlu0 %v2811, 64
      %v2834 = vpop.permute.xlu0 %2833
      %2835 = vrot.lane.b32.xlu0 %v2812, 64
      %v2836 = vpop.permute.xlu0 %2835
      %2845 = vst.msk [vmem:[#allocation5 + $0x18] sm:$0xff] %vm2651, %v2822
      %2846 = vst.msk [vmem:[#allocation5 + $0x40] sm:$0xff] %vm2651, %v2824
      %2847 = vst.msk [vmem:[#allocation5 + $0x68] sm:$0xff] %vm2651, %v2826
      %2848 = vst.msk [vmem:[#allocation5 + $0x90] sm:$0xff] %vm2651, %v2828
      %2849 = vst.msk [vmem:[#allocation5 + $0xb8] sm:$0xff] %vm2651, %v2830
      %2850 = vst.msk [vmem:[#allocation5 + $0xe0] sm:$0xff] %vm2651, %v2832
      %2851 = vst.msk [vmem:[#allocation5 + $0x108] sm:$0xff] %vm2651, %v2834
      %2852 = vst.msk [vmem:[#allocation5 + $0x130] sm:$0xff] %vm2651, %v2836
      %v2853 = vld [vmem:[%s2788 + $0x2] sm:$0xff]
      %v2854 = vld [vmem:[%s2788 + $0x12] sm:$0xff]
      %v2855 = vld [vmem:[%s2788 + $0x22] sm:$0xff]
      %v2856 = vld [vmem:[%s2788 + $0x32] sm:$0xff]
      %v2857 = vld [vmem:[%s2788 + $0x42] sm:$0xff]
      %v2858 = vld [vmem:[%s2788 + $0x52] sm:$0xff]
      %v2859 = vld [vmem:[%s2788 + $0x62] sm:$0xff]
      %v2860 = vld [vmem:[%s2788 + $0x72] sm:$0xff]
      %2861 = vst.msk [vmem:[#allocation5 + $0x20] sm:$0xff] %vm806, %v2853
      %2862 = vst.msk [vmem:[#allocation5 + $0x48] sm:$0xff] %vm806, %v2854
      %2863 = vst.msk [vmem:[#allocation5 + $0x70] sm:$0xff] %vm806, %v2855
      %2864 = vst.msk [vmem:[#allocation5 + $0x98] sm:$0xff] %vm806, %v2856
      %2865 = vst.msk [vmem:[#allocation5 + $0xc0] sm:$0xff] %vm806, %v2857
      %2866 = vst.msk [vmem:[#allocation5 + $0xe8] sm:$0xff] %vm806, %v2858
      %2867 = vst.msk [vmem:[#allocation5 + $0x110] sm:$0xff] %vm806, %v2859
      %2868 = vst.msk [vmem:[#allocation5 + $0x138] sm:$0xff] %vm806, %v2860
      %v2869 = vld [vmem:[#allocation5] sm:$0xff]
      %v2870 = vld [vmem:[#allocation5 + $0x8] sm:$0xff]
      %v2871 = vld [vmem:[#allocation5 + $0x10] sm:$0xff]
      %v2872 = vld [vmem:[#allocation5 + $0x18] sm:$0xff]
      %v2873 = vld [vmem:[#allocation5 + $0x20] sm:$0xff]
      %v2874 = vld [vmem:[#allocation5 + $0x28] sm:$0xff]
      %v2875 = vld [vmem:[#allocation5 + $0x30] sm:$0xff]
      %v2876 = vld [vmem:[#allocation5 + $0x38] sm:$0xff]
      %v2877 = vld [vmem:[#allocation5 + $0x40] sm:$0xff]
      %v2878 = vld [vmem:[#allocation5 + $0x48] sm:$0xff]
      %v2879 = vld [vmem:[#allocation5 + $0x50] sm:$0xff]
      %v2880 = vld [vmem:[#allocation5 + $0x58] sm:$0xff]
      %v2881 = vld [vmem:[#allocation5 + $0x60] sm:$0xff]
      %v2882 = vld [vmem:[#allocation5 + $0x68] sm:$0xff]
      %v2883 = vld [vmem:[#allocation5 + $0x70] sm:$0xff]
      %v2884 = vld [vmem:[#allocation5 + $0x78] sm:$0xff]
      %v2885 = vld [vmem:[#allocation5 + $0x80] sm:$0xff]
      %v2886 = vld [vmem:[#allocation5 + $0x88] sm:$0xff]
      %v2887 = vld [vmem:[#allocation5 + $0x90] sm:$0xff]
      %v2888 = vld [vmem:[#allocation5 + $0x98] sm:$0xff]
      %v2889 = vld [vmem:[#allocation5 + $0xa0] sm:$0xff]
      %v2890 = vld [vmem:[#allocation5 + $0xa8] sm:$0xff]
      %v2891 = vld [vmem:[#allocation5 + $0xb0] sm:$0xff]
      %v2892 = vld [vmem:[#allocation5 + $0xb8] sm:$0xff]
      %v2893 = vld [vmem:[#allocation5 + $0xc0] sm:$0xff]
      %v2894 = vld [vmem:[#allocation5 + $0xc8] sm:$0xff]
      %v2895 = vld [vmem:[#allocation5 + $0xd0] sm:$0xff]
      %v2896 = vld [vmem:[#allocation5 + $0xd8] sm:$0xff]
      %v2897 = vld [vmem:[#allocation5 + $0xe0] sm:$0xff]
      %v2898 = vld [vmem:[#allocation5 + $0xe8] sm:$0xff]
      %v2899 = vld [vmem:[#allocation5 + $0xf0] sm:$0xff]
      %v2900 = vld [vmem:[#allocation5 + $0xf8] sm:$0xff]
      %v2901 = vld [vmem:[#allocation5 + $0x100] sm:$0xff]
      %v2902 = vld [vmem:[#allocation5 + $0x108] sm:$0xff]
      %v2903 = vld [vmem:[#allocation5 + $0x110] sm:$0xff]
      %v2904 = vld [vmem:[#allocation5 + $0x118] sm:$0xff]
      %v2905 = vld [vmem:[#allocation5 + $0x120] sm:$0xff]
      %v2906 = vld [vmem:[#allocation5 + $0x128] sm:$0xff]
      %v2907 = vld [vmem:[#allocation5 + $0x130] sm:$0xff]
      %v2908 = vld [vmem:[#allocation5 + $0x138] sm:$0xff]
      %v2909 = vld [vmem:[%s5] sm:$0xff]
      %v2910 = vld [vmem:[%s5 + $0x8] sm:$0xff]
      %v2911 = vld [vmem:[%s5 + $0x10] sm:$0xff]
      %v2912 = vld [vmem:[%s5 + $0x18] sm:$0xff]
      %v2913 = vld [vmem:[%s5 + $0x20] sm:$0xff]
      %v2914 = vld [vmem:[%s5 + $0x28] sm:$0xff]
      %v2915 = vld [vmem:[%s5 + $0x30] sm:$0xff]
      %v2916 = vld [vmem:[%s5 + $0x38] sm:$0xff]
      %v2917 = vld [vmem:[%s5 + $0x40] sm:$0xff]
      %v2918 = vld [vmem:[%s5 + $0x48] sm:$0xff]
      %v2919 = vld [vmem:[%s5 + $0x50] sm:$0xff]
      %v2920 = vld [vmem:[%s5 + $0x58] sm:$0xff]
      %v2921 = vld [vmem:[%s5 + $0x60] sm:$0xff]
      %v2922 = vld [vmem:[%s5 + $0x68] sm:$0xff]
      %v2923 = vld [vmem:[%s5 + $0x70] sm:$0xff]
      %v2924 = vld [vmem:[%s5 + $0x78] sm:$0xff]
      %v2925 = vld [vmem:[%s5 + $0x80] sm:$0xff]
      %v2926 = vld [vmem:[%s5 + $0x88] sm:$0xff]
      %v2927 = vld [vmem:[%s5 + $0x90] sm:$0xff]
      %v2928 = vld [vmem:[%s5 + $0x98] sm:$0xff]
      %v2929 = vld [vmem:[%s5 + $0xa0] sm:$0xff]
      %v2930 = vld [vmem:[%s5 + $0xa8] sm:$0xff]
      %v2931 = vld [vmem:[%s5 + $0xb0] sm:$0xff]
      %v2932 = vld [vmem:[%s5 + $0xb8] sm:$0xff]
      %v2933 = vld [vmem:[%s5 + $0xc0] sm:$0xff]
      %v2934 = vld [vmem:[%s5 + $0xc8] sm:$0xff]
      %v2935 = vld [vmem:[%s5 + $0xd0] sm:$0xff]
      %v2936 = vld [vmem:[%s5 + $0xd8] sm:$0xff]
      %v2937 = vld [vmem:[%s5 + $0xe0] sm:$0xff]
      %v2938 = vld [vmem:[%s5 + $0xe8] sm:$0xff]
      %v2939 = vld [vmem:[%s5 + $0xf0] sm:$0xff]
      %v2940 = vld [vmem:[%s5 + $0xf8] sm:$0xff]
      %v2941 = vld [vmem:[%s5 + $0x100] sm:$0xff]
      %v2942 = vld [vmem:[%s5 + $0x108] sm:$0xff]
      %v2943 = vld [vmem:[%s5 + $0x110] sm:$0xff]
      %v2944 = vld [vmem:[%s5 + $0x118] sm:$0xff]
      %v2945 = vld [vmem:[%s5 + $0x120] sm:$0xff]
      %v2946 = vld [vmem:[%s5 + $0x128] sm:$0xff]
      %v2947 = vld [vmem:[%s5 + $0x130] sm:$0xff]
      %v2948 = vld [vmem:[%s5 + $0x138] sm:$0xff]
      %v2949 = vld [vmem:[%s5 + $0x140] sm:$0xff]
      %v2950 = vld [vmem:[%s5 + $0x148] sm:$0xff]
      %v2951 = vld [vmem:[%s5 + $0x150] sm:$0xff]
      %v2952 = vld [vmem:[%s5 + $0x158] sm:$0xff]
      %v2953 = vld [vmem:[%s5 + $0x160] sm:$0xff]
      %v2954 = vld [vmem:[%s5 + $0x168] sm:$0xff]
      %v2955 = vld [vmem:[%s5 + $0x170] sm:$0xff]
      %v2956 = vld [vmem:[%s5 + $0x178] sm:$0xff]
      %v2957 = vld [vmem:[%s5 + $0x180] sm:$0xff]
      %v2958 = vld [vmem:[%s5 + $0x188] sm:$0xff]
      %v2959 = vld [vmem:[%s5 + $0x190] sm:$0xff]
      %v2960 = vld [vmem:[%s5 + $0x198] sm:$0xff]
      %v2961 = vld [vmem:[%s5 + $0x1a0] sm:$0xff]
      %v2962 = vld [vmem:[%s5 + $0x1a8] sm:$0xff]
      %v2963 = vld [vmem:[%s5 + $0x1b0] sm:$0xff]
      %v2964 = vld [vmem:[%s5 + $0x1b8] sm:$0xff]
      %v2965 = vld [vmem:[%s5 + $0x1c0] sm:$0xff]
      %v2966 = vld [vmem:[%s5 + $0x1c8] sm:$0xff]
      %v2967 = vld [vmem:[%s5 + $0x1d0] sm:$0xff]
      %v2968 = vld [vmem:[%s5 + $0x1d8] sm:$0xff]
      %v2969 = vld [vmem:[%s5 + $0x1e0] sm:$0xff]
      %v2970 = vld [vmem:[%s5 + $0x1e8] sm:$0xff]
      %v2971 = vld [vmem:[%s5 + $0x1f0] sm:$0xff]
      %v2972 = vld [vmem:[%s5 + $0x1f8] sm:$0xff]
      %v2973 = vld [vmem:[%s5 + $0x200] sm:$0xff]
      %v2974 = vld [vmem:[%s5 + $0x208] sm:$0xff]
      %v2975 = vld [vmem:[%s5 + $0x210] sm:$0xff]
      %v2976 = vld [vmem:[%s5 + $0x218] sm:$0xff]
      %v2977 = vld [vmem:[%s5 + $0x220] sm:$0xff]
      %v2978 = vld [vmem:[%s5 + $0x228] sm:$0xff]
      %v2979 = vld [vmem:[%s5 + $0x230] sm:$0xff]
      %v2980 = vld [vmem:[%s5 + $0x238] sm:$0xff]
      %v2981 = vld [vmem:[%s6] sm:$0x1]
      %v2983 = vlaneseq
      %v2984 = vshrl.u32 %v2983, 7
      %v2985 = vsub.s32 0, %v2984
      %v2986 = vrot.slane %v2981, %v2985
      %v2989 = vsel %vm806, %v2873, 0
      %v2992 = vsel %vm806, %v2878, 0
      %v2995 = vsel %vm806, %v2883, 0
      %v2998 = vsel %vm806, %v2888, 0
      %v3001 = vsel %vm806, %v2893, 0
      %v3004 = vsel %vm806, %v2898, 0
      %v3007 = vsel %vm806, %v2903, 0
      %v3010 = vsel %vm806, %v2908, 0
      %3012 = vmatprep.subr.mxu0 0.0
      %3013 = vmatpush1.msra.mxu0 %v2909
      %3014 = vmatprep.subr.mxu0 0.0
      %3015 = vmatpush1.msra.mxu0 %v2910
      %3016 = vmatprep.subr.mxu0 0.0
      %3017 = vmatpush1.msra.mxu0 %v2911
      %3018 = vmatprep.subr.mxu0 0.0
      %3019 = vmatpush1.msra.mxu0 %v2912
      %3020 = vmatprep.subr.mxu0 0.0
      %3021 = vmatpush1.msra.mxu0 %v2913
      %3022 = vmatprep.subr.mxu0 0.0
      %3023 = vmatpush1.msra.mxu0 %v2914
      %3024 = vmatprep.subr.mxu0 0.0
      %3025 = vmatpush1.msra.mxu0 %v2915
      %3026 = vmatprep.subr.mxu0 0.0
      %3027 = vmatpush1.msra.mxu0 %v2916
      %3028 = vmatprep.subr.mxu0 0.0
      %3029 = vmatpush1.msra.mxu0 %v2917
      %3030 = vmatprep.subr.mxu0 0.0
      %3031 = vmatpush1.msra.mxu0 %v2918
      %3032 = vmatprep.subr.mxu0 0.0
      %3033 = vmatpush1.msra.mxu0 %v2919
      %3034 = vmatprep.subr.mxu0 0.0
      %3035 = vmatpush1.msra.mxu0 %v2920
      %3036 = vmatprep.subr.mxu0 0.0
      %3037 = vmatpush1.msra.mxu0 %v2921
      %3038 = vmatprep.subr.mxu0 0.0
      %3039 = vmatpush1.msra.mxu0 %v2922
      %3040 = vmatprep.subr.mxu0 0.0
      %3041 = vmatpush1.msra.mxu0 %v2923
      %3042 = vmatprep.subr.mxu0 0.0
      %3043 = vmatpush1.msra.mxu0 %v2924
      %3044 = vmatprep.subr.mxu0 0.0
      %3045 = vmatpush1.msra.mxu0 %v2925
      %3046 = vmatprep.subr.mxu0 0.0
      %3047 = vmatpush1.msra.mxu0 %v2926
      %3048 = vmatprep.subr.mxu0 0.0
      %3049 = vmatpush1.msra.mxu0 %v2927
      %3050 = vmatprep.subr.mxu0 0.0
      %3051 = vmatpush1.msra.mxu0 %v2928
      %3052 = vmatprep.subr.mxu0 0.0
      %3053 = vmatpush1.msra.mxu0 %v2929
      %3054 = vmatprep.subr.mxu0 0.0
      %3055 = vmatpush1.msra.mxu0 %v2930
      %3056 = vmatprep.subr.mxu0 0.0
      %3057 = vmatpush1.msra.mxu0 %v2931
      %3058 = vmatprep.subr.mxu0 0.0
      %3059 = vmatpush1.msra.mxu0 %v2932
      %3060 = vmatprep.subr.mxu0 0.0
      %3061 = vmatpush1.msra.mxu0 %v2933
      %3062 = vmatprep.subr.mxu0 0.0
      %3063 = vmatpush1.msra.mxu0 %v2934
      %3064 = vmatprep.subr.mxu0 0.0
      %3065 = vmatpush1.msra.mxu0 %v2935
      %3066 = vmatprep.subr.mxu0 0.0
      %3067 = vmatpush1.msra.mxu0 %v2936
      %3068 = vmatprep.subr.mxu0 0.0
      %3069 = vmatpush1.msra.mxu0 %v2937
      %3070 = vmatprep.subr.mxu0 0.0
      %3071 = vmatpush1.msra.mxu0 %v2938
      %3072 = vmatprep.subr.mxu0 0.0
      %3073 = vmatpush1.msra.mxu0 %v2939
      %3074 = vmatprep.subr.mxu0 0.0
      %3075 = vmatpush1.msra.mxu0 %v2940
      %3076 = vmatprep.mubr.f32.mxu0 %v2870
      %3077 = vmatmul.mubr.f32.gmra.mrb[0].mxu0 %v2869
      %v3078 = vpop.f32.mrb[0].mxu0
      %v3079 = vadd.f32 %v2986, %v3078
      %v3080 = vpop.f32.mrb[0].mxu0
      %3081 = vmatprep.mubr.f32.mxu0 %v2875
      %3082 = vmatmul.mubr.f32.gmra.mrb[0].mxu0 %v2874
      %v3083 = vpop.f32.mrb[0].mxu0
      %v3084 = vadd.f32 %v2986, %v3083
      %v3085 = vpop.f32.mrb[0].mxu0
      %3086 = vmatprep.mubr.f32.mxu0 %v2880
      %3087 = vmatmul.mubr.f32.gmra.mrb[0].mxu0 %v2879
      %v3088 = vpop.f32.mrb[0].mxu0
      %v3089 = vadd.f32 %v2986, %v3088
      %v3090 = vpop.f32.mrb[0].mxu0
      %3091 = vmatprep.mubr.f32.mxu0 %v2885
      %3092 = vmatmul.mubr.f32.gmra.mrb[0].mxu0 %v2884
      %v3093 = vpop.f32.mrb[0].mxu0
      %v3094 = vadd.f32 %v2986, %v3093
      %v3095 = vpop.f32.mrb[0].mxu0
      %3096 = vmatprep.mubr.f32.mxu0 %v2890
      %3097 = vmatmul.mubr.f32.gmra.mrb[0].mxu0 %v2889
      %v3098 = vpop.f32.mrb[0].mxu0
      %v3099 = vadd.f32 %v2986, %v3098
      %v3100 = vpop.f32.mrb[0].mxu0
      %3101 = vmatprep.mubr.f32.mxu0 %v2895
      %3102 = vmatmul.mubr.f32.gmra.mrb[0].mxu0 %v2894
      %v3103 = vpop.f32.mrb[0].mxu0
      %v3104 = vadd.f32 %v2986, %v3103
      %v3105 = vpop.f32.mrb[0].mxu0
      %3106 = vmatprep.mubr.f32.mxu0 %v2900
      %3107 = vmatmul.mubr.f32.gmra.mrb[0].mxu0 %v2899
      %v3108 = vpop.f32.mrb[0].mxu0
      %v3109 = vadd.f32 %v2986, %v3108
      %v3110 = vpop.f32.mrb[0].mxu0
      %3111 = vmatprep.mubr.f32.mxu0 %v2905
      %3112 = vmatmul.mubr.f32.gmra.mrb[0].mxu0 %v2904
      %v3113 = vpop.f32.mrb[0].mxu0
      %v3114 = vadd.f32 %v2986, %v3113
      %v3115 = vpop.f32.mrb[0].mxu0
      %3116 = vdwg.mxu0
      %3117 = vmatprep.subr.mxu0 0.0
      %3118 = vmatpush1.msra.mxu0 %v2941
      %3119 = vmatprep.subr.mxu0 0.0
      %3120 = vmatpush1.msra.mxu0 %v2942
      %3121 = vmatprep.subr.mxu0 0.0
      %3122 = vmatpush1.msra.mxu0 %v2943
      %3123 = vmatprep.subr.mxu0 0.0
      %3124 = vmatpush1.msra.mxu0 %v2944
      %3125 = vmatprep.subr.mxu0 0.0
      %3126 = vmatpush1.msra.mxu0 %v2945
      %3127 = vmatprep.subr.mxu0 0.0
      %3128 = vmatpush1.msra.mxu0 %v2946
      %3129 = vmatprep.subr.mxu0 0.0
      %3130 = vmatpush1.msra.mxu0 %v2947
      %3131 = vmatprep.subr.mxu0 0.0
      %3132 = vmatpush1.msra.mxu0 %v2948
      %3133 = vmatprep.subr.mxu0 0.0
      %3134 = vmatpush1.msra.mxu0 %v2949
      %3135 = vmatprep.subr.mxu0 0.0
      %3136 = vmatpush1.msra.mxu0 %v2950
      %3137 = vmatprep.subr.mxu0 0.0
      %3138 = vmatpush1.msra.mxu0 %v2951
      %3139 = vmatprep.subr.mxu0 0.0
      %3140 = vmatpush1.msra.mxu0 %v2952
      %3141 = vmatprep.subr.mxu0 0.0
      %3142 = vmatpush1.msra.mxu0 %v2953
      %3143 = vmatprep.subr.mxu0 0.0
      %3144 = vmatpush1.msra.mxu0 %v2954
      %3145 = vmatprep.subr.mxu0 0.0
      %3146 = vmatpush1.msra.mxu0 %v2955
      %3147 = vmatprep.subr.mxu0 0.0
      %3148 = vmatpush1.msra.mxu0 %v2956
      %3149 = vmatprep.subr.mxu0 0.0
      %3150 = vmatpush1.msra.mxu0 %v2957
      %3151 = vmatprep.subr.mxu0 0.0
      %3152 = vmatpush1.msra.mxu0 %v2958
      %3153 = vmatprep.subr.mxu0 0.0
      %3154 = vmatpush1.msra.mxu0 %v2959
      %3155 = vmatprep.subr.mxu0 0.0
      %3156 = vmatpush1.msra.mxu0 %v2960
      %3157 = vmatprep.subr.mxu0 0.0
      %3158 = vmatpush1.msra.mxu0 %v2961
      %3159 = vmatprep.subr.mxu0 0.0
      %3160 = vmatpush1.msra.mxu0 %v2962
      %3161 = vmatprep.subr.mxu0 0.0
      %3162 = vmatpush1.msra.mxu0 %v2963
      %3163 = vmatprep.subr.mxu0 0.0
      %3164 = vmatpush1.msra.mxu0 %v2964
      %3165 = vmatprep.subr.mxu0 0.0
      %3166 = vmatpush1.msra.mxu0 %v2965
      %3167 = vmatprep.subr.mxu0 0.0
      %3168 = vmatpush1.msra.mxu0 %v2966
      %3169 = vmatprep.subr.mxu0 0.0
      %3170 = vmatpush1.msra.mxu0 %v2967
      %3171 = vmatprep.subr.mxu0 0.0
      %3172 = vmatpush1.msra.mxu0 %v2968
      %3173 = vmatprep.subr.mxu0 0.0
      %3174 = vmatpush1.msra.mxu0 %v2969
      %3175 = vmatprep.subr.mxu0 0.0
      %3176 = vmatpush1.msra.mxu0 %v2970
      %3177 = vmatprep.subr.mxu0 0.0
      %3178 = vmatpush1.msra.mxu0 %v2971
      %3179 = vmatprep.subr.mxu0 0.0
      %3180 = vmatpush1.msra.mxu0 %v2972
      %3181 = vmatprep.mubr.f32.mxu0 %v2872
      %3182 = vmatmul.mubr.f32.gmra.mrb[0].mxu0 %v2871
      %v3183 = vpop.f32.mrb[0].mxu0
      %v3184 = vadd.f32 %v3079, %v3183
      %v3185 = vpop.f32.mrb[0].mxu0
      %3186 = vmatprep.mubr.f32.mxu0 %v2877
      %3187 = vmatmul.mubr.f32.gmra.mrb[0].mxu0 %v2876
      %v3188 = vpop.f32.mrb[0].mxu0
      %v3189 = vadd.f32 %v3084, %v3188
      %v3190 = vpop.f32.mrb[0].mxu0
      %3191 = vmatprep.mubr.f32.mxu0 %v2882
      %3192 = vmatmul.mubr.f32.gmra.mrb[0].mxu0 %v2881
      %v3193 = vpop.f32.mrb[0].mxu0
      %v3194 = vadd.f32 %v3089, %v3193
      %v3195 = vpop.f32.mrb[0].mxu0
      %3196 = vmatprep.mubr.f32.mxu0 %v2887
      %3197 = vmatmul.mubr.f32.gmra.mrb[0].mxu0 %v2886
      %v3198 = vpop.f32.mrb[0].mxu0
      %v3199 = vadd.f32 %v3094, %v3198
      %v3200 = vpop.f32.mrb[0].mxu0
      %3201 = vmatprep.mubr.f32.mxu0 %v2892
      %3202 = vmatmul.mubr.f32.gmra.mrb[0].mxu0 %v2891
      %v3203 = vpop.f32.mrb[0].mxu0
      %v3204 = vadd.f32 %v3099, %v3203
      %v3205 = vpop.f32.mrb[0].mxu0
      %3206 = vmatprep.mubr.f32.mxu0 %v2897
      %3207 = vmatmul.mubr.f32.gmra.mrb[0].mxu0 %v2896
      %v3208 = vpop.f32.mrb[0].mxu0
      %v3209 = vadd.f32 %v3104, %v3208
      %v3210 = vpop.f32.mrb[0].mxu0
      %3211 = vmatprep.mubr.f32.mxu0 %v2902
      %3212 = vmatmul.mubr.f32.gmra.mrb[0].mxu0 %v2901
      %v3213 = vpop.f32.mrb[0].mxu0
      %v3214 = vadd.f32 %v3109, %v3213
      %v3215 = vpop.f32.mrb[0].mxu0
      %3216 = vmatprep.mubr.f32.mxu0 %v2907
      %3217 = vmatmul.mubr.f32.gmra.mrb[0].mxu0 %v2906
      %v3218 = vpop.f32.mrb[0].mxu0
      %v3219 = vadd.f32 %v3114, %v3218
      %v3220 = vpop.f32.mrb[0].mxu0
      %3221 = vdwg.mxu0
      %3222 = vmatprep.subr.mxu0 0.0
      %3223 = vmatpush1.msra.mxu0 %v2973
      %3224 = vmatprep.subr.mxu0 0.0
      %3225 = vmatpush1.msra.mxu0 %v2974
      %3226 = vmatprep.subr.mxu0 0.0
      %3227 = vmatpush1.msra.mxu0 %v2975
      %3228 = vmatprep.subr.mxu0 0.0
      %3229 = vmatpush1.msra.mxu0 %v2976
      %3230 = vmatprep.subr.mxu0 0.0
      %3231 = vmatpush1.msra.mxu0 %v2977
      %3232 = vmatprep.subr.mxu0 0.0
      %3233 = vmatpush1.msra.mxu0 %v2978
      %3234 = vmatprep.subr.mxu0 0.0
      %3235 = vmatpush1.msra.mxu0 %v2979
      %3236 = vmatprep.subr.mxu0 0.0
      %3237 = vmatpush1.msra.mxu0 %v2980
      %3238 = vmatprep.subr.mxu0 0.0
      %3239 = vmatpush1.msra.mxu0 0.0
      %3240 = vmatprep.subr.mxu0 0.0
      %3241 = vmatpush1.msra.mxu0 0.0
      %3242 = vmatprep.subr.mxu0 0.0
      %3243 = vmatpush1.msra.mxu0 0.0
      %3244 = vmatprep.subr.mxu0 0.0
      %3245 = vmatpush1.msra.mxu0 0.0
      %3246 = vmatprep.subr.mxu0 0.0
      %3247 = vmatpush1.msra.mxu0 0.0
      %3248 = vmatprep.subr.mxu0 0.0
      %3249 = vmatpush1.msra.mxu0 0.0
      %3250 = vmatprep.subr.mxu0 0.0
      %3251 = vmatpush1.msra.mxu0 0.0
      %3252 = vmatprep.subr.mxu0 0.0
      %3253 = vmatpush1.msra.mxu0 0.0
      %3254 = vmatprep.subr.mxu0 0.0
      %3255 = vmatpush1.msra.mxu0 0.0
      %3256 = vmatprep.subr.mxu0 0.0
      %3257 = vmatpush1.msra.mxu0 0.0
      %3258 = vmatprep.subr.mxu0 0.0
      %3259 = vmatpush1.msra.mxu0 0.0
      %3260 = vmatprep.subr.mxu0 0.0
      %3261 = vmatpush1.msra.mxu0 0.0
      %3262 = vmatprep.subr.mxu0 0.0
      %3263 = vmatpush1.msra.mxu0 0.0
      %3264 = vmatprep.subr.mxu0 0.0
      %3265 = vmatpush1.msra.mxu0 0.0
      %3266 = vmatprep.subr.mxu0 0.0
      %3267 = vmatpush1.msra.mxu0 0.0
      %3268 = vmatprep.subr.mxu0 0.0
      %3269 = vmatpush1.msra.mxu0 0.0
      %3270 = vmatprep.subr.mxu0 0.0
      %3271 = vmatpush1.msra.mxu0 0.0
      %3272 = vmatprep.subr.mxu0 0.0
      %3273 = vmatpush1.msra.mxu0 0.0
      %3274 = vmatprep.subr.mxu0 0.0
      %3275 = vmatpush1.msra.mxu0 0.0
      %3276 = vmatprep.subr.mxu0 0.0
      %3277 = vmatpush1.msra.mxu0 0.0
      %3278 = vmatprep.subr.mxu0 0.0
      %3279 = vmatpush1.msra.mxu0 0.0
      %3280 = vmatprep.subr.mxu0 0.0
      %3281 = vmatpush1.msra.mxu0 0.0
      %3282 = vmatprep.subr.mxu0 0.0
      %3283 = vmatpush1.msra.mxu0 0.0
      %3284 = vmatprep.subr.mxu0 0.0
      %3285 = vmatpush1.msra.mxu0 0.0
      %3286 = vmatprep.mubr.f32.mxu0 0.0
      %3287 = vmatmul.mubr.f32.gmra.mrb[0].mxu0 %v2989
      %v3288 = vpop.f32.mrb[0].mxu0
      %v3289 = vadd.f32 %v3184, %v3288
      %v3290 = vpop.f32.mrb[0].mxu0
      %3291 = vmatprep.mubr.f32.mxu0 0.0
      %3292 = vmatmul.mubr.f32.gmra.mrb[0].mxu0 %v2992
      %v3293 = vpop.f32.mrb[0].mxu0
      %v3294 = vadd.f32 %v3189, %v3293
      %v3295 = vpop.f32.mrb[0].mxu0
      %3296 = vmatprep.mubr.f32.mxu0 0.0
      %3297 = vmatmul.mubr.f32.gmra.mrb[0].mxu0 %v2995
      %v3298 = vpop.f32.mrb[0].mxu0
      %v3299 = vadd.f32 %v3194, %v3298
      %v3300 = vpop.f32.mrb[0].mxu0
      %3301 = vmatprep.mubr.f32.mxu0 0.0
      %3302 = vmatmul.mubr.f32.gmra.mrb[0].mxu0 %v2998
      %v3303 = vpop.f32.mrb[0].mxu0
      %v3304 = vadd.f32 %v3199, %v3303
      %v3305 = vpop.f32.mrb[0].mxu0
      %3306 = vmatprep.mubr.f32.mxu0 0.0
      %3307 = vmatmul.mubr.f32.gmra.mrb[0].mxu0 %v3001
      %v3308 = vpop.f32.mrb[0].mxu0
      %v3309 = vadd.f32 %v3204, %v3308
      %v3310 = vpop.f32.mrb[0].mxu0
      %3311 = vmatprep.mubr.f32.mxu0 0.0
      %3312 = vmatmul.mubr.f32.gmra.mrb[0].mxu0 %v3004
      %v3313 = vpop.f32.mrb[0].mxu0
      %v3314 = vadd.f32 %v3209, %v3313
      %v3315 = vpop.f32.mrb[0].mxu0
      %3316 = vmatprep.mubr.f32.mxu0 0.0
      %3317 = vmatmul.mubr.f32.gmra.mrb[0].mxu0 %v3007
      %v3318 = vpop.f32.mrb[0].mxu0
      %v3319 = vadd.f32 %v3214, %v3318
      %v3320 = vpop.f32.mrb[0].mxu0
      %3321 = vmatprep.mubr.f32.mxu0 0.0
      %3322 = vmatmul.mubr.f32.gmra.mrb[0].mxu0 %v3010
      %v3323 = vpop.f32.mrb[0].mxu0
      %v3324 = vadd.f32 %v3219, %v3323
      %v3325 = vpop.f32.mrb[0].mxu0
      %3326 = vdwg.mxu0
      %v3327 = vmax.f32 %v3289, 0.0
      %v3328 = vmax.f32 %v3294, 0.0
      %v3329 = vmax.f32 %v3299, 0.0
      %v3330 = vmax.f32 %v3304, 0.0
      %v3331 = vmax.f32 %v3309, 0.0
      %v3332 = vmax.f32 %v3314, 0.0
      %v3333 = vmax.f32 %v3319, 0.0
      %v3334 = vmax.f32 %v3324, 0.0
      %v3335 = vld [vmem:[%s7] sm:$0xff]
      %v3336 = vld [vmem:[%s7 + $0x8] sm:$0xff]
      %v3337 = vld [vmem:[%s7 + $0x10] sm:$0xff]
      %v3338 = vld [vmem:[%s7 + $0x18] sm:$0xff]
      %v3339 = vld [vmem:[%s7 + $0x20] sm:$0xff]
      %v3340 = vld [vmem:[%s7 + $0x28] sm:$0xff]
      %v3341 = vld [vmem:[%s7 + $0x30] sm:$0x1]
      %v3343 = vsel %vm806, %v3335, 0
      %v3346 = vsel %vm806, %v3336, 0
      %v3349 = vsel %vm806, %v3337, 0
      %v3352 = vsel %vm806, %v3338, 0
      %v3355 = vsel %vm806, %v3339, 0
      %v3358 = vsel %vm806, %v3340, 0
      %v3361 = vsel %vm806, %v3341, 0
      %3363 = vmatprep.subr.mxu0 0.0
      %3364 = vmatpush1.msra.mxu0 %v3327
      %3365 = vmatprep.subr.mxu0 0.0
      %3366 = vmatpush1.msra.mxu0 %v3328
      %3367 = vmatprep.subr.mxu0 0.0
      %3368 = vmatpush1.msra.mxu0 %v3329
      %3369 = vmatprep.subr.mxu0 0.0
      %3370 = vmatpush1.msra.mxu0 %v3330
      %3371 = vmatprep.subr.mxu0 0.0
      %3372 = vmatpush1.msra.mxu0 %v3331
      %3373 = vmatprep.subr.mxu0 0.0
      %3374 = vmatpush1.msra.mxu0 %v3332
      %3375 = vmatprep.subr.mxu0 0.0
      %3376 = vmatpush1.msra.mxu0 %v3333
      %3377 = vmatprep.subr.mxu0 0.0
      %3378 = vmatpush1.msra.mxu0 %v3334
      %3379 = vmatprep.subr.mxu0 0.0
      %3380 = vmatpush1.msra.mxu0 0.0
      %3381 = vmatprep.subr.mxu0 0.0
      %3382 = vmatpush1.msra.mxu0 0.0
      %3383 = vmatprep.subr.mxu0 0.0
      %3384 = vmatpush1.msra.mxu0 0.0
      %3385 = vmatprep.subr.mxu0 0.0
      %3386 = vmatpush1.msra.mxu0 0.0
      %3387 = vmatprep.subr.mxu0 0.0
      %3388 = vmatpush1.msra.mxu0 0.0
      %3389 = vmatprep.subr.mxu0 0.0
      %3390 = vmatpush1.msra.mxu0 0.0
      %3391 = vmatprep.subr.mxu0 0.0
      %3392 = vmatpush1.msra.mxu0 0.0
      %3393 = vmatprep.subr.mxu0 0.0
      %3394 = vmatpush1.msra.mxu0 0.0
      %3395 = vmatprep.subr.mxu0 0.0
      %3396 = vmatpush1.msra.mxu0 0.0
      %3397 = vmatprep.subr.mxu0 0.0
      %3398 = vmatpush1.msra.mxu0 0.0
      %3399 = vmatprep.subr.mxu0 0.0
      %3400 = vmatpush1.msra.mxu0 0.0
      %3401 = vmatprep.subr.mxu0 0.0
      %3402 = vmatpush1.msra.mxu0 0.0
      %3403 = vmatprep.subr.mxu0 0.0
      %3404 = vmatpush1.msra.mxu0 0.0
      %3405 = vmatprep.subr.mxu0 0.0
      %3406 = vmatpush1.msra.mxu0 0.0
      %3407 = vmatprep.subr.mxu0 0.0
      %3408 = vmatpush1.msra.mxu0 0.0
      %3409 = vmatprep.subr.mxu0 0.0
      %3410 = vmatpush1.msra.mxu0 0.0
      %3411 = vmatprep.subr.mxu0 0.0
      %3412 = vmatpush1.msra.mxu0 0.0
      %3413 = vmatprep.subr.mxu0 0.0
      %3414 = vmatpush1.msra.mxu0 0.0
      %3415 = vmatprep.subr.mxu0 0.0
      %3416 = vmatpush1.msra.mxu0 0.0
      %3417 = vmatprep.subr.mxu0 0.0
      %3418 = vmatpush1.msra.mxu0 0.0
      %3419 = vmatprep.subr.mxu0 0.0
      %3420 = vmatpush1.msra.mxu0 0.0
      %3421 = vmatprep.subr.mxu0 0.0
      %3422 = vmatpush1.msra.mxu0 0.0
      %3423 = vmatprep.subr.mxu0 0.0
      %3424 = vmatpush1.msra.mxu0 0.0
      %3425 = vmatprep.subr.mxu0 0.0
      %3426 = vmatpush1.msra.mxu0 0.0
      %3427 = vmatprep.mubr.f32.mxu0 0.0
      %3428 = vmatmul.mubr.f32.gmra.mrb[0].mxu0 %v3343
      %v3429 = vpop.f32.mrb[0].mxu0
      %v3430 = vadd.f32 0.0, %v3429
      %v3431 = vpop.f32.mrb[0].mxu0
      %3432 = vmatprep.mubr.f32.mxu0 0.0
      %3433 = vmatmul.mubr.f32.gmra.mrb[0].mxu0 %v3346
      %v3434 = vpop.f32.mrb[0].mxu0
      %v3435 = vadd.f32 0.0, %v3434
      %v3436 = vpop.f32.mrb[0].mxu0
      %3437 = vmatprep.mubr.f32.mxu0 0.0
      %3438 = vmatmul.mubr.f32.gmra.mrb[0].mxu0 %v3349
      %v3439 = vpop.f32.mrb[0].mxu0
      %v3440 = vadd.f32 0.0, %v3439
      %v3441 = vpop.f32.mrb[0].mxu0
      %3442 = vmatprep.mubr.f32.mxu0 0.0
      %3443 = vmatmul.mubr.f32.gmra.mrb[0].mxu0 %v3352
      %v3444 = vpop.f32.mrb[0].mxu0
      %v3445 = vadd.f32 0.0, %v3444
      %v3446 = vpop.f32.mrb[0].mxu0
      %3447 = vmatprep.mubr.f32.mxu0 0.0
      %3448 = vmatmul.mubr.f32.gmra.mrb[0].mxu0 %v3355
      %v3449 = vpop.f32.mrb[0].mxu0
      %v3450 = vadd.f32 0.0, %v3449
      %v3451 = vpop.f32.mrb[0].mxu0
      %3452 = vmatprep.mubr.f32.mxu0 0.0
      %3453 = vmatmul.mubr.f32.gmra.mrb[0].mxu0 %v3358
      %v3454 = vpop.f32.mrb[0].mxu0
      %v3455 = vadd.f32 0.0, %v3454
      %v3456 = vpop.f32.mrb[0].mxu0
      %3457 = vmatprep.mubr.f32.mxu0 0.0
      %3458 = vmatmul.mubr.f32.gmra.mrb[0].mxu0 %v3361
      %v3459 = vpop.f32.mrb[0].mxu0
      %v3460 = vadd.f32 0.0, %v3459
      %v3461 = vpop.f32.mrb[0].mxu0
      %3462 = vdwg.mxu0
      %3463 = vst [vmem:[%s305] sm:$0xff] %v3430
      %3464 = vst [vmem:[%s305 + $0x8] sm:$0xff] %v3435
      %3465 = vst [vmem:[%s305 + $0x10] sm:$0xff] %v3440
      %3466 = vst [vmem:[%s305 + $0x18] sm:$0xff] %v3445
      %3467 = vst [vmem:[%s305 + $0x20] sm:$0xff] %v3450
      %3468 = vst [vmem:[%s305 + $0x28] sm:$0xff] %v3455
      %3469 = vst [vmem:[%s305 + $0x30] sm:$0x1] %v3460
      %p3470 = scmp.lt.s32.totalorder %s19, 1
      %s3471 = scalar_select %p3470, %s19, 1
      %s3472 = smul.addr %s3471, 7
      %s3473 = smul.addr %s3472, 8
      %s3474 = scalar_lea.vmem %s8, %s3473
      // Predicated region
      $region53: #{custom_cnn_forward.1} parent=51 // pred_check
        %p3475 = pneg %p210
      $region54: #{custom_cnn_forward.1} parent=51 // pred_check_branch
        %3477 = sbr.rel (%p3475) target = $region56
      $region55: #{custom_cnn_forward.1} parent=51 // pred_region
        _
      $region56: #{custom_cnn_forward.1} parent=51 // pred_fallthru
        _
    $region52: #{custom_cnn_forward.1} parent=5 // pred_fallthru
      _
    %p3478 = scmp.le.s32.totalorder 2, %s14
    // Predicated region
    $region57: #{custom_cnn_forward.1} parent=5 // pred_check
      %p3479 = pneg %p3478
    $region58: #{custom_cnn_forward.1} parent=5 // pred_check_branch
      %3481 = sbr.rel (%p3479) target = $region60
    $region59: #{custom_cnn_forward.1} parent=5 // pred_region
      %s3482 = ssub.s32 %s14, 2
      // Predicated region
      $region61: #{custom_cnn_forward.1} parent=59 // pred_check
        %p3483 = pneg %p216
      $region62: #{custom_cnn_forward.1} parent=59 // pred_check_branch
        %3485 = sbr.rel (%p3483) target = $region64
      $region63: #{custom_cnn_forward.1} parent=59 // pred_region
        %p3486 = scmp.lt.s32.totalorder %s20, 1
        %s3487 = scalar_select %p3486, %s20, 1
        %s3488 = smul.addr %s3487, 7
        %s3489 = smul.addr %s3488, 8
        %s3490 = scalar_lea.vmem %s8, %s3489
      $region64: #{custom_cnn_forward.1} parent=59 // pred_fallthru
        _
    $region60: #{custom_cnn_forward.1} parent=5 // pred_fallthru
      _
  $region6: #{custom_cnn_forward.1} parent=0 // loop_footer
    %s18 = sadd.s32 1, %s14
  $region7: #{custom_cnn_forward.1} parent=0 // loop_footer_branch
    %13 = sbr.rel target = $region3
  $region8: #{custom_cnn_forward.1} parent=0 // loop_exit
    _

</llo_original>
